<compile_context>
chip_gen: v5e
topology: v5e:2x2
jax: 0.10.0
libtpu: 0.0.40
codegen_flags: <defaults>
</compile_context>

<pallas_src>
import functools
import numpy as np

import jax
import jax.numpy as jnp
from jax import lax
from jax.experimental import pallas as pl
from jax.experimental.pallas import tpu as pltpu


def _round_up(x, m):
    return ((x + m - 1) // m) * m


def _auto_tile_b(batch, lp, vp, vmem_budget_bytes=16 * 1024 * 1024):
    """Largest batch tile whose working set fits a conservative VMEM budget.

    Per batch row the kernel holds ~3 (LP, LP) f32-sized live intermediates
    (pairwise comparisons + one-hot mask and their broadcasts) plus the
    double-buffered (VP, LP) sample and (LP,) distr output blocks.  A 16 MiB
    budget is safe on every generation (v7x: 64 MiB VMEM, v5e/v6e: 128 MiB);
    raise it for bigger tiles on v5e/v6e.
    """
    per_row = 4 * (3 * lp * lp + 2 * (vp * lp + lp + 1))
    tb = max(8, (vmem_budget_bytes // per_row) // 8 * 8)
    return int(min(tb, _round_up(batch, 8)))


def _sparsemap_bernoulli_kernel(x_ref, w_ref, b_ref,
                                sample_ref, distr_ref, ent_ref):
    TB = x_ref.shape[0]
    LP = w_ref.shape[1]            # lane-padded latent size (multiple of 128, > L)
    VP = sample_ref.shape[1]       # L + 1 vertices

    # --- agent: linear scores (MXU matmul) ---
    scores = jnp.dot(x_ref[...], w_ref[...],
                     preferred_element_type=jnp.float32) + b_ref[...]
    # Padded latent lanes have zero weight/bias -> score 0 -> mu 0.
    mu = jnp.clip(scores, 0.0, 1.0)                              # (TB, LP)

    # --- SparseMAP for independent Bernoulli (budget == 0) ---
    # argmax_{mu in [0,1]^L} theta^T mu - 1/2 ||mu||^2  ==  clip(theta, 0, 1)
    # Stable descending rank with index tie-break.  The reduction axis j sits
    # on the second-minor dim, so the sums lower to sublane/VPU adds (no
    # cross-lane XLU reduce) and the kept axis i stays lane-dense (128 lanes).
    iota_j = lax.broadcasted_iota(jnp.int32, (1, LP, LP), 1)
    iota_i = lax.broadcasted_iota(jnp.int32, (1, LP, LP), 2)
    tie = iota_j < iota_i                                        # (1, LP, LP)
    mu_j = mu[:, :, None]                                        # (TB, LP, 1)
    mu_i = mu[:, None, :]                                        # (TB, 1, LP)
    beats = (mu_j > mu_i) | ((mu_j == mu_i) & tie)               # j outranks i
    rank = jnp.sum(beats.astype(jnp.float32), axis=1)            # (TB, LP), exact ints in f32

    # Sorted (descending) marginals: s[b, k] = mu of the coordinate with rank k.
    k_iota = lax.broadcasted_iota(jnp.int32, (1, 1, LP), 2).astype(jnp.float32)
    masked = jnp.where(rank[:, :, None] == k_iota, mu[:, :, None], 0.0)
    s = jnp.sum(masked, axis=1)                                  # (TB, LP)

    # Sparse vertex distribution (chain decomposition):
    #   p_0 = 1 - s_0,  p_k = s_{k-1} - s_k.   Lane-rotate (XLU) instead of concat.
    s_prev = pltpu.roll(s, shift=1, axis=1)
    lane = lax.broadcasted_iota(jnp.int32, (TB, LP), 1)
    left = jnp.where(lane == 0, 1.0, s_prev)
    p = left - s                                                 # (TB, LP), >= 0, rows sum to 1

    # Vertex v selects the top-v coordinates; E_p[vertex] == mu.
    v_iota = lax.broadcasted_iota(jnp.int32, (1, VP, LP), 1).astype(jnp.float32)
    verts = (rank[:, None, :] < v_iota).astype(jnp.float32)      # (TB, VP, LP)

    sample_ref[...] = verts                                      # lane-dense store
    distr_ref[...] = p                                           # lane-dense store

    # Per-row entropy over the positive support; global sum / batch_size is done
    # outside the kernel so the batch grid axis can stay "parallel" under tiling.
    pos = p > 0.0
    plogp = jnp.where(pos, p * jnp.log(jnp.where(pos, p, 1.0)), 0.0)
    ent_ref[...] = -jnp.sum(plogp, axis=1, keepdims=True)        # (TB, 1)


def _sparsemap_pallas(x_pad, w_pad, b_pad, *, latent, tile_b):
    bp, h = x_pad.shape
    lp = w_pad.shape[1]
    vp = latent + 1
    grid = (bp // tile_b,)
    out_shape = (
        jax.ShapeDtypeStruct((bp, vp, lp), jnp.float32),
        jax.ShapeDtypeStruct((bp, lp), jnp.float32),
        jax.ShapeDtypeStruct((bp, 1), jnp.float32),
    )
    return pl.pallas_call(
        _sparsemap_bernoulli_kernel,
        out_shape=out_shape,
        grid_spec=pl.GridSpec(
            grid=grid,
            in_specs=[
                pl.BlockSpec((tile_b, h), lambda i: (i, 0)),     # batch-tiled activations
                pl.BlockSpec((h, lp), lambda i: (0, 0)),         # resident weights
                pl.BlockSpec((1, lp), lambda i: (0, 0)),         # resident bias
            ],
            out_specs=(
                pl.BlockSpec((tile_b, vp, lp), lambda i: (i, 0, 0)),
                pl.BlockSpec((tile_b, lp), lambda i: (i, 0)),
                pl.BlockSpec((tile_b, 1), lambda i: (i, 0)),
            ),
        ),
        compiler_params=pltpu.CompilerParams(
            # Independent batch tiles: shard across v7x's 2 TensorCores;
            # harmless on v5e/v6e.
            dimension_semantics=("parallel",)),
    )(x_pad, w_pad, b_pad)


@functools.partial(jax.jit, static_argnames=("tile_b",))
def sparsemap_forward(x, w, b, *, tile_b=None):
    """Dense/padded SparseMAPWrapper forward for a linear agent (budget == 0)."""
    B, H = x.shape
    L = w.shape[1]
    LP = _round_up(L + 1, 128)          # lane-dense latent padding, strictly > L
    VP = L + 1

    if tile_b is None:
        tile_b = _auto_tile_b(B, LP, VP)
    tile_b = int(min(_round_up(max(int(tile_b), 1), 8), _round_up(B, 8)))
    Bp = _round_up(B, tile_b)

    w_pad = jnp.pad(w.astype(jnp.float32), ((0, 0), (0, LP - L)))
    b_pad = jnp.pad(b.astype(jnp.float32), ((0, 0), (0, LP - L)))
    x_pad = jnp.pad(x.astype(jnp.float32), ((0, Bp - B), (0, 0)))

    sample_pad, distr_pad, ent_rows = _sparsemap_pallas(
        x_pad, w_pad, b_pad, latent=L, tile_b=tile_b)

    sample = sample_pad[:B, :, :L]      # (B, L+1, L)
    distr = distr_pad[:B, :VP]          # (B, L+1)
    entropy = jnp.sum(ent_rows[:B]) / B
    return sample, distr, entropy


def sparsemap_wrapper_forward(x, w, b, budget=0, tile_b=None):
    """Mirrors SparseMAPWrapper.forward for a linear agent (budget == 0)."""
    # TODO(synk): budget_smap (budget > 0) path and the iterative active-set
    # solver options (init, max_iter) are not ported; the budget==0 Bernoulli
    # SparseMAP has the closed-form solution used in the kernel.
    assert budget == 0
    sample_pad, distr_pad, entropy = jax.block_until_ready(
        sparsemap_forward(x, w, b, tile_b=tile_b))
    sample_pad = np.asarray(sample_pad)
    distr_pad = np.asarray(distr_pad)
    entropy = float(np.asarray(entropy))

    B = distr_pad.shape[0]
    mask = distr_pad > 0.0                     # keep positive-support entries
    support = [int(m.sum()) for m in mask]
    assert all(s > 0 for s in support)
    idxs = [k for k in range(B) for _ in range(support[k])]
    sample = sample_pad[mask]                  # (total_support, L)
    distr = distr_pad[mask]                    # (total_support,)
    return sample, distr, entropy, idxs, support


if __name__ == "__main__":
    B, H, L = 16, 32, 8
    key = jax.random.PRNGKey(0)
    kx, kw, kb = jax.random.split(key, 3)
    x = jax.random.normal(kx, (B, H), dtype=jnp.float32)
    w = jax.random.normal(kw, (H, L), dtype=jnp.float32) / jnp.sqrt(H)
    b = 0.1 * jax.random.normal(kb, (1, L), dtype=jnp.float32)

    # tile_b=8 -> 2 grid steps over the batch (exercises the pipelined path).
    sample, distr, entropy, idxs, support = sparsemap_wrapper_forward(
        x, w, b, tile_b=8)

    # sanity: each batch item's sparse distribution sums to 1,
    # the mixture of vertices reproduces clip(scores, 0, 1),
    # and the entropy matches a host-side recompute.
    assert abs(float(distr.sum()) - B) < 1e-3
    scores = np.asarray(x) @ np.asarray(w) + np.asarray(b)
    mu_ref = np.clip(scores, 0.0, 1.0)
    recon = np.zeros_like(mu_ref)
    for p_i, v_i, k in zip(distr, sample, idxs):
        recon[k] += p_i * v_i
    assert np.allclose(recon, mu_ref, atol=1e-5)
    ent_ref = -float(np.sum(distr * np.log(distr))) / B
    assert abs(entropy - ent_ref) < 1e-4
    assert len(idxs) == sum(support) == sample.shape[0] == distr.shape[0]

    print("KERNEL_OK")
</pallas_src>

<mosaic_0001>
module attributes {stable_mosaic.version = 11 : i64} {
  func.func @_sparsemap_bernoulli_kernel(%arg0: i32, %arg1: memref<8x32xf32, #tpu.memory_space<vmem>>, %arg2: memref<32x128xf32, #tpu.memory_space<vmem>>, %arg3: memref<1x128xf32, #tpu.memory_space<vmem>>, %arg4: memref<8x9x128xf32, #tpu.memory_space<vmem>>, %arg5: memref<8x128xf32, #tpu.memory_space<vmem>>, %arg6: memref<8x1xf32, #tpu.memory_space<vmem>>) attributes {dimension_semantics = [#tpu.dimension_semantics<parallel>], iteration_bounds = array<i64: 2>, scalar_prefetch = 0 : i64, scratch_operands = 0 : i64, tpu.core_type = #tpu.core_type<tc>, window_params = [{transform_indices = @transform_0, window_bounds = array<i64: 8, 32>}, {pipeline_mode = #tpu.pipeline_mode<synchronous>, transform_indices = @transform_1, window_bounds = array<i64: 32, 128>}, {pipeline_mode = #tpu.pipeline_mode<synchronous>, transform_indices = @transform_2, window_bounds = array<i64: 1, 128>}, {transform_indices = @transform_3, window_bounds = array<i64: 8, 9, 128>}, {transform_indices = @transform_4, window_bounds = array<i64: 8, 128>}, {transform_indices = @transform_5, window_bounds = array<i64: 8, 1>}]} {
    %c0 = arith.constant 0 : index
    %c0_0 = arith.constant 0 : index
    %0 = vector.load %arg1[%c0, %c0_0] : memref<8x32xf32, #tpu.memory_space<vmem>>, vector<8x32xf32>
    %c0_1 = arith.constant 0 : index
    %c0_2 = arith.constant 0 : index
    %1 = vector.load %arg2[%c0_1, %c0_2] : memref<32x128xf32, #tpu.memory_space<vmem>>, vector<32x128xf32>
    %cst = arith.constant dense<0.000000e+00> : vector<8x128xf32>
    %2 = tpu.matmul %0, %1, %cst {dimension_numbers = #tpu.dot_dimension_numbers<[1], [0], [0], [1], [0, 0, 1, 1], [], []>} : vector<8x32xf32>, vector<32x128xf32>, vector<8x128xf32> -> vector<8x128xf32>
    %c0_3 = arith.constant 0 : index
    %c0_4 = arith.constant 0 : index
    %3 = vector.load %arg3[%c0_3, %c0_4] : memref<1x128xf32, #tpu.memory_space<vmem>>, vector<1x128xf32>
    %4 = vector.broadcast %3 : vector<1x128xf32> to vector<8x128xf32>
    %5 = arith.addf %2, %4 : vector<8x128xf32>
    %cst_5 = arith.constant 0.000000e+00 : f32
    %cst_6 = arith.constant 1.000000e+00 : f32
    %6 = vector.broadcast %cst_5 : f32 to vector<8x128xf32>
    %7 = arith.maximumf %6, %5 : vector<8x128xf32>
    %8 = vector.broadcast %cst_6 : f32 to vector<8x128xf32>
    %9 = arith.minimumf %8, %7 : vector<8x128xf32>
    %10 = tpu.iota {dimensions = array<i32: 1>} : vector<1x128x128xi32>
    %11 = tpu.iota {dimensions = array<i32: 2>} : vector<1x128x128xi32>
    %12 = arith.cmpi slt, %10, %11 : vector<1x128x128xi32>
    %13 = vector.shape_cast %9 : vector<8x128xf32> to vector<8x128x1xf32>
    %14 = vector.shape_cast %9 : vector<8x128xf32> to vector<8x1x128xf32>
    %15 = vector.broadcast %13 : vector<8x128x1xf32> to vector<8x128x128xf32>
    %16 = vector.broadcast %14 : vector<8x1x128xf32> to vector<8x128x128xf32>
    %17 = arith.cmpf ogt, %15, %16 : vector<8x128x128xf32>
    %18 = vector.broadcast %13 : vector<8x128x1xf32> to vector<8x128x128xf32>
    %19 = vector.broadcast %14 : vector<8x1x128xf32> to vector<8x128x128xf32>
    %20 = arith.cmpf oeq, %18, %19 : vector<8x128x128xf32>
    %21 = vector.broadcast %12 : vector<1x128x128xi1> to vector<8x128x128xi1>
    %22 = arith.andi %20, %21 : vector<8x128x128xi1>
    %23 = arith.ori %17, %22 : vector<8x128x128xi1>
    %24 = arith.extui %23 : vector<8x128x128xi1> to vector<8x128x128xi32>
    %25 = arith.sitofp %24 : vector<8x128x128xi32> to vector<8x128x128xf32>
    %cst_7 = arith.constant dense<0.000000e+00> : vector<8x128xf32>
    %26 = vector.multi_reduction <add>, %25, %cst_7 [1] : vector<8x128x128xf32> to vector<8x128xf32>
    %27 = tpu.iota {dimensions = array<i32: 2>} : vector<1x1x128xi32>
    %28 = arith.sitofp %27 : vector<1x1x128xi32> to vector<1x1x128xf32>
    %29 = vector.shape_cast %26 : vector<8x128xf32> to vector<8x128x1xf32>
    %30 = vector.broadcast %29 : vector<8x128x1xf32> to vector<8x128x128xf32>
    %31 = vector.broadcast %28 : vector<1x1x128xf32> to vector<8x128x128xf32>
    %32 = arith.cmpf oeq, %30, %31 : vector<8x128x128xf32>
    %33 = vector.shape_cast %9 : vector<8x128xf32> to vector<8x128x1xf32>
    %cst_8 = arith.constant 0.000000e+00 : f32
    %34 = vector.shape_cast %33 : vector<8x128x1xf32> to vector<8x128x1xf32>
    %35 = vector.broadcast %34 : vector<8x128x1xf32> to vector<8x128x128xf32>
    %36 = vector.broadcast %cst_8 : f32 to vector<8x128x128xf32>
    %37 = arith.select %32, %35, %36 : vector<8x128x128xi1>, vector<8x128x128xf32>
    %cst_9 = arith.constant dense<0.000000e+00> : vector<8x128xf32>
    %38 = vector.multi_reduction <add>, %37, %cst_9 [1] : vector<8x128x128xf32> to vector<8x128xf32>
    %c1_i32 = arith.constant 1 : i32
    %39 = tpu.dynamic_rotate %38 by %c1_i32 dim 1 : vector<8x128xf32>, i32 -> vector<8x128xf32>
    %40 = tpu.iota {dimensions = array<i32: 1>} : vector<8x128xi32>
    %c0_i32 = arith.constant 0 : i32
    %41 = vector.broadcast %c0_i32 : i32 to vector<8x128xi32>
    %42 = arith.cmpi eq, %40, %41 : vector<8x128xi32>
    %cst_10 = arith.constant 1.000000e+00 : f32
    %43 = vector.broadcast %cst_10 : f32 to vector<8x128xf32>
    %44 = arith.select %42, %43, %39 : vector<8x128xi1>, vector<8x128xf32>
    %45 = arith.subf %44, %38 : vector<8x128xf32>
    %46 = tpu.iota {dimensions = array<i32: 1>} : vector<1x9x128xi32>
    %47 = arith.sitofp %46 : vector<1x9x128xi32> to vector<1x9x128xf32>
    %48 = vector.shape_cast %26 : vector<8x128xf32> to vector<8x1x128xf32>
    %49 = vector.broadcast %48 : vector<8x1x128xf32> to vector<8x9x128xf32>
    %50 = vector.broadcast %47 : vector<1x9x128xf32> to vector<8x9x128xf32>
    %51 = arith.cmpf olt, %49, %50 : vector<8x9x128xf32>
    %52 = arith.extui %51 : vector<8x9x128xi1> to vector<8x9x128xi32>
    %53 = arith.sitofp %52 : vector<8x9x128xi32> to vector<8x9x128xf32>
    %c0_11 = arith.constant 0 : index
    %c0_12 = arith.constant 0 : index
    %c0_13 = arith.constant 0 : index
    %54 = vector.load %arg4[%c0_11, %c0_12, %c0_13] : memref<8x9x128xf32, #tpu.memory_space<vmem>>, vector<8x9x128xf32>
    tpu.vector_store %arg4[%c0_11, %c0_12, %c0_13], %53 {strides = array<i32>} : memref<8x9x128xf32, #tpu.memory_space<vmem>>, vector<8x9x128xf32>,
    %c0_14 = arith.constant 0 : index
    %c0_15 = arith.constant 0 : index
    %55 = vector.load %arg5[%c0_14, %c0_15] : memref<8x128xf32, #tpu.memory_space<vmem>>, vector<8x128xf32>
    tpu.vector_store %arg5[%c0_14, %c0_15], %45 {strides = array<i32>} : memref<8x128xf32, #tpu.memory_space<vmem>>, vector<8x128xf32>,
    %cst_16 = arith.constant 0.000000e+00 : f32
    %56 = vector.broadcast %cst_16 : f32 to vector<8x128xf32>
    %57 = arith.cmpf ogt, %45, %56 : vector<8x128xf32>
    %cst_17 = arith.constant 1.000000e+00 : f32
    %58 = vector.broadcast %cst_17 : f32 to vector<8x128xf32>
    %59 = arith.select %57, %45, %58 : vector<8x128xi1>, vector<8x128xf32>
    %60 = math.log %59 : vector<8x128xf32>
    %61 = arith.mulf %45, %60 : vector<8x128xf32>
    %cst_18 = arith.constant 0.000000e+00 : f32
    %62 = vector.broadcast %cst_18 : f32 to vector<8x128xf32>
    %63 = arith.select %57, %61, %62 : vector<8x128xi1>, vector<8x128xf32>
    %cst_19 = arith.constant dense<0.000000e+00> : vector<8xf32>
    %64 = vector.multi_reduction <add>, %63, %cst_19 [1] : vector<8x128xf32> to vector<8xf32>
    %65 = vector.shape_cast %64 : vector<8xf32> to vector<8x1xf32>
    %cst_20 = arith.constant 0.000000e+00 : f32
    %66 = vector.broadcast %cst_20 : f32 to vector<8x1xf32>
    %67 = arith.subf %66, %65 : vector<8x1xf32>
    %c0_21 = arith.constant 0 : index
    %c0_22 = arith.constant 0 : index
    %68 = vector.load %arg6[%c0_21, %c0_22] : memref<8x1xf32, #tpu.memory_space<vmem>>, vector<8x1xf32>
    tpu.vector_store %arg6[%c0_21, %c0_22], %67 {strides = array<i32>} : memref<8x1xf32, #tpu.memory_space<vmem>>, vector<8x1xf32>,
    return
  }
  func.func @transform_0(%arg0: i32) -> (i32, i32) {
    %c0_i32 = arith.constant 0 : i32
    %c0_i32_0 = arith.constant 0 : i32
    return %arg0, %c0_i32 : i32, i32
  }
  func.func @transform_1(%arg0: i32) -> (i32, i32) {
    %c0_i32 = arith.constant 0 : i32
    %c0_i32_0 = arith.constant 0 : i32
    %c0_i32_1 = arith.constant 0 : i32
    return %c0_i32, %c0_i32_0 : i32, i32
  }
  func.func @transform_2(%arg0: i32) -> (i32, i32) {
    %c0_i32 = arith.constant 0 : i32
    %c0_i32_0 = arith.constant 0 : i32
    %c0_i32_1 = arith.constant 0 : i32
    return %c0_i32, %c0_i32_0 : i32, i32
  }
  func.func @transform_3(%arg0: i32) -> (i32, i32, i32) {
    %c0_i32 = arith.constant 0 : i32
    %c0_i32_0 = arith.constant 0 : i32
    %c0_i32_1 = arith.constant 0 : i32
    return %arg0, %c0_i32, %c0_i32_0 : i32, i32, i32
  }
  func.func @transform_4(%arg0: i32) -> (i32, i32) {
    %c0_i32 = arith.constant 0 : i32
    %c0_i32_0 = arith.constant 0 : i32
    return %arg0, %c0_i32 : i32, i32
  }
  func.func @transform_5(%arg0: i32) -> (i32, i32) {
    %c0_i32 = arith.constant 0 : i32
    %c0_i32_0 = arith.constant 0 : i32
    return %arg0, %c0_i32 : i32, i32
  }
}

</mosaic_0001>

<llo_original>
// kernel: sparsemap_forward.1
$region0: #{sparsemap_forward.1}
  #allocation0 [shape = 'u32[]', space=smem, size = 0x4, offset = 0x4, fixed_abs, tag = 'smem constant byte address 0x4 - core index']
  #allocation1 [shape = 'u32[72,128]{1,0:T(1,128)}', space=vmem, size = 0x9000, scoped, tag = 'internal scratch']
  %s0 = inlined_call_operand.vmem [shape: f32[16,32], index: 0, kind: input, shape index: {}]
  %s1 = inlined_call_operand.vmem [shape: f32[32,128], index: 1, kind: input, shape index: {}]
  %s2 = inlined_call_operand.vmem [shape: f32[1,128], index: 2, kind: input, shape index: {}]
  %s3 = inlined_call_operand.vmem [shape: f32[16,9,128], index: 3, kind: output, shape index: {0}]
  %s4 = inlined_call_operand.hbm [shape: f32[16,128], index: 4, kind: output, shape index: {1}]
  %s5 = inlined_call_operand.vmem [shape: f32[16,1], index: 5, kind: output, shape index: {2}]
  %6 = xla_tuple %s3, %s4, %s5
  %s7 = sld [smem:[#allocation0]]
  $region61: #{sparsemap_forward.1} parent=0
    _
  %s9 = ssub.s32 1, %s7
  %s10 = scalar_select 0, %s9, %s7
  $region1: #{sparsemap_forward.1} parent=0
    #allocation2 [shape = 'u8[8192]{0}', space=vmem, size = 0x2000, scoped, tag = 'output window, operand 1']
    #allocation3 [shape = 's32[2]{0}', space=sflag, size = 0x8, scoped, tag = 'scoped memory for sparsemap_forward.1']
    %11 = vsyncpa [#allocation3], 0
    %s12 = scalar_lea.sflag [#allocation3], 1
    %13 = vsyncpa %s12, 0
    loop: start=0, step=1, limit=4
    $region2: #{sparsemap_forward.1} parent=1 // loop_pre_header
      _
    $region3: #{sparsemap_forward.1} parent=1 // loop_header
      %s15 = sphi 0, %s19
      %p16 = scmp.ge.s32.totalorder %s15, 4
      %s25 = sphi 0, %s27
      %s28 = sphi 0, %s25
      %s29 = sphi 0, %s28
      %s45 = sphi 0, %s29
      %s49 = sphi 0, %s49
      %s51 = sphi 0, %s49
      %s52 = sphi 0, %s51
      %s66 = sphi 0, %s52
      %s70 = sphi 0, %s70
      %s72 = sphi 0, %s70
      %s73 = sphi 0, %s72
      %s87 = sphi 0, %s73
      %s93 = sphi 0, %s95
      %s96 = sphi 0, %s93
      %s97 = sphi 0, %s96
      %s113 = sphi 0, %s97
      %s119 = sphi 0, %s121
      %s122 = sphi 0, %s119
      %s123 = sphi 0, %s122
      %s139 = sphi 0, %s123
      %s145 = sphi 0, %s147
      %s148 = sphi 0, %s145
      %s149 = sphi 0, %s148
      %s165 = sphi 0, %s149
    $region4: #{sparsemap_forward.1} parent=1 // loop_header_branch
      %18 = sbr.rel (%p16) target = $region8
    $region5: #{sparsemap_forward.1} parent=1 // loop_body
      %s20 = ssub.s32 %s15, 1
      %s21 = ssub.s32 %s15, 2
      %s22 = sadd.s32 %s15, 1
      %s23 = ssub.s32 %s15, %s22
      %p24 = scmp.eq.s32.totalorder %s23, 0
      %s26 = sadd.s32 %s25, 1
      %s27 = scalar_select %p24, %s25, %s26
      %p30 = pneg %p24
      %p31 = scmp.eq.s32.totalorder %s15, 1
      %p32 = por %p30, %p31
      %p33 = scmp.ne.s32.totalorder %s25, %s28
      %p34 = scmp.eq.s32.totalorder %s15, 0
      %p35 = por %p33, %p34
      %p36 = scmp.ne.s32.totalorder %s25, %s28
      %p37 = scmp.eq.s32.totalorder %s20, 1
      %p38 = por %p36, %p37
      %p39 = scmp.ne.s32.totalorder %s28, %s29
      %p40 = scmp.eq.s32.totalorder %s20, 0
      %p41 = por %p39, %p40
      %p42 = scmp.ne.s32.totalorder %s28, %s29
      %p43 = scmp.eq.s32.totalorder %s21, 1
      %p44 = por %p42, %p43
      %p46 = scmp.ne.s32.totalorder %s29, %s45
      %p47 = scmp.eq.s32.totalorder %s21, 0
      %p48 = por %p46, %p47
      %s50 = sadd.s32 %s49, 1
      %p53 = scmp.eq.s32.totalorder %s15, 1
      %p54 = scmp.ne.s32.totalorder %s49, %s51
      %p55 = scmp.eq.s32.totalorder %s15, 0
      %p56 = por %p54, %p55
      %p57 = scmp.ne.s32.totalorder %s49, %s51
      %p58 = scmp.eq.s32.totalorder %s20, 1
      %p59 = por %p57, %p58
      %p60 = scmp.ne.s32.totalorder %s51, %s52
      %p61 = scmp.eq.s32.totalorder %s20, 0
      %p62 = por %p60, %p61
      %p63 = scmp.ne.s32.totalorder %s51, %s52
      %p64 = scmp.eq.s32.totalorder %s21, 1
      %p65 = por %p63, %p64
      %p67 = scmp.ne.s32.totalorder %s52, %s66
      %p68 = scmp.eq.s32.totalorder %s21, 0
      %p69 = por %p67, %p68
      %s71 = sadd.s32 %s70, 1
      %p74 = scmp.eq.s32.totalorder %s15, 1
      %p75 = scmp.ne.s32.totalorder %s70, %s72
      %p76 = scmp.eq.s32.totalorder %s15, 0
      %p77 = por %p75, %p76
      %p78 = scmp.ne.s32.totalorder %s70, %s72
      %p79 = scmp.eq.s32.totalorder %s20, 1
      %p80 = por %p78, %p79
      %p81 = scmp.ne.s32.totalorder %s72, %s73
      %p82 = scmp.eq.s32.totalorder %s20, 0
      %p83 = por %p81, %p82
      %p84 = scmp.ne.s32.totalorder %s72, %s73
      %p85 = scmp.eq.s32.totalorder %s21, 1
      %p86 = por %p84, %p85
      %p88 = scmp.ne.s32.totalorder %s73, %s87
      %p89 = scmp.eq.s32.totalorder %s21, 0
      %p90 = por %p88, %p89
      %s91 = ssub.s32 %s15, %s22
      %p92 = scmp.eq.s32.totalorder %s91, 0
      %s94 = sadd.s32 %s93, 1
      %s95 = scalar_select %p92, %s93, %s94
      %p98 = pneg %p92
      %p99 = scmp.eq.s32.totalorder %s15, 1
      %p100 = por %p98, %p99
      %p101 = scmp.ne.s32.totalorder %s93, %s96
      %p102 = scmp.eq.s32.totalorder %s15, 0
      %p103 = por %p101, %p102
      %p104 = scmp.ne.s32.totalorder %s93, %s96
      %p105 = scmp.eq.s32.totalorder %s20, 1
      %p106 = por %p104, %p105
      %p107 = scmp.ne.s32.totalorder %s96, %s97
      %p108 = scmp.eq.s32.totalorder %s20, 0
      %p109 = por %p107, %p108
      %p110 = scmp.ne.s32.totalorder %s96, %s97
      %p111 = scmp.eq.s32.totalorder %s21, 1
      %p112 = por %p110, %p111
      %p114 = scmp.ne.s32.totalorder %s97, %s113
      %p115 = scmp.eq.s32.totalorder %s21, 0
      %p116 = por %p114, %p115
      %s117 = ssub.s32 %s15, %s22
      %p118 = scmp.eq.s32.totalorder %s117, 0
      %s120 = sadd.s32 %s119, 1
      %s121 = scalar_select %p118, %s119, %s120
      %p124 = pneg %p118
      %p125 = scmp.eq.s32.totalorder %s15, 1
      %p126 = por %p124, %p125
      %p127 = scmp.ne.s32.totalorder %s119, %s122
      %p128 = scmp.eq.s32.totalorder %s15, 0
      %p129 = por %p127, %p128
      %p130 = scmp.ne.s32.totalorder %s119, %s122
      %p131 = scmp.eq.s32.totalorder %s20, 1
      %p132 = por %p130, %p131
      %p133 = scmp.ne.s32.totalorder %s122, %s123
      %p134 = scmp.eq.s32.totalorder %s20, 0
      %p135 = por %p133, %p134
      %p136 = scmp.ne.s32.totalorder %s122, %s123
      %p137 = scmp.eq.s32.totalorder %s21, 1
      %p138 = por %p136, %p137
      %p140 = scmp.ne.s32.totalorder %s123, %s139
      %p141 = scmp.eq.s32.totalorder %s21, 0
      %p142 = por %p140, %p141
      %s143 = ssub.s32 %s15, %s22
      %p144 = scmp.eq.s32.totalorder %s143, 0
      %s146 = sadd.s32 %s145, 1
      %s147 = scalar_select %p144, %s145, %s146
      %p150 = pneg %p144
      %p151 = scmp.eq.s32.totalorder %s15, 1
      %p152 = por %p150, %p151
      %p153 = scmp.ne.s32.totalorder %s145, %s148
      %p154 = scmp.eq.s32.totalorder %s15, 0
      %p155 = por %p153, %p154
      %p156 = scmp.ne.s32.totalorder %s145, %s148
      %p157 = scmp.eq.s32.totalorder %s20, 1
      %p158 = por %p156, %p157
      %p159 = scmp.ne.s32.totalorder %s148, %s149
      %p160 = scmp.eq.s32.totalorder %s20, 0
      %p161 = por %p159, %p160
      %p162 = scmp.ne.s32.totalorder %s148, %s149
      %p163 = scmp.eq.s32.totalorder %s21, 1
      %p164 = por %p162, %p163
      %p166 = scmp.ne.s32.totalorder %s149, %s165
      %p167 = scmp.eq.s32.totalorder %s21, 0
      %p168 = por %p166, %p167
      %p169 = scmp.le.s32.totalorder 1, %s15
      %p170 = scmp.lt.s32.totalorder %s15, 3
      %p171 = pnand %p169, %p170
      %p172 = pneg %p171
      // Predicated region
      $region9: #{sparsemap_forward.1} parent=5 // pred_check
        _
      $region10: #{sparsemap_forward.1} parent=5 // pred_check_branch
        %174 = sbr.rel (%p171) target = $region12
      $region11: #{sparsemap_forward.1} parent=5 // pred_region
        %s175 = ssub.s32 %s15, 1
        // Predicated region
        $region13: #{sparsemap_forward.1} parent=11 // pred_check
          %p176 = pneg %p62
        $region14: #{sparsemap_forward.1} parent=11 // pred_check_branch
          %178 = sbr.rel (%p176) target = $region16
        $region15: #{sparsemap_forward.1} parent=11 // pred_region
          _
        $region16: #{sparsemap_forward.1} parent=11 // pred_fallthru
          _
        // Predicated region
        $region17: #{sparsemap_forward.1} parent=11 // pred_check
          %p179 = pneg %p83
        $region18: #{sparsemap_forward.1} parent=11 // pred_check_branch
          %181 = sbr.rel (%p179) target = $region20
        $region19: #{sparsemap_forward.1} parent=11 // pred_region
          _
        $region20: #{sparsemap_forward.1} parent=11 // pred_fallthru
          _
      $region12: #{sparsemap_forward.1} parent=5 // pred_fallthru
        _
      %p182 = scmp.lt.s32.totalorder %s15, 2
      // Predicated region
      $region21: #{sparsemap_forward.1} parent=5 // pred_check
        %p183 = pneg %p182
      $region22: #{sparsemap_forward.1} parent=5 // pred_check_branch
        %185 = sbr.rel (%p183) target = $region24
      $region23: #{sparsemap_forward.1} parent=5 // pred_region
        // Predicated region
        $region25: #{sparsemap_forward.1} parent=23 // pred_check
          %p186 = pneg %p35
        $region26: #{sparsemap_forward.1} parent=23 // pred_check_branch
          %188 = sbr.rel (%p186) target = $region28
        $region27: #{sparsemap_forward.1} parent=23 // pred_region
          %p189 = scmp.lt.s32.totalorder %s15, 1
          %s190 = scalar_select %p189, %s15, 1
          %s191 = smul.addr %s190, 8
          %s192 = scalar_lea.vmem %s0, %s191
        $region28: #{sparsemap_forward.1} parent=23 // pred_fallthru
          _
      $region24: #{sparsemap_forward.1} parent=5 // pred_fallthru
        _
      %p193 = scmp.le.s32.totalorder 1, %s15
      %p194 = scmp.lt.s32.totalorder %s15, 3
      %p195 = pnand %p193, %p194
      %p196 = pneg %p195
      // Predicated region
      $region29: #{sparsemap_forward.1} parent=5 // pred_check
        _
      $region30: #{sparsemap_forward.1} parent=5 // pred_check_branch
        %198 = sbr.rel (%p195) target = $region32
      $region31: #{sparsemap_forward.1} parent=5 // pred_region
        %s199 = ssub.s32 %s15, 1
        %p200 = scmp.lt.s32.totalorder %s20, 1
        %s201 = scalar_select %p200, %s20, 1
        %s202 = smul.addr %s201, 8
        %s203 = scalar_lea.vmem %s0, %s202
        %p204 = pneg %p41
        %p205 = pneg %p38
        %p206 = pneg %p62
        %p207 = pneg %p59
        %p208 = pneg %p83
        %p209 = pneg %p80
        %p210 = pneg %p109
        %p211 = pneg %p106
        %s212 = smul.u32 8, %s20
        %p213 = scmp.lt.s32.totalorder %s212, 15
        %s214 = scalar_select %p213, %s212, 15
        %s215 = smul.addr %s214, 2
        %s216 = smul.addr %s215, 8
        %s217 = scalar_lea.vmem %s3, %s216
        %p218 = pneg %p135
        %p219 = pneg %p132
        %s220 = sand.u32 %s122, 1
        %s221 = scalar_lea.sflag [#allocation3], %s220
        %s222 = sand.u32 %s122, 1
        %s223 = smul.addr %s222, 8
        %s224 = scalar_lea.vmem [#allocation2], %s223
        %p225 = pneg %p161
        %p226 = pneg %p158
        %p227 = scmp.lt.s32.totalorder %s20, 1
        %s228 = scalar_select %p227, %s20, 1
        %s229 = smul.addr %s228, 8
        %s230 = scalar_lea.vmem %s5, %s229
        %p231 = scmp.lt.s32.totalorder %s20, 1
        %s232 = scalar_select %p231, %s20, 1
        %s233 = smul.addr %s232, 8
        %s234 = scalar_lea.vmem %s0, %s233
        %s235 = smul.u32 8, %s20
        %p236 = scmp.lt.s32.totalorder %s235, 15
        %s237 = scalar_select %p236, %s235, 15
        %s238 = smul.addr %s237, 2
        %s239 = smul.addr %s238, 8
        %s240 = scalar_lea.vmem %s3, %s239
        %s241 = smul.u32 8, %s20
        %p242 = scmp.lt.s32.totalorder %s20, 1
        %s243 = scalar_select %p242, %s20, 1
        %s244 = smul.addr %s243, 8
        %s245 = scalar_lea.vmem %s5, %s244
        %v246 = vld [vmem:[%s234] sm:$0xff]
        %v247 = vld [vmem:[%s1] sm:$0xff]
        %v248 = vld [vmem:[%s1 + $0x8] sm:$0xff]
        %v249 = vld [vmem:[%s1 + $0x10] sm:$0xff]
        %v250 = vld [vmem:[%s1 + $0x18] sm:$0xff]
        %v251 = vld [vmem:[%s2] sm:$0x1]
        %v253 = vperm.slane %v251, 0
        %vm255 = vcmask 261120
        %v257 = vsel %vm255, %v246, 0
        %259 = vmatpush.msra.mxu0 0.0
        %260 = vmatpush.msra.mxu0 0.0
        %261 = vmatpush.msra.mxu0 0.0
        %262 = vmatpush.msra.mxu0 0.0
        %263 = vmatpush.msra.mxu0 0.0
        %264 = vmatpush.msra.mxu0 0.0
        %265 = vmatpush.msra.mxu0 0.0
        %266 = vmatpush.msra.mxu0 0.0
        %267 = vmatpush.msra.mxu0 0.0
        %268 = vmatpush.msra.mxu0 0.0
        %269 = vmatpush.msra.mxu0 0.0
        %270 = vmatpush.msra.mxu0 0.0
        %271 = vmatpush.msra.mxu0 %v250
        %272 = vmatpush.msra.mxu0 %v249
        %273 = vmatpush.msra.mxu0 %v248
        %274 = vmatpush.msra.mxu0 %v247
        %275 = vmatmul.f32.gmra.mxu0 %v257
        %v276 = vpop.f32.mrf.mxu0
        %v277 = vadd.f32 %v253, %v276
        %278 = vdwg.mxu0
        %v279 = vmax.f32 %v277, 0.0
        %v280 = vmin.f32 %v279, 1.0
        %v281 = vlaneseq
        %v282 = vshrl.u32 %v281, 7
        %v283 = vadd.s32 %v282, 8
        %v284 = vadd.s32 %v282, 16
        %v285 = vadd.s32 %v282, 24
        %v286 = vadd.s32 %v282, 32
        %v287 = vadd.s32 %v282, 40
        %v288 = vadd.s32 %v282, 48
        %v289 = vadd.s32 %v282, 56
        %v290 = vadd.s32 %v282, 64
        %v291 = vadd.s32 %v282, 72
        %v292 = vadd.s32 %v282, 80
        %v293 = vadd.s32 %v282, 88
        %v294 = vadd.s32 %v282, 96
        %v295 = vadd.s32 %v282, 104
        %v296 = vadd.s32 %v282, 112
        %v297 = vadd.s32 %v282, 120
        %v298 = vlaneseq
        %v299 = vand.u32 %v298, 127
        %vm300 = vcmp.lt.s32.totalorder %v282, %v299
        %vm301 = vcmp.lt.s32.totalorder %v283, %v299
        %vm302 = vcmp.lt.s32.totalorder %v284, %v299
        %vm303 = vcmp.lt.s32.totalorder %v285, %v299
        %vm304 = vcmp.lt.s32.totalorder %v286, %v299
        %vm305 = vcmp.lt.s32.totalorder %v287, %v299
        %vm306 = vcmp.lt.s32.totalorder %v288, %v299
        %vm307 = vcmp.lt.s32.totalorder %v289, %v299
        %vm308 = vcmp.lt.s32.totalorder %v290, %v299
        %vm309 = vcmp.lt.s32.totalorder %v291, %v299
        %vm310 = vcmp.lt.s32.totalorder %v292, %v299
        %vm311 = vcmp.lt.s32.totalorder %v293, %v299
        %vm312 = vcmp.lt.s32.totalorder %v294, %v299
        %vm313 = vcmp.lt.s32.totalorder %v295, %v299
        %vm314 = vcmp.lt.s32.totalorder %v296, %v299
        %vm315 = vcmp.lt.s32.totalorder %v297, %v299
        %v316 = vperm.slane %v280, 0
        %v317 = vlaneseq
        %v318 = vshrl.u32 %v317, 7
        %320 = vset.pattern.permute.xlu0 %v318
        %321 = vperm.xlu0 %320, %v316
        %v322 = vpop.permute.xlu0 %321
        %v323 = vlaneseq
        %v324 = vshrl.u32 %v323, 7
        %v325 = vadd.s32 %v324, 8
        %326 = vset.pattern.permute.xlu0 %v325
        %327 = vperm.xlu0 %326, %v316
        %v328 = vpop.permute.xlu0 %327
        %v329 = vlaneseq
        %v330 = vshrl.u32 %v329, 7
        %v331 = vadd.s32 %v330, 16
        %332 = vset.pattern.permute.xlu0 %v331
        %333 = vperm.xlu0 %332, %v316
        %v334 = vpop.permute.xlu0 %333
        %v335 = vlaneseq
        %v336 = vshrl.u32 %v335, 7
        %v337 = vadd.s32 %v336, 24
        %338 = vset.pattern.permute.xlu0 %v337
        %339 = vperm.xlu0 %338, %v316
        %v340 = vpop.permute.xlu0 %339
        %v341 = vlaneseq
        %v342 = vshrl.u32 %v341, 7
        %v343 = vadd.s32 %v342, 32
        %344 = vset.pattern.permute.xlu0 %v343
        %345 = vperm.xlu0 %344, %v316
        %v346 = vpop.permute.xlu0 %345
        %v347 = vlaneseq
        %v348 = vshrl.u32 %v347, 7
        %v349 = vadd.s32 %v348, 40
        %350 = vset.pattern.permute.xlu0 %v349
        %351 = vperm.xlu0 %350, %v316
        %v352 = vpop.permute.xlu0 %351
        %v353 = vlaneseq
        %v354 = vshrl.u32 %v353, 7
        %v355 = vadd.s32 %v354, 48
        %356 = vset.pattern.permute.xlu0 %v355
        %357 = vperm.xlu0 %356, %v316
        %v358 = vpop.permute.xlu0 %357
        %v359 = vlaneseq
        %v360 = vshrl.u32 %v359, 7
        %v361 = vadd.s32 %v360, 56
        %362 = vset.pattern.permute.xlu0 %v361
        %363 = vperm.xlu0 %362, %v316
        %v364 = vpop.permute.xlu0 %363
        %v365 = vlaneseq
        %v366 = vshrl.u32 %v365, 7
        %v367 = vadd.s32 %v366, 64
        %368 = vset.pattern.permute.xlu0 %v367
        %369 = vperm.xlu0 %368, %v316
        %v370 = vpop.permute.xlu0 %369
        %v371 = vlaneseq
        %v372 = vshrl.u32 %v371, 7
        %v373 = vadd.s32 %v372, 72
        %374 = vset.pattern.permute.xlu0 %v373
        %375 = vperm.xlu0 %374, %v316
        %v376 = vpop.permute.xlu0 %375
        %v377 = vlaneseq
        %v378 = vshrl.u32 %v377, 7
        %v379 = vadd.s32 %v378, 80
        %380 = vset.pattern.permute.xlu0 %v379
        %381 = vperm.xlu0 %380, %v316
        %v382 = vpop.permute.xlu0 %381
        %v383 = vlaneseq
        %v384 = vshrl.u32 %v383, 7
        %v385 = vadd.s32 %v384, 88
        %386 = vset.pattern.permute.xlu0 %v385
        %387 = vperm.xlu0 %386, %v316
        %v388 = vpop.permute.xlu0 %387
        %v389 = vlaneseq
        %v390 = vshrl.u32 %v389, 7
        %v391 = vadd.s32 %v390, 96
        %392 = vset.pattern.permute.xlu0 %v391
        %393 = vperm.xlu0 %392, %v316
        %v394 = vpop.permute.xlu0 %393
        %v395 = vlaneseq
        %v396 = vshrl.u32 %v395, 7
        %v397 = vadd.s32 %v396, 104
        %398 = vset.pattern.permute.xlu0 %v397
        %399 = vperm.xlu0 %398, %v316
        %v400 = vpop.permute.xlu0 %399
        %v401 = vlaneseq
        %v402 = vshrl.u32 %v401, 7
        %v403 = vadd.s32 %v402, 112
        %404 = vset.pattern.permute.xlu0 %v403
        %405 = vperm.xlu0 %404, %v316
        %v406 = vpop.permute.xlu0 %405
        %v407 = vlaneseq
        %v408 = vshrl.u32 %v407, 7
        %v409 = vadd.s32 %v408, 120
        %410 = vset.pattern.permute.xlu0 %v409
        %411 = vperm.xlu0 %410, %v316
        %v412 = vpop.permute.xlu0 %411
        %v413 = vperm.slane %v280, 1
        %v414 = vlaneseq
        %v415 = vshrl.u32 %v414, 7
        %417 = vset.pattern.permute.xlu0 %v415
        %418 = vperm.xlu0 %417, %v413
        %v419 = vpop.permute.xlu0 %418
        %v420 = vlaneseq
        %v421 = vshrl.u32 %v420, 7
        %v422 = vadd.s32 %v421, 8
        %423 = vset.pattern.permute.xlu0 %v422
        %424 = vperm.xlu0 %423, %v413
        %v425 = vpop.permute.xlu0 %424
        %v426 = vlaneseq
        %v427 = vshrl.u32 %v426, 7
        %v428 = vadd.s32 %v427, 16
        %429 = vset.pattern.permute.xlu0 %v428
        %430 = vperm.xlu0 %429, %v413
        %v431 = vpop.permute.xlu0 %430
        %v432 = vlaneseq
        %v433 = vshrl.u32 %v432, 7
        %v434 = vadd.s32 %v433, 24
        %435 = vset.pattern.permute.xlu0 %v434
        %436 = vperm.xlu0 %435, %v413
        %v437 = vpop.permute.xlu0 %436
        %v438 = vlaneseq
        %v439 = vshrl.u32 %v438, 7
        %v440 = vadd.s32 %v439, 32
        %441 = vset.pattern.permute.xlu0 %v440
        %442 = vperm.xlu0 %441, %v413
        %v443 = vpop.permute.xlu0 %442
        %v444 = vlaneseq
        %v445 = vshrl.u32 %v444, 7
        %v446 = vadd.s32 %v445, 40
        %447 = vset.pattern.permute.xlu0 %v446
        %448 = vperm.xlu0 %447, %v413
        %v449 = vpop.permute.xlu0 %448
        %v450 = vlaneseq
        %v451 = vshrl.u32 %v450, 7
        %v452 = vadd.s32 %v451, 48
        %453 = vset.pattern.permute.xlu0 %v452
        %454 = vperm.xlu0 %453, %v413
        %v455 = vpop.permute.xlu0 %454
        %v456 = vlaneseq
        %v457 = vshrl.u32 %v456, 7
        %v458 = vadd.s32 %v457, 56
        %459 = vset.pattern.permute.xlu0 %v458
        %460 = vperm.xlu0 %459, %v413
        %v461 = vpop.permute.xlu0 %460
        %v462 = vlaneseq
        %v463 = vshrl.u32 %v462, 7
        %v464 = vadd.s32 %v463, 64
        %465 = vset.pattern.permute.xlu0 %v464
        %466 = vperm.xlu0 %465, %v413
        %v467 = vpop.permute.xlu0 %466
        %v468 = vlaneseq
        %v469 = vshrl.u32 %v468, 7
        %v470 = vadd.s32 %v469, 72
        %471 = vset.pattern.permute.xlu0 %v470
        %472 = vperm.xlu0 %471, %v413
        %v473 = vpop.permute.xlu0 %472
        %v474 = vlaneseq
        %v475 = vshrl.u32 %v474, 7
        %v476 = vadd.s32 %v475, 80
        %477 = vset.pattern.permute.xlu0 %v476
        %478 = vperm.xlu0 %477, %v413
        %v479 = vpop.permute.xlu0 %478
        %v480 = vlaneseq
        %v481 = vshrl.u32 %v480, 7
        %v482 = vadd.s32 %v481, 88
        %483 = vset.pattern.permute.xlu0 %v482
        %484 = vperm.xlu0 %483, %v413
        %v485 = vpop.permute.xlu0 %484
        %v486 = vlaneseq
        %v487 = vshrl.u32 %v486, 7
        %v488 = vadd.s32 %v487, 96
        %489 = vset.pattern.permute.xlu0 %v488
        %490 = vperm.xlu0 %489, %v413
        %v491 = vpop.permute.xlu0 %490
        %v492 = vlaneseq
        %v493 = vshrl.u32 %v492, 7
        %v494 = vadd.s32 %v493, 104
        %495 = vset.pattern.permute.xlu0 %v494
        %496 = vperm.xlu0 %495, %v413
        %v497 = vpop.permute.xlu0 %496
        %v498 = vlaneseq
        %v499 = vshrl.u32 %v498, 7
        %v500 = vadd.s32 %v499, 112
        %501 = vset.pattern.permute.xlu0 %v500
        %502 = vperm.xlu0 %501, %v413
        %v503 = vpop.permute.xlu0 %502
        %v504 = vlaneseq
        %v505 = vshrl.u32 %v504, 7
        %v506 = vadd.s32 %v505, 120
        %507 = vset.pattern.permute.xlu0 %v506
        %508 = vperm.xlu0 %507, %v413
        %v509 = vpop.permute.xlu0 %508
        %v510 = vperm.slane %v280, 2
        %v511 = vlaneseq
        %v512 = vshrl.u32 %v511, 7
        %514 = vset.pattern.permute.xlu0 %v512
        %515 = vperm.xlu0 %514, %v510
        %v516 = vpop.permute.xlu0 %515
        %v517 = vlaneseq
        %v518 = vshrl.u32 %v517, 7
        %v519 = vadd.s32 %v518, 8
        %520 = vset.pattern.permute.xlu0 %v519
        %521 = vperm.xlu0 %520, %v510
        %v522 = vpop.permute.xlu0 %521
        %v523 = vlaneseq
        %v524 = vshrl.u32 %v523, 7
        %v525 = vadd.s32 %v524, 16
        %526 = vset.pattern.permute.xlu0 %v525
        %527 = vperm.xlu0 %526, %v510
        %v528 = vpop.permute.xlu0 %527
        %v529 = vlaneseq
        %v530 = vshrl.u32 %v529, 7
        %v531 = vadd.s32 %v530, 24
        %532 = vset.pattern.permute.xlu0 %v531
        %533 = vperm.xlu0 %532, %v510
        %v534 = vpop.permute.xlu0 %533
        %v535 = vlaneseq
        %v536 = vshrl.u32 %v535, 7
        %v537 = vadd.s32 %v536, 32
        %538 = vset.pattern.permute.xlu0 %v537
        %539 = vperm.xlu0 %538, %v510
        %v540 = vpop.permute.xlu0 %539
        %v541 = vlaneseq
        %v542 = vshrl.u32 %v541, 7
        %v543 = vadd.s32 %v542, 40
        %544 = vset.pattern.permute.xlu0 %v543
        %545 = vperm.xlu0 %544, %v510
        %v546 = vpop.permute.xlu0 %545
        %v547 = vlaneseq
        %v548 = vshrl.u32 %v547, 7
        %v549 = vadd.s32 %v548, 48
        %550 = vset.pattern.permute.xlu0 %v549
        %551 = vperm.xlu0 %550, %v510
        %v552 = vpop.permute.xlu0 %551
        %v553 = vlaneseq
        %v554 = vshrl.u32 %v553, 7
        %v555 = vadd.s32 %v554, 56
        %556 = vset.pattern.permute.xlu0 %v555
        %557 = vperm.xlu0 %556, %v510
        %v558 = vpop.permute.xlu0 %557
        %v559 = vlaneseq
        %v560 = vshrl.u32 %v559, 7
        %v561 = vadd.s32 %v560, 64
        %562 = vset.pattern.permute.xlu0 %v561
        %563 = vperm.xlu0 %562, %v510
        %v564 = vpop.permute.xlu0 %563
        %v565 = vlaneseq
        %v566 = vshrl.u32 %v565, 7
        %v567 = vadd.s32 %v566, 72
        %568 = vset.pattern.permute.xlu0 %v567
        %569 = vperm.xlu0 %568, %v510
        %v570 = vpop.permute.xlu0 %569
        %v571 = vlaneseq
        %v572 = vshrl.u32 %v571, 7
        %v573 = vadd.s32 %v572, 80
        %574 = vset.pattern.permute.xlu0 %v573
        %575 = vperm.xlu0 %574, %v510
        %v576 = vpop.permute.xlu0 %575
        %v577 = vlaneseq
        %v578 = vshrl.u32 %v577, 7
        %v579 = vadd.s32 %v578, 88
        %580 = vset.pattern.permute.xlu0 %v579
        %581 = vperm.xlu0 %580, %v510
        %v582 = vpop.permute.xlu0 %581
        %v583 = vlaneseq
        %v584 = vshrl.u32 %v583, 7
        %v585 = vadd.s32 %v584, 96
        %586 = vset.pattern.permute.xlu0 %v585
        %587 = vperm.xlu0 %586, %v510
        %v588 = vpop.permute.xlu0 %587
        %v589 = vlaneseq
        %v590 = vshrl.u32 %v589, 7
        %v591 = vadd.s32 %v590, 104
        %592 = vset.pattern.permute.xlu0 %v591
        %593 = vperm.xlu0 %592, %v510
        %v594 = vpop.permute.xlu0 %593
        %v595 = vlaneseq
        %v596 = vshrl.u32 %v595, 7
        %v597 = vadd.s32 %v596, 112
        %598 = vset.pattern.permute.xlu0 %v597
        %599 = vperm.xlu0 %598, %v510
        %v600 = vpop.permute.xlu0 %599
        %v601 = vlaneseq
        %v602 = vshrl.u32 %v601, 7
        %v603 = vadd.s32 %v602, 120
        %604 = vset.pattern.permute.xlu0 %v603
        %605 = vperm.xlu0 %604, %v510
        %v606 = vpop.permute.xlu0 %605
        %v607 = vperm.slane %v280, 3
        %v608 = vlaneseq
        %v609 = vshrl.u32 %v608, 7
        %611 = vset.pattern.permute.xlu0 %v609
        %612 = vperm.xlu0 %611, %v607
        %v613 = vpop.permute.xlu0 %612
        %v614 = vlaneseq
        %v615 = vshrl.u32 %v614, 7
        %v616 = vadd.s32 %v615, 8
        %617 = vset.pattern.permute.xlu0 %v616
        %618 = vperm.xlu0 %617, %v607
        %v619 = vpop.permute.xlu0 %618
        %v620 = vlaneseq
        %v621 = vshrl.u32 %v620, 7
        %v622 = vadd.s32 %v621, 16
        %623 = vset.pattern.permute.xlu0 %v622
        %624 = vperm.xlu0 %623, %v607
        %v625 = vpop.permute.xlu0 %624
        %v626 = vlaneseq
        %v627 = vshrl.u32 %v626, 7
        %v628 = vadd.s32 %v627, 24
        %629 = vset.pattern.permute.xlu0 %v628
        %630 = vperm.xlu0 %629, %v607
        %v631 = vpop.permute.xlu0 %630
        %v632 = vlaneseq
        %v633 = vshrl.u32 %v632, 7
        %v634 = vadd.s32 %v633, 32
        %635 = vset.pattern.permute.xlu0 %v634
        %636 = vperm.xlu0 %635, %v607
        %v637 = vpop.permute.xlu0 %636
        %v638 = vlaneseq
        %v639 = vshrl.u32 %v638, 7
        %v640 = vadd.s32 %v639, 40
        %641 = vset.pattern.permute.xlu0 %v640
        %642 = vperm.xlu0 %641, %v607
        %v643 = vpop.permute.xlu0 %642
        %v644 = vlaneseq
        %v645 = vshrl.u32 %v644, 7
        %v646 = vadd.s32 %v645, 48
        %647 = vset.pattern.permute.xlu0 %v646
        %648 = vperm.xlu0 %647, %v607
        %v649 = vpop.permute.xlu0 %648
        %v650 = vlaneseq
        %v651 = vshrl.u32 %v650, 7
        %v652 = vadd.s32 %v651, 56
        %653 = vset.pattern.permute.xlu0 %v652
        %654 = vperm.xlu0 %653, %v607
        %v655 = vpop.permute.xlu0 %654
        %v656 = vlaneseq
        %v657 = vshrl.u32 %v656, 7
        %v658 = vadd.s32 %v657, 64
        %659 = vset.pattern.permute.xlu0 %v658
        %660 = vperm.xlu0 %659, %v607
        %v661 = vpop.permute.xlu0 %660
        %v662 = vlaneseq
        %v663 = vshrl.u32 %v662, 7
        %v664 = vadd.s32 %v663, 72
        %665 = vset.pattern.permute.xlu0 %v664
        %666 = vperm.xlu0 %665, %v607
        %v667 = vpop.permute.xlu0 %666
        %v668 = vlaneseq
        %v669 = vshrl.u32 %v668, 7
        %v670 = vadd.s32 %v669, 80
        %671 = vset.pattern.permute.xlu0 %v670
        %672 = vperm.xlu0 %671, %v607
        %v673 = vpop.permute.xlu0 %672
        %v674 = vlaneseq
        %v675 = vshrl.u32 %v674, 7
        %v676 = vadd.s32 %v675, 88
        %677 = vset.pattern.permute.xlu0 %v676
        %678 = vperm.xlu0 %677, %v607
        %v679 = vpop.permute.xlu0 %678
        %v680 = vlaneseq
        %v681 = vshrl.u32 %v680, 7
        %v682 = vadd.s32 %v681, 96
        %683 = vset.pattern.permute.xlu0 %v682
        %684 = vperm.xlu0 %683, %v607
        %v685 = vpop.permute.xlu0 %684
        %v686 = vlaneseq
        %v687 = vshrl.u32 %v686, 7
        %v688 = vadd.s32 %v687, 104
        %689 = vset.pattern.permute.xlu0 %v688
        %690 = vperm.xlu0 %689, %v607
        %v691 = vpop.permute.xlu0 %690
        %v692 = vlaneseq
        %v693 = vshrl.u32 %v692, 7
        %v694 = vadd.s32 %v693, 112
        %695 = vset.pattern.permute.xlu0 %v694
        %696 = vperm.xlu0 %695, %v607
        %v697 = vpop.permute.xlu0 %696
        %v698 = vlaneseq
        %v699 = vshrl.u32 %v698, 7
        %v700 = vadd.s32 %v699, 120
        %701 = vset.pattern.permute.xlu0 %v700
        %702 = vperm.xlu0 %701, %v607
        %v703 = vpop.permute.xlu0 %702
        %v704 = vperm.slane %v280, 4
        %v705 = vlaneseq
        %v706 = vshrl.u32 %v705, 7
        %708 = vset.pattern.permute.xlu0 %v706
        %709 = vperm.xlu0 %708, %v704
        %v710 = vpop.permute.xlu0 %709
        %v711 = vlaneseq
        %v712 = vshrl.u32 %v711, 7
        %v713 = vadd.s32 %v712, 8
        %714 = vset.pattern.permute.xlu0 %v713
        %715 = vperm.xlu0 %714, %v704
        %v716 = vpop.permute.xlu0 %715
        %v717 = vlaneseq
        %v718 = vshrl.u32 %v717, 7
        %v719 = vadd.s32 %v718, 16
        %720 = vset.pattern.permute.xlu0 %v719
        %721 = vperm.xlu0 %720, %v704
        %v722 = vpop.permute.xlu0 %721
        %v723 = vlaneseq
        %v724 = vshrl.u32 %v723, 7
        %v725 = vadd.s32 %v724, 24
        %726 = vset.pattern.permute.xlu0 %v725
        %727 = vperm.xlu0 %726, %v704
        %v728 = vpop.permute.xlu0 %727
        %v729 = vlaneseq
        %v730 = vshrl.u32 %v729, 7
        %v731 = vadd.s32 %v730, 32
        %732 = vset.pattern.permute.xlu0 %v731
        %733 = vperm.xlu0 %732, %v704
        %v734 = vpop.permute.xlu0 %733
        %v735 = vlaneseq
        %v736 = vshrl.u32 %v735, 7
        %v737 = vadd.s32 %v736, 40
        %738 = vset.pattern.permute.xlu0 %v737
        %739 = vperm.xlu0 %738, %v704
        %v740 = vpop.permute.xlu0 %739
        %v741 = vlaneseq
        %v742 = vshrl.u32 %v741, 7
        %v743 = vadd.s32 %v742, 48
        %744 = vset.pattern.permute.xlu0 %v743
        %745 = vperm.xlu0 %744, %v704
        %v746 = vpop.permute.xlu0 %745
        %v747 = vlaneseq
        %v748 = vshrl.u32 %v747, 7
        %v749 = vadd.s32 %v748, 56
        %750 = vset.pattern.permute.xlu0 %v749
        %751 = vperm.xlu0 %750, %v704
        %v752 = vpop.permute.xlu0 %751
        %v753 = vlaneseq
        %v754 = vshrl.u32 %v753, 7
        %v755 = vadd.s32 %v754, 64
        %756 = vset.pattern.permute.xlu0 %v755
        %757 = vperm.xlu0 %756, %v704
        %v758 = vpop.permute.xlu0 %757
        %v759 = vlaneseq
        %v760 = vshrl.u32 %v759, 7
        %v761 = vadd.s32 %v760, 72
        %762 = vset.pattern.permute.xlu0 %v761
        %763 = vperm.xlu0 %762, %v704
        %v764 = vpop.permute.xlu0 %763
        %v765 = vlaneseq
        %v766 = vshrl.u32 %v765, 7
        %v767 = vadd.s32 %v766, 80
        %768 = vset.pattern.permute.xlu0 %v767
        %769 = vperm.xlu0 %768, %v704
        %v770 = vpop.permute.xlu0 %769
        %v771 = vlaneseq
        %v772 = vshrl.u32 %v771, 7
        %v773 = vadd.s32 %v772, 88
        %774 = vset.pattern.permute.xlu0 %v773
        %775 = vperm.xlu0 %774, %v704
        %v776 = vpop.permute.xlu0 %775
        %v777 = vlaneseq
        %v778 = vshrl.u32 %v777, 7
        %v779 = vadd.s32 %v778, 96
        %780 = vset.pattern.permute.xlu0 %v779
        %781 = vperm.xlu0 %780, %v704
        %v782 = vpop.permute.xlu0 %781
        %v783 = vlaneseq
        %v784 = vshrl.u32 %v783, 7
        %v785 = vadd.s32 %v784, 104
        %786 = vset.pattern.permute.xlu0 %v785
        %787 = vperm.xlu0 %786, %v704
        %v788 = vpop.permute.xlu0 %787
        %v789 = vlaneseq
        %v790 = vshrl.u32 %v789, 7
        %v791 = vadd.s32 %v790, 112
        %792 = vset.pattern.permute.xlu0 %v791
        %793 = vperm.xlu0 %792, %v704
        %v794 = vpop.permute.xlu0 %793
        %v795 = vlaneseq
        %v796 = vshrl.u32 %v795, 7
        %v797 = vadd.s32 %v796, 120
        %798 = vset.pattern.permute.xlu0 %v797
        %799 = vperm.xlu0 %798, %v704
        %v800 = vpop.permute.xlu0 %799
        %v801 = vperm.slane %v280, 5
        %v802 = vlaneseq
        %v803 = vshrl.u32 %v802, 7
        %805 = vset.pattern.permute.xlu0 %v803
        %806 = vperm.xlu0 %805, %v801
        %v807 = vpop.permute.xlu0 %806
        %v808 = vlaneseq
        %v809 = vshrl.u32 %v808, 7
        %v810 = vadd.s32 %v809, 8
        %811 = vset.pattern.permute.xlu0 %v810
        %812 = vperm.xlu0 %811, %v801
        %v813 = vpop.permute.xlu0 %812
        %v814 = vlaneseq
        %v815 = vshrl.u32 %v814, 7
        %v816 = vadd.s32 %v815, 16
        %817 = vset.pattern.permute.xlu0 %v816
        %818 = vperm.xlu0 %817, %v801
        %v819 = vpop.permute.xlu0 %818
        %v820 = vlaneseq
        %v821 = vshrl.u32 %v820, 7
        %v822 = vadd.s32 %v821, 24
        %823 = vset.pattern.permute.xlu0 %v822
        %824 = vperm.xlu0 %823, %v801
        %v825 = vpop.permute.xlu0 %824
        %v826 = vlaneseq
        %v827 = vshrl.u32 %v826, 7
        %v828 = vadd.s32 %v827, 32
        %829 = vset.pattern.permute.xlu0 %v828
        %830 = vperm.xlu0 %829, %v801
        %v831 = vpop.permute.xlu0 %830
        %v832 = vlaneseq
        %v833 = vshrl.u32 %v832, 7
        %v834 = vadd.s32 %v833, 40
        %835 = vset.pattern.permute.xlu0 %v834
        %836 = vperm.xlu0 %835, %v801
        %v837 = vpop.permute.xlu0 %836
        %v838 = vlaneseq
        %v839 = vshrl.u32 %v838, 7
        %v840 = vadd.s32 %v839, 48
        %841 = vset.pattern.permute.xlu0 %v840
        %842 = vperm.xlu0 %841, %v801
        %v843 = vpop.permute.xlu0 %842
        %v844 = vlaneseq
        %v845 = vshrl.u32 %v844, 7
        %v846 = vadd.s32 %v845, 56
        %847 = vset.pattern.permute.xlu0 %v846
        %848 = vperm.xlu0 %847, %v801
        %v849 = vpop.permute.xlu0 %848
        %v850 = vlaneseq
        %v851 = vshrl.u32 %v850, 7
        %v852 = vadd.s32 %v851, 64
        %853 = vset.pattern.permute.xlu0 %v852
        %854 = vperm.xlu0 %853, %v801
        %v855 = vpop.permute.xlu0 %854
        %v856 = vlaneseq
        %v857 = vshrl.u32 %v856, 7
        %v858 = vadd.s32 %v857, 72
        %859 = vset.pattern.permute.xlu0 %v858
        %860 = vperm.xlu0 %859, %v801
        %v861 = vpop.permute.xlu0 %860
        %v862 = vlaneseq
        %v863 = vshrl.u32 %v862, 7
        %v864 = vadd.s32 %v863, 80
        %865 = vset.pattern.permute.xlu0 %v864
        %866 = vperm.xlu0 %865, %v801
        %v867 = vpop.permute.xlu0 %866
        %v868 = vlaneseq
        %v869 = vshrl.u32 %v868, 7
        %v870 = vadd.s32 %v869, 88
        %871 = vset.pattern.permute.xlu0 %v870
        %872 = vperm.xlu0 %871, %v801
        %v873 = vpop.permute.xlu0 %872
        %v874 = vlaneseq
        %v875 = vshrl.u32 %v874, 7
        %v876 = vadd.s32 %v875, 96
        %877 = vset.pattern.permute.xlu0 %v876
        %878 = vperm.xlu0 %877, %v801
        %v879 = vpop.permute.xlu0 %878
        %v880 = vlaneseq
        %v881 = vshrl.u32 %v880, 7
        %v882 = vadd.s32 %v881, 104
        %883 = vset.pattern.permute.xlu0 %v882
        %884 = vperm.xlu0 %883, %v801
        %v885 = vpop.permute.xlu0 %884
        %v886 = vlaneseq
        %v887 = vshrl.u32 %v886, 7
        %v888 = vadd.s32 %v887, 112
        %889 = vset.pattern.permute.xlu0 %v888
        %890 = vperm.xlu0 %889, %v801
        %v891 = vpop.permute.xlu0 %890
        %v892 = vlaneseq
        %v893 = vshrl.u32 %v892, 7
        %v894 = vadd.s32 %v893, 120
        %895 = vset.pattern.permute.xlu0 %v894
        %896 = vperm.xlu0 %895, %v801
        %v897 = vpop.permute.xlu0 %896
        %v898 = vperm.slane %v280, 6
        %v899 = vlaneseq
        %v900 = vshrl.u32 %v899, 7
        %902 = vset.pattern.permute.xlu0 %v900
        %903 = vperm.xlu0 %902, %v898
        %v904 = vpop.permute.xlu0 %903
        %v905 = vlaneseq
        %v906 = vshrl.u32 %v905, 7
        %v907 = vadd.s32 %v906, 8
        %908 = vset.pattern.permute.xlu0 %v907
        %909 = vperm.xlu0 %908, %v898
        %v910 = vpop.permute.xlu0 %909
        %v911 = vlaneseq
        %v912 = vshrl.u32 %v911, 7
        %v913 = vadd.s32 %v912, 16
        %914 = vset.pattern.permute.xlu0 %v913
        %915 = vperm.xlu0 %914, %v898
        %v916 = vpop.permute.xlu0 %915
        %v917 = vlaneseq
        %v918 = vshrl.u32 %v917, 7
        %v919 = vadd.s32 %v918, 24
        %920 = vset.pattern.permute.xlu0 %v919
        %921 = vperm.xlu0 %920, %v898
        %v922 = vpop.permute.xlu0 %921
        %v923 = vlaneseq
        %v924 = vshrl.u32 %v923, 7
        %v925 = vadd.s32 %v924, 32
        %926 = vset.pattern.permute.xlu0 %v925
        %927 = vperm.xlu0 %926, %v898
        %v928 = vpop.permute.xlu0 %927
        %v929 = vlaneseq
        %v930 = vshrl.u32 %v929, 7
        %v931 = vadd.s32 %v930, 40
        %932 = vset.pattern.permute.xlu0 %v931
        %933 = vperm.xlu0 %932, %v898
        %v934 = vpop.permute.xlu0 %933
        %v935 = vlaneseq
        %v936 = vshrl.u32 %v935, 7
        %v937 = vadd.s32 %v936, 48
        %938 = vset.pattern.permute.xlu0 %v937
        %939 = vperm.xlu0 %938, %v898
        %v940 = vpop.permute.xlu0 %939
        %v941 = vlaneseq
        %v942 = vshrl.u32 %v941, 7
        %v943 = vadd.s32 %v942, 56
        %944 = vset.pattern.permute.xlu0 %v943
        %945 = vperm.xlu0 %944, %v898
        %v946 = vpop.permute.xlu0 %945
        %v947 = vlaneseq
        %v948 = vshrl.u32 %v947, 7
        %v949 = vadd.s32 %v948, 64
        %950 = vset.pattern.permute.xlu0 %v949
        %951 = vperm.xlu0 %950, %v898
        %v952 = vpop.permute.xlu0 %951
        %v953 = vlaneseq
        %v954 = vshrl.u32 %v953, 7
        %v955 = vadd.s32 %v954, 72
        %956 = vset.pattern.permute.xlu0 %v955
        %957 = vperm.xlu0 %956, %v898
        %v958 = vpop.permute.xlu0 %957
        %v959 = vlaneseq
        %v960 = vshrl.u32 %v959, 7
        %v961 = vadd.s32 %v960, 80
        %962 = vset.pattern.permute.xlu0 %v961
        %963 = vperm.xlu0 %962, %v898
        %v964 = vpop.permute.xlu0 %963
        %v965 = vlaneseq
        %v966 = vshrl.u32 %v965, 7
        %v967 = vadd.s32 %v966, 88
        %968 = vset.pattern.permute.xlu0 %v967
        %969 = vperm.xlu0 %968, %v898
        %v970 = vpop.permute.xlu0 %969
        %v971 = vlaneseq
        %v972 = vshrl.u32 %v971, 7
        %v973 = vadd.s32 %v972, 96
        %974 = vset.pattern.permute.xlu0 %v973
        %975 = vperm.xlu0 %974, %v898
        %v976 = vpop.permute.xlu0 %975
        %v977 = vlaneseq
        %v978 = vshrl.u32 %v977, 7
        %v979 = vadd.s32 %v978, 104
        %980 = vset.pattern.permute.xlu0 %v979
        %981 = vperm.xlu0 %980, %v898
        %v982 = vpop.permute.xlu0 %981
        %v983 = vlaneseq
        %v984 = vshrl.u32 %v983, 7
        %v985 = vadd.s32 %v984, 112
        %986 = vset.pattern.permute.xlu0 %v985
        %987 = vperm.xlu0 %986, %v898
        %v988 = vpop.permute.xlu0 %987
        %v989 = vlaneseq
        %v990 = vshrl.u32 %v989, 7
        %v991 = vadd.s32 %v990, 120
        %992 = vset.pattern.permute.xlu0 %v991
        %993 = vperm.xlu0 %992, %v898
        %v994 = vpop.permute.xlu0 %993
        %v995 = vperm.slane %v280, 7
        %v996 = vlaneseq
        %v997 = vshrl.u32 %v996, 7
        %999 = vset.pattern.permute.xlu0 %v997
        %1000 = vperm.xlu0 %999, %v995
        %v1001 = vpop.permute.xlu0 %1000
        %v1002 = vlaneseq
        %v1003 = vshrl.u32 %v1002, 7
        %v1004 = vadd.s32 %v1003, 8
        %1005 = vset.pattern.permute.xlu0 %v1004
        %1006 = vperm.xlu0 %1005, %v995
        %v1007 = vpop.permute.xlu0 %1006
        %v1008 = vlaneseq
        %v1009 = vshrl.u32 %v1008, 7
        %v1010 = vadd.s32 %v1009, 16
        %1011 = vset.pattern.permute.xlu0 %v1010
        %1012 = vperm.xlu0 %1011, %v995
        %v1013 = vpop.permute.xlu0 %1012
        %v1014 = vlaneseq
        %v1015 = vshrl.u32 %v1014, 7
        %v1016 = vadd.s32 %v1015, 24
        %1017 = vset.pattern.permute.xlu0 %v1016
        %1018 = vperm.xlu0 %1017, %v995
        %v1019 = vpop.permute.xlu0 %1018
        %v1020 = vlaneseq
        %v1021 = vshrl.u32 %v1020, 7
        %v1022 = vadd.s32 %v1021, 32
        %1023 = vset.pattern.permute.xlu0 %v1022
        %1024 = vperm.xlu0 %1023, %v995
        %v1025 = vpop.permute.xlu0 %1024
        %v1026 = vlaneseq
        %v1027 = vshrl.u32 %v1026, 7
        %v1028 = vadd.s32 %v1027, 40
        %1029 = vset.pattern.permute.xlu0 %v1028
        %1030 = vperm.xlu0 %1029, %v995
        %v1031 = vpop.permute.xlu0 %1030
        %v1032 = vlaneseq
        %v1033 = vshrl.u32 %v1032, 7
        %v1034 = vadd.s32 %v1033, 48
        %1035 = vset.pattern.permute.xlu0 %v1034
        %1036 = vperm.xlu0 %1035, %v995
        %v1037 = vpop.permute.xlu0 %1036
        %v1038 = vlaneseq
        %v1039 = vshrl.u32 %v1038, 7
        %v1040 = vadd.s32 %v1039, 56
        %1041 = vset.pattern.permute.xlu0 %v1040
        %1042 = vperm.xlu0 %1041, %v995
        %v1043 = vpop.permute.xlu0 %1042
        %v1044 = vlaneseq
        %v1045 = vshrl.u32 %v1044, 7
        %v1046 = vadd.s32 %v1045, 64
        %1047 = vset.pattern.permute.xlu0 %v1046
        %1048 = vperm.xlu0 %1047, %v995
        %v1049 = vpop.permute.xlu0 %1048
        %v1050 = vlaneseq
        %v1051 = vshrl.u32 %v1050, 7
        %v1052 = vadd.s32 %v1051, 72
        %1053 = vset.pattern.permute.xlu0 %v1052
        %1054 = vperm.xlu0 %1053, %v995
        %v1055 = vpop.permute.xlu0 %1054
        %v1056 = vlaneseq
        %v1057 = vshrl.u32 %v1056, 7
        %v1058 = vadd.s32 %v1057, 80
        %1059 = vset.pattern.permute.xlu0 %v1058
        %1060 = vperm.xlu0 %1059, %v995
        %v1061 = vpop.permute.xlu0 %1060
        %v1062 = vlaneseq
        %v1063 = vshrl.u32 %v1062, 7
        %v1064 = vadd.s32 %v1063, 88
        %1065 = vset.pattern.permute.xlu0 %v1064
        %1066 = vperm.xlu0 %1065, %v995
        %v1067 = vpop.permute.xlu0 %1066
        %v1068 = vlaneseq
        %v1069 = vshrl.u32 %v1068, 7
        %v1070 = vadd.s32 %v1069, 96
        %1071 = vset.pattern.permute.xlu0 %v1070
        %1072 = vperm.xlu0 %1071, %v995
        %v1073 = vpop.permute.xlu0 %1072
        %v1074 = vlaneseq
        %v1075 = vshrl.u32 %v1074, 7
        %v1076 = vadd.s32 %v1075, 104
        %1077 = vset.pattern.permute.xlu0 %v1076
        %1078 = vperm.xlu0 %1077, %v995
        %v1079 = vpop.permute.xlu0 %1078
        %v1080 = vlaneseq
        %v1081 = vshrl.u32 %v1080, 7
        %v1082 = vadd.s32 %v1081, 112
        %1083 = vset.pattern.permute.xlu0 %v1082
        %1084 = vperm.xlu0 %1083, %v995
        %v1085 = vpop.permute.xlu0 %1084
        %v1086 = vlaneseq
        %v1087 = vshrl.u32 %v1086, 7
        %v1088 = vadd.s32 %v1087, 120
        %1089 = vset.pattern.permute.xlu0 %v1088
        %1090 = vperm.xlu0 %1089, %v995
        %v1091 = vpop.permute.xlu0 %1090
        %v1093 = vrot.slane %v280, 1
        %v1094 = vrot.slane %v280, 2
        %v1095 = vrot.slane %v280, 3
        %v1096 = vrot.slane %v280, 4
        %v1097 = vrot.slane %v280, 5
        %v1098 = vrot.slane %v280, 6
        %v1099 = vrot.slane %v280, 7
        %v1100 = vperm.slane %v280, 0
        %v1101 = vperm.slane %v1093, 0
        %v1102 = vperm.slane %v1094, 0
        %v1103 = vperm.slane %v1095, 0
        %v1104 = vperm.slane %v1096, 0
        %v1105 = vperm.slane %v1097, 0
        %v1106 = vperm.slane %v1098, 0
        %v1107 = vperm.slane %v1099, 0
        %vm1116 = vcmp.gt.f32.partialorder %v322, %v1100
        %vm1117 = vcmp.gt.f32.partialorder %v328, %v1100
        %vm1118 = vcmp.gt.f32.partialorder %v334, %v1100
        %vm1119 = vcmp.gt.f32.partialorder %v340, %v1100
        %vm1120 = vcmp.gt.f32.partialorder %v346, %v1100
        %vm1121 = vcmp.gt.f32.partialorder %v352, %v1100
        %vm1122 = vcmp.gt.f32.partialorder %v358, %v1100
        %vm1123 = vcmp.gt.f32.partialorder %v364, %v1100
        %vm1124 = vcmp.gt.f32.partialorder %v370, %v1100
        %vm1125 = vcmp.gt.f32.partialorder %v376, %v1100
        %vm1126 = vcmp.gt.f32.partialorder %v382, %v1100
        %vm1127 = vcmp.gt.f32.partialorder %v388, %v1100
        %vm1128 = vcmp.gt.f32.partialorder %v394, %v1100
        %vm1129 = vcmp.gt.f32.partialorder %v400, %v1100
        %vm1130 = vcmp.gt.f32.partialorder %v406, %v1100
        %vm1131 = vcmp.gt.f32.partialorder %v412, %v1100
        %vm1132 = vcmp.gt.f32.partialorder %v419, %v1101
        %vm1133 = vcmp.gt.f32.partialorder %v425, %v1101
        %vm1134 = vcmp.gt.f32.partialorder %v431, %v1101
        %vm1135 = vcmp.gt.f32.partialorder %v437, %v1101
        %vm1136 = vcmp.gt.f32.partialorder %v443, %v1101
        %vm1137 = vcmp.gt.f32.partialorder %v449, %v1101
        %vm1138 = vcmp.gt.f32.partialorder %v455, %v1101
        %vm1139 = vcmp.gt.f32.partialorder %v461, %v1101
        %vm1140 = vcmp.gt.f32.partialorder %v467, %v1101
        %vm1141 = vcmp.gt.f32.partialorder %v473, %v1101
        %vm1142 = vcmp.gt.f32.partialorder %v479, %v1101
        %vm1143 = vcmp.gt.f32.partialorder %v485, %v1101
        %vm1144 = vcmp.gt.f32.partialorder %v491, %v1101
        %vm1145 = vcmp.gt.f32.partialorder %v497, %v1101
        %vm1146 = vcmp.gt.f32.partialorder %v503, %v1101
        %vm1147 = vcmp.gt.f32.partialorder %v509, %v1101
        %vm1148 = vcmp.gt.f32.partialorder %v516, %v1102
        %vm1149 = vcmp.gt.f32.partialorder %v522, %v1102
        %vm1150 = vcmp.gt.f32.partialorder %v528, %v1102
        %vm1151 = vcmp.gt.f32.partialorder %v534, %v1102
        %vm1152 = vcmp.gt.f32.partialorder %v540, %v1102
        %vm1153 = vcmp.gt.f32.partialorder %v546, %v1102
        %vm1154 = vcmp.gt.f32.partialorder %v552, %v1102
        %vm1155 = vcmp.gt.f32.partialorder %v558, %v1102
        %vm1156 = vcmp.gt.f32.partialorder %v564, %v1102
        %vm1157 = vcmp.gt.f32.partialorder %v570, %v1102
        %vm1158 = vcmp.gt.f32.partialorder %v576, %v1102
        %vm1159 = vcmp.gt.f32.partialorder %v582, %v1102
        %vm1160 = vcmp.gt.f32.partialorder %v588, %v1102
        %vm1161 = vcmp.gt.f32.partialorder %v594, %v1102
        %vm1162 = vcmp.gt.f32.partialorder %v600, %v1102
        %vm1163 = vcmp.gt.f32.partialorder %v606, %v1102
        %vm1164 = vcmp.gt.f32.partialorder %v613, %v1103
        %vm1165 = vcmp.gt.f32.partialorder %v619, %v1103
        %vm1166 = vcmp.gt.f32.partialorder %v625, %v1103
        %vm1167 = vcmp.gt.f32.partialorder %v631, %v1103
        %vm1168 = vcmp.gt.f32.partialorder %v637, %v1103
        %vm1169 = vcmp.gt.f32.partialorder %v643, %v1103
        %vm1170 = vcmp.gt.f32.partialorder %v649, %v1103
        %vm1171 = vcmp.gt.f32.partialorder %v655, %v1103
        %vm1172 = vcmp.gt.f32.partialorder %v661, %v1103
        %vm1173 = vcmp.gt.f32.partialorder %v667, %v1103
        %vm1174 = vcmp.gt.f32.partialorder %v673, %v1103
        %vm1175 = vcmp.gt.f32.partialorder %v679, %v1103
        %vm1176 = vcmp.gt.f32.partialorder %v685, %v1103
        %vm1177 = vcmp.gt.f32.partialorder %v691, %v1103
        %vm1178 = vcmp.gt.f32.partialorder %v697, %v1103
        %vm1179 = vcmp.gt.f32.partialorder %v703, %v1103
        %vm1180 = vcmp.gt.f32.partialorder %v710, %v1104
        %vm1181 = vcmp.gt.f32.partialorder %v716, %v1104
        %vm1182 = vcmp.gt.f32.partialorder %v722, %v1104
        %vm1183 = vcmp.gt.f32.partialorder %v728, %v1104
        %vm1184 = vcmp.gt.f32.partialorder %v734, %v1104
        %vm1185 = vcmp.gt.f32.partialorder %v740, %v1104
        %vm1186 = vcmp.gt.f32.partialorder %v746, %v1104
        %vm1187 = vcmp.gt.f32.partialorder %v752, %v1104
        %vm1188 = vcmp.gt.f32.partialorder %v758, %v1104
        %vm1189 = vcmp.gt.f32.partialorder %v764, %v1104
        %vm1190 = vcmp.gt.f32.partialorder %v770, %v1104
        %vm1191 = vcmp.gt.f32.partialorder %v776, %v1104
        %vm1192 = vcmp.gt.f32.partialorder %v782, %v1104
        %vm1193 = vcmp.gt.f32.partialorder %v788, %v1104
        %vm1194 = vcmp.gt.f32.partialorder %v794, %v1104
        %vm1195 = vcmp.gt.f32.partialorder %v800, %v1104
        %vm1196 = vcmp.gt.f32.partialorder %v807, %v1105
        %vm1197 = vcmp.gt.f32.partialorder %v813, %v1105
        %vm1198 = vcmp.gt.f32.partialorder %v819, %v1105
        %vm1199 = vcmp.gt.f32.partialorder %v825, %v1105
        %vm1200 = vcmp.gt.f32.partialorder %v831, %v1105
        %vm1201 = vcmp.gt.f32.partialorder %v837, %v1105
        %vm1202 = vcmp.gt.f32.partialorder %v843, %v1105
        %vm1203 = vcmp.gt.f32.partialorder %v849, %v1105
        %vm1204 = vcmp.gt.f32.partialorder %v855, %v1105
        %vm1205 = vcmp.gt.f32.partialorder %v861, %v1105
        %vm1206 = vcmp.gt.f32.partialorder %v867, %v1105
        %vm1207 = vcmp.gt.f32.partialorder %v873, %v1105
        %vm1208 = vcmp.gt.f32.partialorder %v879, %v1105
        %vm1209 = vcmp.gt.f32.partialorder %v885, %v1105
        %vm1210 = vcmp.gt.f32.partialorder %v891, %v1105
        %vm1211 = vcmp.gt.f32.partialorder %v897, %v1105
        %vm1212 = vcmp.gt.f32.partialorder %v904, %v1106
        %vm1213 = vcmp.gt.f32.partialorder %v910, %v1106
        %vm1214 = vcmp.gt.f32.partialorder %v916, %v1106
        %vm1215 = vcmp.gt.f32.partialorder %v922, %v1106
        %vm1216 = vcmp.gt.f32.partialorder %v928, %v1106
        %vm1217 = vcmp.gt.f32.partialorder %v934, %v1106
        %vm1218 = vcmp.gt.f32.partialorder %v940, %v1106
        %vm1219 = vcmp.gt.f32.partialorder %v946, %v1106
        %vm1220 = vcmp.gt.f32.partialorder %v952, %v1106
        %vm1221 = vcmp.gt.f32.partialorder %v958, %v1106
        %vm1222 = vcmp.gt.f32.partialorder %v964, %v1106
        %vm1223 = vcmp.gt.f32.partialorder %v970, %v1106
        %vm1224 = vcmp.gt.f32.partialorder %v976, %v1106
        %vm1225 = vcmp.gt.f32.partialorder %v982, %v1106
        %vm1226 = vcmp.gt.f32.partialorder %v988, %v1106
        %vm1227 = vcmp.gt.f32.partialorder %v994, %v1106
        %vm1228 = vcmp.gt.f32.partialorder %v1001, %v1107
        %vm1229 = vcmp.gt.f32.partialorder %v1007, %v1107
        %vm1230 = vcmp.gt.f32.partialorder %v1013, %v1107
        %vm1231 = vcmp.gt.f32.partialorder %v1019, %v1107
        %vm1232 = vcmp.gt.f32.partialorder %v1025, %v1107
        %vm1233 = vcmp.gt.f32.partialorder %v1031, %v1107
        %vm1234 = vcmp.gt.f32.partialorder %v1037, %v1107
        %vm1235 = vcmp.gt.f32.partialorder %v1043, %v1107
        %vm1236 = vcmp.gt.f32.partialorder %v1049, %v1107
        %vm1237 = vcmp.gt.f32.partialorder %v1055, %v1107
        %vm1238 = vcmp.gt.f32.partialorder %v1061, %v1107
        %vm1239 = vcmp.gt.f32.partialorder %v1067, %v1107
        %vm1240 = vcmp.gt.f32.partialorder %v1073, %v1107
        %vm1241 = vcmp.gt.f32.partialorder %v1079, %v1107
        %vm1242 = vcmp.gt.f32.partialorder %v1085, %v1107
        %vm1243 = vcmp.gt.f32.partialorder %v1091, %v1107
        %vm1244 = vcmp.eq.f32.partialorder %v322, %v1100
        %vm1245 = vcmp.eq.f32.partialorder %v328, %v1100
        %vm1246 = vcmp.eq.f32.partialorder %v334, %v1100
        %vm1247 = vcmp.eq.f32.partialorder %v340, %v1100
        %vm1248 = vcmp.eq.f32.partialorder %v346, %v1100
        %vm1249 = vcmp.eq.f32.partialorder %v352, %v1100
        %vm1250 = vcmp.eq.f32.partialorder %v358, %v1100
        %vm1251 = vcmp.eq.f32.partialorder %v364, %v1100
        %vm1252 = vcmp.eq.f32.partialorder %v370, %v1100
        %vm1253 = vcmp.eq.f32.partialorder %v376, %v1100
        %vm1254 = vcmp.eq.f32.partialorder %v382, %v1100
        %vm1255 = vcmp.eq.f32.partialorder %v388, %v1100
        %vm1256 = vcmp.eq.f32.partialorder %v394, %v1100
        %vm1257 = vcmp.eq.f32.partialorder %v400, %v1100
        %vm1258 = vcmp.eq.f32.partialorder %v406, %v1100
        %vm1259 = vcmp.eq.f32.partialorder %v412, %v1100
        %vm1260 = vcmp.eq.f32.partialorder %v419, %v1101
        %vm1261 = vcmp.eq.f32.partialorder %v425, %v1101
        %vm1262 = vcmp.eq.f32.partialorder %v431, %v1101
        %vm1263 = vcmp.eq.f32.partialorder %v437, %v1101
        %vm1264 = vcmp.eq.f32.partialorder %v443, %v1101
        %vm1265 = vcmp.eq.f32.partialorder %v449, %v1101
        %vm1266 = vcmp.eq.f32.partialorder %v455, %v1101
        %vm1267 = vcmp.eq.f32.partialorder %v461, %v1101
        %vm1268 = vcmp.eq.f32.partialorder %v467, %v1101
        %vm1269 = vcmp.eq.f32.partialorder %v473, %v1101
        %vm1270 = vcmp.eq.f32.partialorder %v479, %v1101
        %vm1271 = vcmp.eq.f32.partialorder %v485, %v1101
        %vm1272 = vcmp.eq.f32.partialorder %v491, %v1101
        %vm1273 = vcmp.eq.f32.partialorder %v497, %v1101
        %vm1274 = vcmp.eq.f32.partialorder %v503, %v1101
        %vm1275 = vcmp.eq.f32.partialorder %v509, %v1101
        %vm1276 = vcmp.eq.f32.partialorder %v516, %v1102
        %vm1277 = vcmp.eq.f32.partialorder %v522, %v1102
        %vm1278 = vcmp.eq.f32.partialorder %v528, %v1102
        %vm1279 = vcmp.eq.f32.partialorder %v534, %v1102
        %vm1280 = vcmp.eq.f32.partialorder %v540, %v1102
        %vm1281 = vcmp.eq.f32.partialorder %v546, %v1102
        %vm1282 = vcmp.eq.f32.partialorder %v552, %v1102
        %vm1283 = vcmp.eq.f32.partialorder %v558, %v1102
        %vm1284 = vcmp.eq.f32.partialorder %v564, %v1102
        %vm1285 = vcmp.eq.f32.partialorder %v570, %v1102
        %vm1286 = vcmp.eq.f32.partialorder %v576, %v1102
        %vm1287 = vcmp.eq.f32.partialorder %v582, %v1102
        %vm1288 = vcmp.eq.f32.partialorder %v588, %v1102
        %vm1289 = vcmp.eq.f32.partialorder %v594, %v1102
        %vm1290 = vcmp.eq.f32.partialorder %v600, %v1102
        %vm1291 = vcmp.eq.f32.partialorder %v606, %v1102
        %vm1292 = vcmp.eq.f32.partialorder %v613, %v1103
        %vm1293 = vcmp.eq.f32.partialorder %v619, %v1103
        %vm1294 = vcmp.eq.f32.partialorder %v625, %v1103
        %vm1295 = vcmp.eq.f32.partialorder %v631, %v1103
        %vm1296 = vcmp.eq.f32.partialorder %v637, %v1103
        %vm1297 = vcmp.eq.f32.partialorder %v643, %v1103
        %vm1298 = vcmp.eq.f32.partialorder %v649, %v1103
        %vm1299 = vcmp.eq.f32.partialorder %v655, %v1103
        %vm1300 = vcmp.eq.f32.partialorder %v661, %v1103
        %vm1301 = vcmp.eq.f32.partialorder %v667, %v1103
        %vm1302 = vcmp.eq.f32.partialorder %v673, %v1103
        %vm1303 = vcmp.eq.f32.partialorder %v679, %v1103
        %vm1304 = vcmp.eq.f32.partialorder %v685, %v1103
        %vm1305 = vcmp.eq.f32.partialorder %v691, %v1103
        %vm1306 = vcmp.eq.f32.partialorder %v697, %v1103
        %vm1307 = vcmp.eq.f32.partialorder %v703, %v1103
        %vm1308 = vcmp.eq.f32.partialorder %v710, %v1104
        %vm1309 = vcmp.eq.f32.partialorder %v716, %v1104
        %vm1310 = vcmp.eq.f32.partialorder %v722, %v1104
        %vm1311 = vcmp.eq.f32.partialorder %v728, %v1104
        %vm1312 = vcmp.eq.f32.partialorder %v734, %v1104
        %vm1313 = vcmp.eq.f32.partialorder %v740, %v1104
        %vm1314 = vcmp.eq.f32.partialorder %v746, %v1104
        %vm1315 = vcmp.eq.f32.partialorder %v752, %v1104
        %vm1316 = vcmp.eq.f32.partialorder %v758, %v1104
        %vm1317 = vcmp.eq.f32.partialorder %v764, %v1104
        %vm1318 = vcmp.eq.f32.partialorder %v770, %v1104
        %vm1319 = vcmp.eq.f32.partialorder %v776, %v1104
        %vm1320 = vcmp.eq.f32.partialorder %v782, %v1104
        %vm1321 = vcmp.eq.f32.partialorder %v788, %v1104
        %vm1322 = vcmp.eq.f32.partialorder %v794, %v1104
        %vm1323 = vcmp.eq.f32.partialorder %v800, %v1104
        %vm1324 = vcmp.eq.f32.partialorder %v807, %v1105
        %vm1325 = vcmp.eq.f32.partialorder %v813, %v1105
        %vm1326 = vcmp.eq.f32.partialorder %v819, %v1105
        %vm1327 = vcmp.eq.f32.partialorder %v825, %v1105
        %vm1328 = vcmp.eq.f32.partialorder %v831, %v1105
        %vm1329 = vcmp.eq.f32.partialorder %v837, %v1105
        %vm1330 = vcmp.eq.f32.partialorder %v843, %v1105
        %vm1331 = vcmp.eq.f32.partialorder %v849, %v1105
        %vm1332 = vcmp.eq.f32.partialorder %v855, %v1105
        %vm1333 = vcmp.eq.f32.partialorder %v861, %v1105
        %vm1334 = vcmp.eq.f32.partialorder %v867, %v1105
        %vm1335 = vcmp.eq.f32.partialorder %v873, %v1105
        %vm1336 = vcmp.eq.f32.partialorder %v879, %v1105
        %vm1337 = vcmp.eq.f32.partialorder %v885, %v1105
        %vm1338 = vcmp.eq.f32.partialorder %v891, %v1105
        %vm1339 = vcmp.eq.f32.partialorder %v897, %v1105
        %vm1340 = vcmp.eq.f32.partialorder %v904, %v1106
        %vm1341 = vcmp.eq.f32.partialorder %v910, %v1106
        %vm1342 = vcmp.eq.f32.partialorder %v916, %v1106
        %vm1343 = vcmp.eq.f32.partialorder %v922, %v1106
        %vm1344 = vcmp.eq.f32.partialorder %v928, %v1106
        %vm1345 = vcmp.eq.f32.partialorder %v934, %v1106
        %vm1346 = vcmp.eq.f32.partialorder %v940, %v1106
        %vm1347 = vcmp.eq.f32.partialorder %v946, %v1106
        %vm1348 = vcmp.eq.f32.partialorder %v952, %v1106
        %vm1349 = vcmp.eq.f32.partialorder %v958, %v1106
        %vm1350 = vcmp.eq.f32.partialorder %v964, %v1106
        %vm1351 = vcmp.eq.f32.partialorder %v970, %v1106
        %vm1352 = vcmp.eq.f32.partialorder %v976, %v1106
        %vm1353 = vcmp.eq.f32.partialorder %v982, %v1106
        %vm1354 = vcmp.eq.f32.partialorder %v988, %v1106
        %vm1355 = vcmp.eq.f32.partialorder %v994, %v1106
        %vm1356 = vcmp.eq.f32.partialorder %v1001, %v1107
        %vm1357 = vcmp.eq.f32.partialorder %v1007, %v1107
        %vm1358 = vcmp.eq.f32.partialorder %v1013, %v1107
        %vm1359 = vcmp.eq.f32.partialorder %v1019, %v1107
        %vm1360 = vcmp.eq.f32.partialorder %v1025, %v1107
        %vm1361 = vcmp.eq.f32.partialorder %v1031, %v1107
        %vm1362 = vcmp.eq.f32.partialorder %v1037, %v1107
        %vm1363 = vcmp.eq.f32.partialorder %v1043, %v1107
        %vm1364 = vcmp.eq.f32.partialorder %v1049, %v1107
        %vm1365 = vcmp.eq.f32.partialorder %v1055, %v1107
        %vm1366 = vcmp.eq.f32.partialorder %v1061, %v1107
        %vm1367 = vcmp.eq.f32.partialorder %v1067, %v1107
        %vm1368 = vcmp.eq.f32.partialorder %v1073, %v1107
        %vm1369 = vcmp.eq.f32.partialorder %v1079, %v1107
        %vm1370 = vcmp.eq.f32.partialorder %v1085, %v1107
        %vm1371 = vcmp.eq.f32.partialorder %v1091, %v1107
        %v1372 = vsel %vm300, 1, 0
        %v1373 = vsel %vm301, 1, 0
        %v1374 = vsel %vm302, 1, 0
        %v1375 = vsel %vm303, 1, 0
        %v1376 = vsel %vm304, 1, 0
        %v1377 = vsel %vm305, 1, 0
        %v1378 = vsel %vm306, 1, 0
        %v1379 = vsel %vm307, 1, 0
        %v1380 = vsel %vm308, 1, 0
        %v1381 = vsel %vm309, 1, 0
        %v1382 = vsel %vm310, 1, 0
        %v1383 = vsel %vm311, 1, 0
        %v1384 = vsel %vm312, 1, 0
        %v1385 = vsel %vm313, 1, 0
        %v1386 = vsel %vm314, 1, 0
        %v1387 = vsel %vm315, 1, 0
        %vm1388 = vcmp.eq.s32.totalorder %v1372, 1
        %vm1389 = vcmp.eq.s32.totalorder %v1373, 1
        %vm1390 = vcmp.eq.s32.totalorder %v1374, 1
        %vm1391 = vcmp.eq.s32.totalorder %v1375, 1
        %vm1392 = vcmp.eq.s32.totalorder %v1376, 1
        %vm1393 = vcmp.eq.s32.totalorder %v1377, 1
        %vm1394 = vcmp.eq.s32.totalorder %v1378, 1
        %vm1395 = vcmp.eq.s32.totalorder %v1379, 1
        %vm1396 = vcmp.eq.s32.totalorder %v1380, 1
        %vm1397 = vcmp.eq.s32.totalorder %v1381, 1
        %vm1398 = vcmp.eq.s32.totalorder %v1382, 1
        %vm1399 = vcmp.eq.s32.totalorder %v1383, 1
        %vm1400 = vcmp.eq.s32.totalorder %v1384, 1
        %vm1401 = vcmp.eq.s32.totalorder %v1385, 1
        %vm1402 = vcmp.eq.s32.totalorder %v1386, 1
        %vm1403 = vcmp.eq.s32.totalorder %v1387, 1
        %vm1404 = vmand %vm1244, %vm1388
        %vm1405 = vmand %vm1245, %vm1389
        %vm1406 = vmand %vm1246, %vm1390
        %vm1407 = vmand %vm1247, %vm1391
        %vm1408 = vmand %vm1248, %vm1392
        %vm1409 = vmand %vm1249, %vm1393
        %vm1410 = vmand %vm1250, %vm1394
        %vm1411 = vmand %vm1251, %vm1395
        %vm1412 = vmand %vm1252, %vm1396
        %vm1413 = vmand %vm1253, %vm1397
        %vm1414 = vmand %vm1254, %vm1398
        %vm1415 = vmand %vm1255, %vm1399
        %vm1416 = vmand %vm1256, %vm1400
        %vm1417 = vmand %vm1257, %vm1401
        %vm1418 = vmand %vm1258, %vm1402
        %vm1419 = vmand %vm1259, %vm1403
        %vm1420 = vmand %vm1260, %vm1388
        %vm1421 = vmand %vm1261, %vm1389
        %vm1422 = vmand %vm1262, %vm1390
        %vm1423 = vmand %vm1263, %vm1391
        %vm1424 = vmand %vm1264, %vm1392
        %vm1425 = vmand %vm1265, %vm1393
        %vm1426 = vmand %vm1266, %vm1394
        %vm1427 = vmand %vm1267, %vm1395
        %vm1428 = vmand %vm1268, %vm1396
        %vm1429 = vmand %vm1269, %vm1397
        %vm1430 = vmand %vm1270, %vm1398
        %vm1431 = vmand %vm1271, %vm1399
        %vm1432 = vmand %vm1272, %vm1400
        %vm1433 = vmand %vm1273, %vm1401
        %vm1434 = vmand %vm1274, %vm1402
        %vm1435 = vmand %vm1275, %vm1403
        %vm1436 = vmand %vm1276, %vm1388
        %vm1437 = vmand %vm1277, %vm1389
        %vm1438 = vmand %vm1278, %vm1390
        %vm1439 = vmand %vm1279, %vm1391
        %vm1440 = vmand %vm1280, %vm1392
        %vm1441 = vmand %vm1281, %vm1393
        %vm1442 = vmand %vm1282, %vm1394
        %vm1443 = vmand %vm1283, %vm1395
        %vm1444 = vmand %vm1284, %vm1396
        %vm1445 = vmand %vm1285, %vm1397
        %vm1446 = vmand %vm1286, %vm1398
        %vm1447 = vmand %vm1287, %vm1399
        %vm1448 = vmand %vm1288, %vm1400
        %vm1449 = vmand %vm1289, %vm1401
        %vm1450 = vmand %vm1290, %vm1402
        %vm1451 = vmand %vm1291, %vm1403
        %vm1452 = vmand %vm1292, %vm1388
        %vm1453 = vmand %vm1293, %vm1389
        %vm1454 = vmand %vm1294, %vm1390
        %vm1455 = vmand %vm1295, %vm1391
        %vm1456 = vmand %vm1296, %vm1392
        %vm1457 = vmand %vm1297, %vm1393
        %vm1458 = vmand %vm1298, %vm1394
        %vm1459 = vmand %vm1299, %vm1395
        %vm1460 = vmand %vm1300, %vm1396
        %vm1461 = vmand %vm1301, %vm1397
        %vm1462 = vmand %vm1302, %vm1398
        %vm1463 = vmand %vm1303, %vm1399
        %vm1464 = vmand %vm1304, %vm1400
        %vm1465 = vmand %vm1305, %vm1401
        %vm1466 = vmand %vm1306, %vm1402
        %vm1467 = vmand %vm1307, %vm1403
        %vm1468 = vmand %vm1308, %vm1388
        %vm1469 = vmand %vm1309, %vm1389
        %vm1470 = vmand %vm1310, %vm1390
        %vm1471 = vmand %vm1311, %vm1391
        %vm1472 = vmand %vm1312, %vm1392
        %vm1473 = vmand %vm1313, %vm1393
        %vm1474 = vmand %vm1314, %vm1394
        %vm1475 = vmand %vm1315, %vm1395
        %vm1476 = vmand %vm1316, %vm1396
        %vm1477 = vmand %vm1317, %vm1397
        %vm1478 = vmand %vm1318, %vm1398
        %vm1479 = vmand %vm1319, %vm1399
        %vm1480 = vmand %vm1320, %vm1400
        %vm1481 = vmand %vm1321, %vm1401
        %vm1482 = vmand %vm1322, %vm1402
        %vm1483 = vmand %vm1323, %vm1403
        %vm1484 = vmand %vm1324, %vm1388
        %vm1485 = vmand %vm1325, %vm1389
        %vm1486 = vmand %vm1326, %vm1390
        %vm1487 = vmand %vm1327, %vm1391
        %vm1488 = vmand %vm1328, %vm1392
        %vm1489 = vmand %vm1329, %vm1393
        %vm1490 = vmand %vm1330, %vm1394
        %vm1491 = vmand %vm1331, %vm1395
        %vm1492 = vmand %vm1332, %vm1396
        %vm1493 = vmand %vm1333, %vm1397
        %vm1494 = vmand %vm1334, %vm1398
        %vm1495 = vmand %vm1335, %vm1399
        %vm1496 = vmand %vm1336, %vm1400
        %vm1497 = vmand %vm1337, %vm1401
        %vm1498 = vmand %vm1338, %vm1402
        %vm1499 = vmand %vm1339, %vm1403
        %vm1500 = vmand %vm1340, %vm1388
        %vm1501 = vmand %vm1341, %vm1389
        %vm1502 = vmand %vm1342, %vm1390
        %vm1503 = vmand %vm1343, %vm1391
        %vm1504 = vmand %vm1344, %vm1392
        %vm1505 = vmand %vm1345, %vm1393
        %vm1506 = vmand %vm1346, %vm1394
        %vm1507 = vmand %vm1347, %vm1395
        %vm1508 = vmand %vm1348, %vm1396
        %vm1509 = vmand %vm1349, %vm1397
        %vm1510 = vmand %vm1350, %vm1398
        %vm1511 = vmand %vm1351, %vm1399
        %vm1512 = vmand %vm1352, %vm1400
        %vm1513 = vmand %vm1353, %vm1401
        %vm1514 = vmand %vm1354, %vm1402
        %vm1515 = vmand %vm1355, %vm1403
        %vm1516 = vmand %vm1356, %vm1388
        %vm1517 = vmand %vm1357, %vm1389
        %vm1518 = vmand %vm1358, %vm1390
        %vm1519 = vmand %vm1359, %vm1391
        %vm1520 = vmand %vm1360, %vm1392
        %vm1521 = vmand %vm1361, %vm1393
        %vm1522 = vmand %vm1362, %vm1394
        %vm1523 = vmand %vm1363, %vm1395
        %vm1524 = vmand %vm1364, %vm1396
        %vm1525 = vmand %vm1365, %vm1397
        %vm1526 = vmand %vm1366, %vm1398
        %vm1527 = vmand %vm1367, %vm1399
        %vm1528 = vmand %vm1368, %vm1400
        %vm1529 = vmand %vm1369, %vm1401
        %vm1530 = vmand %vm1370, %vm1402
        %vm1531 = vmand %vm1371, %vm1403
        %vm1532 = vmor %vm1116, %vm1404
        %vm1533 = vmor %vm1117, %vm1405
        %vm1534 = vmor %vm1118, %vm1406
        %vm1535 = vmor %vm1119, %vm1407
        %vm1536 = vmor %vm1120, %vm1408
        %vm1537 = vmor %vm1121, %vm1409
        %vm1538 = vmor %vm1122, %vm1410
        %vm1539 = vmor %vm1123, %vm1411
        %vm1540 = vmor %vm1124, %vm1412
        %vm1541 = vmor %vm1125, %vm1413
        %vm1542 = vmor %vm1126, %vm1414
        %vm1543 = vmor %vm1127, %vm1415
        %vm1544 = vmor %vm1128, %vm1416
        %vm1545 = vmor %vm1129, %vm1417
        %vm1546 = vmor %vm1130, %vm1418
        %vm1547 = vmor %vm1131, %vm1419
        %vm1548 = vmor %vm1132, %vm1420
        %vm1549 = vmor %vm1133, %vm1421
        %vm1550 = vmor %vm1134, %vm1422
        %vm1551 = vmor %vm1135, %vm1423
        %vm1552 = vmor %vm1136, %vm1424
        %vm1553 = vmor %vm1137, %vm1425
        %vm1554 = vmor %vm1138, %vm1426
        %vm1555 = vmor %vm1139, %vm1427
        %vm1556 = vmor %vm1140, %vm1428
        %vm1557 = vmor %vm1141, %vm1429
        %vm1558 = vmor %vm1142, %vm1430
        %vm1559 = vmor %vm1143, %vm1431
        %vm1560 = vmor %vm1144, %vm1432
        %vm1561 = vmor %vm1145, %vm1433
        %vm1562 = vmor %vm1146, %vm1434
        %vm1563 = vmor %vm1147, %vm1435
        %vm1564 = vmor %vm1148, %vm1436
        %vm1565 = vmor %vm1149, %vm1437
        %vm1566 = vmor %vm1150, %vm1438
        %vm1567 = vmor %vm1151, %vm1439
        %vm1568 = vmor %vm1152, %vm1440
        %vm1569 = vmor %vm1153, %vm1441
        %vm1570 = vmor %vm1154, %vm1442
        %vm1571 = vmor %vm1155, %vm1443
        %vm1572 = vmor %vm1156, %vm1444
        %vm1573 = vmor %vm1157, %vm1445
        %vm1574 = vmor %vm1158, %vm1446
        %vm1575 = vmor %vm1159, %vm1447
        %vm1576 = vmor %vm1160, %vm1448
        %vm1577 = vmor %vm1161, %vm1449
        %vm1578 = vmor %vm1162, %vm1450
        %vm1579 = vmor %vm1163, %vm1451
        %vm1580 = vmor %vm1164, %vm1452
        %vm1581 = vmor %vm1165, %vm1453
        %vm1582 = vmor %vm1166, %vm1454
        %vm1583 = vmor %vm1167, %vm1455
        %vm1584 = vmor %vm1168, %vm1456
        %vm1585 = vmor %vm1169, %vm1457
        %vm1586 = vmor %vm1170, %vm1458
        %vm1587 = vmor %vm1171, %vm1459
        %vm1588 = vmor %vm1172, %vm1460
        %vm1589 = vmor %vm1173, %vm1461
        %vm1590 = vmor %vm1174, %vm1462
        %vm1591 = vmor %vm1175, %vm1463
        %vm1592 = vmor %vm1176, %vm1464
        %vm1593 = vmor %vm1177, %vm1465
        %vm1594 = vmor %vm1178, %vm1466
        %vm1595 = vmor %vm1179, %vm1467
        %vm1596 = vmor %vm1180, %vm1468
        %vm1597 = vmor %vm1181, %vm1469
        %vm1598 = vmor %vm1182, %vm1470
        %vm1599 = vmor %vm1183, %vm1471
        %vm1600 = vmor %vm1184, %vm1472
        %vm1601 = vmor %vm1185, %vm1473
        %vm1602 = vmor %vm1186, %vm1474
        %vm1603 = vmor %vm1187, %vm1475
        %vm1604 = vmor %vm1188, %vm1476
        %vm1605 = vmor %vm1189, %vm1477
        %vm1606 = vmor %vm1190, %vm1478
        %vm1607 = vmor %vm1191, %vm1479
        %vm1608 = vmor %vm1192, %vm1480
        %vm1609 = vmor %vm1193, %vm1481
        %vm1610 = vmor %vm1194, %vm1482
        %vm1611 = vmor %vm1195, %vm1483
        %vm1612 = vmor %vm1196, %vm1484
        %vm1613 = vmor %vm1197, %vm1485
        %vm1614 = vmor %vm1198, %vm1486
        %vm1615 = vmor %vm1199, %vm1487
        %vm1616 = vmor %vm1200, %vm1488
        %vm1617 = vmor %vm1201, %vm1489
        %vm1618 = vmor %vm1202, %vm1490
        %vm1619 = vmor %vm1203, %vm1491
        %vm1620 = vmor %vm1204, %vm1492
        %vm1621 = vmor %vm1205, %vm1493
        %vm1622 = vmor %vm1206, %vm1494
        %vm1623 = vmor %vm1207, %vm1495
        %vm1624 = vmor %vm1208, %vm1496
        %vm1625 = vmor %vm1209, %vm1497
        %vm1626 = vmor %vm1210, %vm1498
        %vm1627 = vmor %vm1211, %vm1499
        %vm1628 = vmor %vm1212, %vm1500
        %vm1629 = vmor %vm1213, %vm1501
        %vm1630 = vmor %vm1214, %vm1502
        %vm1631 = vmor %vm1215, %vm1503
        %vm1632 = vmor %vm1216, %vm1504
        %vm1633 = vmor %vm1217, %vm1505
        %vm1634 = vmor %vm1218, %vm1506
        %vm1635 = vmor %vm1219, %vm1507
        %vm1636 = vmor %vm1220, %vm1508
        %vm1637 = vmor %vm1221, %vm1509
        %vm1638 = vmor %vm1222, %vm1510
        %vm1639 = vmor %vm1223, %vm1511
        %vm1640 = vmor %vm1224, %vm1512
        %vm1641 = vmor %vm1225, %vm1513
        %vm1642 = vmor %vm1226, %vm1514
        %vm1643 = vmor %vm1227, %vm1515
        %vm1644 = vmor %vm1228, %vm1516
        %vm1645 = vmor %vm1229, %vm1517
        %vm1646 = vmor %vm1230, %vm1518
        %vm1647 = vmor %vm1231, %vm1519
        %vm1648 = vmor %vm1232, %vm1520
        %vm1649 = vmor %vm1233, %vm1521
        %vm1650 = vmor %vm1234, %vm1522
        %vm1651 = vmor %vm1235, %vm1523
        %vm1652 = vmor %vm1236, %vm1524
        %vm1653 = vmor %vm1237, %vm1525
        %vm1654 = vmor %vm1238, %vm1526
        %vm1655 = vmor %vm1239, %vm1527
        %vm1656 = vmor %vm1240, %vm1528
        %vm1657 = vmor %vm1241, %vm1529
        %vm1658 = vmor %vm1242, %vm1530
        %vm1659 = vmor %vm1243, %vm1531
        %v1660 = vsel %vm1532, 1, 0
        %v1661 = vsel %vm1533, 1, 0
        %v1662 = vsel %vm1534, 1, 0
        %v1663 = vsel %vm1535, 1, 0
        %v1664 = vsel %vm1536, 1, 0
        %v1665 = vsel %vm1537, 1, 0
        %v1666 = vsel %vm1538, 1, 0
        %v1667 = vsel %vm1539, 1, 0
        %v1668 = vsel %vm1540, 1, 0
        %v1669 = vsel %vm1541, 1, 0
        %v1670 = vsel %vm1542, 1, 0
        %v1671 = vsel %vm1543, 1, 0
        %v1672 = vsel %vm1544, 1, 0
        %v1673 = vsel %vm1545, 1, 0
        %v1674 = vsel %vm1546, 1, 0
        %v1675 = vsel %vm1547, 1, 0
        %v1676 = vsel %vm1548, 1, 0
        %v1677 = vsel %vm1549, 1, 0
        %v1678 = vsel %vm1550, 1, 0
        %v1679 = vsel %vm1551, 1, 0
        %v1680 = vsel %vm1552, 1, 0
        %v1681 = vsel %vm1553, 1, 0
        %v1682 = vsel %vm1554, 1, 0
        %v1683 = vsel %vm1555, 1, 0
        %v1684 = vsel %vm1556, 1, 0
        %v1685 = vsel %vm1557, 1, 0
        %v1686 = vsel %vm1558, 1, 0
        %v1687 = vsel %vm1559, 1, 0
        %v1688 = vsel %vm1560, 1, 0
        %v1689 = vsel %vm1561, 1, 0
        %v1690 = vsel %vm1562, 1, 0
        %v1691 = vsel %vm1563, 1, 0
        %v1692 = vsel %vm1564, 1, 0
        %v1693 = vsel %vm1565, 1, 0
        %v1694 = vsel %vm1566, 1, 0
        %v1695 = vsel %vm1567, 1, 0
        %v1696 = vsel %vm1568, 1, 0
        %v1697 = vsel %vm1569, 1, 0
        %v1698 = vsel %vm1570, 1, 0
        %v1699 = vsel %vm1571, 1, 0
        %v1700 = vsel %vm1572, 1, 0
        %v1701 = vsel %vm1573, 1, 0
        %v1702 = vsel %vm1574, 1, 0
        %v1703 = vsel %vm1575, 1, 0
        %v1704 = vsel %vm1576, 1, 0
        %v1705 = vsel %vm1577, 1, 0
        %v1706 = vsel %vm1578, 1, 0
        %v1707 = vsel %vm1579, 1, 0
        %v1708 = vsel %vm1580, 1, 0
        %v1709 = vsel %vm1581, 1, 0
        %v1710 = vsel %vm1582, 1, 0
        %v1711 = vsel %vm1583, 1, 0
        %v1712 = vsel %vm1584, 1, 0
        %v1713 = vsel %vm1585, 1, 0
        %v1714 = vsel %vm1586, 1, 0
        %v1715 = vsel %vm1587, 1, 0
        %v1716 = vsel %vm1588, 1, 0
        %v1717 = vsel %vm1589, 1, 0
        %v1718 = vsel %vm1590, 1, 0
        %v1719 = vsel %vm1591, 1, 0
        %v1720 = vsel %vm1592, 1, 0
        %v1721 = vsel %vm1593, 1, 0
        %v1722 = vsel %vm1594, 1, 0
        %v1723 = vsel %vm1595, 1, 0
        %v1724 = vsel %vm1596, 1, 0
        %v1725 = vsel %vm1597, 1, 0
        %v1726 = vsel %vm1598, 1, 0
        %v1727 = vsel %vm1599, 1, 0
        %v1728 = vsel %vm1600, 1, 0
        %v1729 = vsel %vm1601, 1, 0
        %v1730 = vsel %vm1602, 1, 0
        %v1731 = vsel %vm1603, 1, 0
        %v1732 = vsel %vm1604, 1, 0
        %v1733 = vsel %vm1605, 1, 0
        %v1734 = vsel %vm1606, 1, 0
        %v1735 = vsel %vm1607, 1, 0
        %v1736 = vsel %vm1608, 1, 0
        %v1737 = vsel %vm1609, 1, 0
        %v1738 = vsel %vm1610, 1, 0
        %v1739 = vsel %vm1611, 1, 0
        %v1740 = vsel %vm1612, 1, 0
        %v1741 = vsel %vm1613, 1, 0
        %v1742 = vsel %vm1614, 1, 0
        %v1743 = vsel %vm1615, 1, 0
        %v1744 = vsel %vm1616, 1, 0
        %v1745 = vsel %vm1617, 1, 0
        %v1746 = vsel %vm1618, 1, 0
        %v1747 = vsel %vm1619, 1, 0
        %v1748 = vsel %vm1620, 1, 0
        %v1749 = vsel %vm1621, 1, 0
        %v1750 = vsel %vm1622, 1, 0
        %v1751 = vsel %vm1623, 1, 0
        %v1752 = vsel %vm1624, 1, 0
        %v1753 = vsel %vm1625, 1, 0
        %v1754 = vsel %vm1626, 1, 0
        %v1755 = vsel %vm1627, 1, 0
        %v1756 = vsel %vm1628, 1, 0
        %v1757 = vsel %vm1629, 1, 0
        %v1758 = vsel %vm1630, 1, 0
        %v1759 = vsel %vm1631, 1, 0
        %v1760 = vsel %vm1632, 1, 0
        %v1761 = vsel %vm1633, 1, 0
        %v1762 = vsel %vm1634, 1, 0
        %v1763 = vsel %vm1635, 1, 0
        %v1764 = vsel %vm1636, 1, 0
        %v1765 = vsel %vm1637, 1, 0
        %v1766 = vsel %vm1638, 1, 0
        %v1767 = vsel %vm1639, 1, 0
        %v1768 = vsel %vm1640, 1, 0
        %v1769 = vsel %vm1641, 1, 0
        %v1770 = vsel %vm1642, 1, 0
        %v1771 = vsel %vm1643, 1, 0
        %v1772 = vsel %vm1644, 1, 0
        %v1773 = vsel %vm1645, 1, 0
        %v1774 = vsel %vm1646, 1, 0
        %v1775 = vsel %vm1647, 1, 0
        %v1776 = vsel %vm1648, 1, 0
        %v1777 = vsel %vm1649, 1, 0
        %v1778 = vsel %vm1650, 1, 0
        %v1779 = vsel %vm1651, 1, 0
        %v1780 = vsel %vm1652, 1, 0
        %v1781 = vsel %vm1653, 1, 0
        %v1782 = vsel %vm1654, 1, 0
        %v1783 = vsel %vm1655, 1, 0
        %v1784 = vsel %vm1656, 1, 0
        %v1785 = vsel %vm1657, 1, 0
        %v1786 = vsel %vm1658, 1, 0
        %v1787 = vsel %vm1659, 1, 0
        %v1788 = vcvt.s32.f32 %v1660
        %v1789 = vcvt.s32.f32 %v1661
        %v1790 = vcvt.s32.f32 %v1662
        %v1791 = vcvt.s32.f32 %v1663
        %v1792 = vcvt.s32.f32 %v1664
        %v1793 = vcvt.s32.f32 %v1665
        %v1794 = vcvt.s32.f32 %v1666
        %v1795 = vcvt.s32.f32 %v1667
        %v1796 = vcvt.s32.f32 %v1668
        %v1797 = vcvt.s32.f32 %v1669
        %v1798 = vcvt.s32.f32 %v1670
        %v1799 = vcvt.s32.f32 %v1671
        %v1800 = vcvt.s32.f32 %v1672
        %v1801 = vcvt.s32.f32 %v1673
        %v1802 = vcvt.s32.f32 %v1674
        %v1803 = vcvt.s32.f32 %v1675
        %v1804 = vcvt.s32.f32 %v1676
        %v1805 = vcvt.s32.f32 %v1677
        %v1806 = vcvt.s32.f32 %v1678
        %v1807 = vcvt.s32.f32 %v1679
        %v1808 = vcvt.s32.f32 %v1680
        %v1809 = vcvt.s32.f32 %v1681
        %v1810 = vcvt.s32.f32 %v1682
        %v1811 = vcvt.s32.f32 %v1683
        %v1812 = vcvt.s32.f32 %v1684
        %v1813 = vcvt.s32.f32 %v1685
        %v1814 = vcvt.s32.f32 %v1686
        %v1815 = vcvt.s32.f32 %v1687
        %v1816 = vcvt.s32.f32 %v1688
        %v1817 = vcvt.s32.f32 %v1689
        %v1818 = vcvt.s32.f32 %v1690
        %v1819 = vcvt.s32.f32 %v1691
        %v1820 = vcvt.s32.f32 %v1692
        %v1821 = vcvt.s32.f32 %v1693
        %v1822 = vcvt.s32.f32 %v1694
        %v1823 = vcvt.s32.f32 %v1695
        %v1824 = vcvt.s32.f32 %v1696
        %v1825 = vcvt.s32.f32 %v1697
        %v1826 = vcvt.s32.f32 %v1698
        %v1827 = vcvt.s32.f32 %v1699
        %v1828 = vcvt.s32.f32 %v1700
        %v1829 = vcvt.s32.f32 %v1701
        %v1830 = vcvt.s32.f32 %v1702
        %v1831 = vcvt.s32.f32 %v1703
        %v1832 = vcvt.s32.f32 %v1704
        %v1833 = vcvt.s32.f32 %v1705
        %v1834 = vcvt.s32.f32 %v1706
        %v1835 = vcvt.s32.f32 %v1707
        %v1836 = vcvt.s32.f32 %v1708
        %v1837 = vcvt.s32.f32 %v1709
        %v1838 = vcvt.s32.f32 %v1710
        %v1839 = vcvt.s32.f32 %v1711
        %v1840 = vcvt.s32.f32 %v1712
        %v1841 = vcvt.s32.f32 %v1713
        %v1842 = vcvt.s32.f32 %v1714
        %v1843 = vcvt.s32.f32 %v1715
        %v1844 = vcvt.s32.f32 %v1716
        %v1845 = vcvt.s32.f32 %v1717
        %v1846 = vcvt.s32.f32 %v1718
        %v1847 = vcvt.s32.f32 %v1719
        %v1848 = vcvt.s32.f32 %v1720
        %v1849 = vcvt.s32.f32 %v1721
        %v1850 = vcvt.s32.f32 %v1722
        %v1851 = vcvt.s32.f32 %v1723
        %v1852 = vcvt.s32.f32 %v1724
        %v1853 = vcvt.s32.f32 %v1725
        %v1854 = vcvt.s32.f32 %v1726
        %v1855 = vcvt.s32.f32 %v1727
        %v1856 = vcvt.s32.f32 %v1728
        %v1857 = vcvt.s32.f32 %v1729
        %v1858 = vcvt.s32.f32 %v1730
        %v1859 = vcvt.s32.f32 %v1731
        %v1860 = vcvt.s32.f32 %v1732
        %v1861 = vcvt.s32.f32 %v1733
        %v1862 = vcvt.s32.f32 %v1734
        %v1863 = vcvt.s32.f32 %v1735
        %v1864 = vcvt.s32.f32 %v1736
        %v1865 = vcvt.s32.f32 %v1737
        %v1866 = vcvt.s32.f32 %v1738
        %v1867 = vcvt.s32.f32 %v1739
        %v1868 = vcvt.s32.f32 %v1740
        %v1869 = vcvt.s32.f32 %v1741
        %v1870 = vcvt.s32.f32 %v1742
        %v1871 = vcvt.s32.f32 %v1743
        %v1872 = vcvt.s32.f32 %v1744
        %v1873 = vcvt.s32.f32 %v1745
        %v1874 = vcvt.s32.f32 %v1746
        %v1875 = vcvt.s32.f32 %v1747
        %v1876 = vcvt.s32.f32 %v1748
        %v1877 = vcvt.s32.f32 %v1749
        %v1878 = vcvt.s32.f32 %v1750
        %v1879 = vcvt.s32.f32 %v1751
        %v1880 = vcvt.s32.f32 %v1752
        %v1881 = vcvt.s32.f32 %v1753
        %v1882 = vcvt.s32.f32 %v1754
        %v1883 = vcvt.s32.f32 %v1755
        %v1884 = vcvt.s32.f32 %v1756
        %v1885 = vcvt.s32.f32 %v1757
        %v1886 = vcvt.s32.f32 %v1758
        %v1887 = vcvt.s32.f32 %v1759
        %v1888 = vcvt.s32.f32 %v1760
        %v1889 = vcvt.s32.f32 %v1761
        %v1890 = vcvt.s32.f32 %v1762
        %v1891 = vcvt.s32.f32 %v1763
        %v1892 = vcvt.s32.f32 %v1764
        %v1893 = vcvt.s32.f32 %v1765
        %v1894 = vcvt.s32.f32 %v1766
        %v1895 = vcvt.s32.f32 %v1767
        %v1896 = vcvt.s32.f32 %v1768
        %v1897 = vcvt.s32.f32 %v1769
        %v1898 = vcvt.s32.f32 %v1770
        %v1899 = vcvt.s32.f32 %v1771
        %v1900 = vcvt.s32.f32 %v1772
        %v1901 = vcvt.s32.f32 %v1773
        %v1902 = vcvt.s32.f32 %v1774
        %v1903 = vcvt.s32.f32 %v1775
        %v1904 = vcvt.s32.f32 %v1776
        %v1905 = vcvt.s32.f32 %v1777
        %v1906 = vcvt.s32.f32 %v1778
        %v1907 = vcvt.s32.f32 %v1779
        %v1908 = vcvt.s32.f32 %v1780
        %v1909 = vcvt.s32.f32 %v1781
        %v1910 = vcvt.s32.f32 %v1782
        %v1911 = vcvt.s32.f32 %v1783
        %v1912 = vcvt.s32.f32 %v1784
        %v1913 = vcvt.s32.f32 %v1785
        %v1914 = vcvt.s32.f32 %v1786
        %v1915 = vcvt.s32.f32 %v1787
        %v1916 = vadd.f32 %v1788, %v1789
        %v1917 = vadd.f32 %v1916, %v1790
        %v1918 = vadd.f32 %v1917, %v1791
        %v1919 = vadd.f32 %v1918, %v1792
        %v1920 = vadd.f32 %v1919, %v1793
        %v1921 = vadd.f32 %v1920, %v1794
        %v1922 = vadd.f32 %v1921, %v1795
        %v1923 = vadd.f32 %v1922, %v1796
        %v1924 = vadd.f32 %v1923, %v1797
        %v1925 = vadd.f32 %v1924, %v1798
        %v1926 = vadd.f32 %v1925, %v1799
        %v1927 = vadd.f32 %v1926, %v1800
        %v1928 = vadd.f32 %v1927, %v1801
        %v1929 = vadd.f32 %v1928, %v1802
        %v1930 = vadd.f32 %v1929, %v1803
        %v1931 = vrot.slane %v1930, 4
        %v1932 = vadd.f32 %v1930, %v1931
        %v1933 = vrot.slane %v1932, 2
        %v1934 = vadd.f32 %v1932, %v1933
        %v1935 = vrot.slane %v1934, 1
        %v1936 = vadd.f32 %v1934, %v1935
        %v1937 = vadd.f32 %v1804, %v1805
        %v1938 = vadd.f32 %v1937, %v1806
        %v1939 = vadd.f32 %v1938, %v1807
        %v1940 = vadd.f32 %v1939, %v1808
        %v1941 = vadd.f32 %v1940, %v1809
        %v1942 = vadd.f32 %v1941, %v1810
        %v1943 = vadd.f32 %v1942, %v1811
        %v1944 = vadd.f32 %v1943, %v1812
        %v1945 = vadd.f32 %v1944, %v1813
        %v1946 = vadd.f32 %v1945, %v1814
        %v1947 = vadd.f32 %v1946, %v1815
        %v1948 = vadd.f32 %v1947, %v1816
        %v1949 = vadd.f32 %v1948, %v1817
        %v1950 = vadd.f32 %v1949, %v1818
        %v1951 = vadd.f32 %v1950, %v1819
        %v1952 = vrot.slane %v1951, 4
        %v1953 = vadd.f32 %v1951, %v1952
        %v1954 = vrot.slane %v1953, 2
        %v1955 = vadd.f32 %v1953, %v1954
        %v1956 = vrot.slane %v1955, 1
        %v1957 = vadd.f32 %v1955, %v1956
        %v1958 = vadd.f32 %v1820, %v1821
        %v1959 = vadd.f32 %v1958, %v1822
        %v1960 = vadd.f32 %v1959, %v1823
        %v1961 = vadd.f32 %v1960, %v1824
        %v1962 = vadd.f32 %v1961, %v1825
        %v1963 = vadd.f32 %v1962, %v1826
        %v1964 = vadd.f32 %v1963, %v1827
        %v1965 = vadd.f32 %v1964, %v1828
        %v1966 = vadd.f32 %v1965, %v1829
        %v1967 = vadd.f32 %v1966, %v1830
        %v1968 = vadd.f32 %v1967, %v1831
        %v1969 = vadd.f32 %v1968, %v1832
        %v1970 = vadd.f32 %v1969, %v1833
        %v1971 = vadd.f32 %v1970, %v1834
        %v1972 = vadd.f32 %v1971, %v1835
        %v1973 = vrot.slane %v1972, 4
        %v1974 = vadd.f32 %v1972, %v1973
        %v1975 = vrot.slane %v1974, 2
        %v1976 = vadd.f32 %v1974, %v1975
        %v1977 = vrot.slane %v1976, 1
        %v1978 = vadd.f32 %v1976, %v1977
        %v1979 = vadd.f32 %v1836, %v1837
        %v1980 = vadd.f32 %v1979, %v1838
        %v1981 = vadd.f32 %v1980, %v1839
        %v1982 = vadd.f32 %v1981, %v1840
        %v1983 = vadd.f32 %v1982, %v1841
        %v1984 = vadd.f32 %v1983, %v1842
        %v1985 = vadd.f32 %v1984, %v1843
        %v1986 = vadd.f32 %v1985, %v1844
        %v1987 = vadd.f32 %v1986, %v1845
        %v1988 = vadd.f32 %v1987, %v1846
        %v1989 = vadd.f32 %v1988, %v1847
        %v1990 = vadd.f32 %v1989, %v1848
        %v1991 = vadd.f32 %v1990, %v1849
        %v1992 = vadd.f32 %v1991, %v1850
        %v1993 = vadd.f32 %v1992, %v1851
        %v1994 = vrot.slane %v1993, 4
        %v1995 = vadd.f32 %v1993, %v1994
        %v1996 = vrot.slane %v1995, 2
        %v1997 = vadd.f32 %v1995, %v1996
        %v1998 = vrot.slane %v1997, 1
        %v1999 = vadd.f32 %v1997, %v1998
        %v2000 = vadd.f32 %v1852, %v1853
        %v2001 = vadd.f32 %v2000, %v1854
        %v2002 = vadd.f32 %v2001, %v1855
        %v2003 = vadd.f32 %v2002, %v1856
        %v2004 = vadd.f32 %v2003, %v1857
        %v2005 = vadd.f32 %v2004, %v1858
        %v2006 = vadd.f32 %v2005, %v1859
        %v2007 = vadd.f32 %v2006, %v1860
        %v2008 = vadd.f32 %v2007, %v1861
        %v2009 = vadd.f32 %v2008, %v1862
        %v2010 = vadd.f32 %v2009, %v1863
        %v2011 = vadd.f32 %v2010, %v1864
        %v2012 = vadd.f32 %v2011, %v1865
        %v2013 = vadd.f32 %v2012, %v1866
        %v2014 = vadd.f32 %v2013, %v1867
        %v2015 = vrot.slane %v2014, 4
        %v2016 = vadd.f32 %v2014, %v2015
        %v2017 = vrot.slane %v2016, 2
        %v2018 = vadd.f32 %v2016, %v2017
        %v2019 = vrot.slane %v2018, 1
        %v2020 = vadd.f32 %v2018, %v2019
        %v2021 = vadd.f32 %v1868, %v1869
        %v2022 = vadd.f32 %v2021, %v1870
        %v2023 = vadd.f32 %v2022, %v1871
        %v2024 = vadd.f32 %v2023, %v1872
        %v2025 = vadd.f32 %v2024, %v1873
        %v2026 = vadd.f32 %v2025, %v1874
        %v2027 = vadd.f32 %v2026, %v1875
        %v2028 = vadd.f32 %v2027, %v1876
        %v2029 = vadd.f32 %v2028, %v1877
        %v2030 = vadd.f32 %v2029, %v1878
        %v2031 = vadd.f32 %v2030, %v1879
        %v2032 = vadd.f32 %v2031, %v1880
        %v2033 = vadd.f32 %v2032, %v1881
        %v2034 = vadd.f32 %v2033, %v1882
        %v2035 = vadd.f32 %v2034, %v1883
        %v2036 = vrot.slane %v2035, 4
        %v2037 = vadd.f32 %v2035, %v2036
        %v2038 = vrot.slane %v2037, 2
        %v2039 = vadd.f32 %v2037, %v2038
        %v2040 = vrot.slane %v2039, 1
        %v2041 = vadd.f32 %v2039, %v2040
        %v2042 = vadd.f32 %v1884, %v1885
        %v2043 = vadd.f32 %v2042, %v1886
        %v2044 = vadd.f32 %v2043, %v1887
        %v2045 = vadd.f32 %v2044, %v1888
        %v2046 = vadd.f32 %v2045, %v1889
        %v2047 = vadd.f32 %v2046, %v1890
        %v2048 = vadd.f32 %v2047, %v1891
        %v2049 = vadd.f32 %v2048, %v1892
        %v2050 = vadd.f32 %v2049, %v1893
        %v2051 = vadd.f32 %v2050, %v1894
        %v2052 = vadd.f32 %v2051, %v1895
        %v2053 = vadd.f32 %v2052, %v1896
        %v2054 = vadd.f32 %v2053, %v1897
        %v2055 = vadd.f32 %v2054, %v1898
        %v2056 = vadd.f32 %v2055, %v1899
        %v2057 = vrot.slane %v2056, 4
        %v2058 = vadd.f32 %v2056, %v2057
        %v2059 = vrot.slane %v2058, 2
        %v2060 = vadd.f32 %v2058, %v2059
        %v2061 = vrot.slane %v2060, 1
        %v2062 = vadd.f32 %v2060, %v2061
        %v2063 = vadd.f32 %v1900, %v1901
        %v2064 = vadd.f32 %v2063, %v1902
        %v2065 = vadd.f32 %v2064, %v1903
        %v2066 = vadd.f32 %v2065, %v1904
        %v2067 = vadd.f32 %v2066, %v1905
        %v2068 = vadd.f32 %v2067, %v1906
        %v2069 = vadd.f32 %v2068, %v1907
        %v2070 = vadd.f32 %v2069, %v1908
        %v2071 = vadd.f32 %v2070, %v1909
        %v2072 = vadd.f32 %v2071, %v1910
        %v2073 = vadd.f32 %v2072, %v1911
        %v2074 = vadd.f32 %v2073, %v1912
        %v2075 = vadd.f32 %v2074, %v1913
        %v2076 = vadd.f32 %v2075, %v1914
        %v2077 = vadd.f32 %v2076, %v1915
        %v2078 = vrot.slane %v2077, 4
        %v2079 = vadd.f32 %v2077, %v2078
        %v2080 = vrot.slane %v2079, 2
        %v2081 = vadd.f32 %v2079, %v2080
        %v2082 = vrot.slane %v2081, 1
        %v2083 = vadd.f32 %v2081, %v2082
        %v2084 = vcvt.s32.f32 %v299
        %v2085 = vlaneseq
        %v2086 = vshrl.u32 %v2085, 7
        %2088 = vset.pattern.permute.xlu0 %v2086
        %2089 = vperm.xlu0 %2088, %v1936
        %v2090 = vpop.permute.xlu0 %2089
        %v2091 = vlaneseq
        %v2092 = vshrl.u32 %v2091, 7
        %v2093 = vadd.s32 %v2092, 8
        %2094 = vset.pattern.permute.xlu0 %v2093
        %2095 = vperm.xlu0 %2094, %v1936
        %v2096 = vpop.permute.xlu0 %2095
        %v2097 = vlaneseq
        %v2098 = vshrl.u32 %v2097, 7
        %v2099 = vadd.s32 %v2098, 16
        %2100 = vset.pattern.permute.xlu0 %v2099
        %2101 = vperm.xlu0 %2100, %v1936
        %v2102 = vpop.permute.xlu0 %2101
        %v2103 = vlaneseq
        %v2104 = vshrl.u32 %v2103, 7
        %v2105 = vadd.s32 %v2104, 24
        %2106 = vset.pattern.permute.xlu0 %v2105
        %2107 = vperm.xlu0 %2106, %v1936
        %v2108 = vpop.permute.xlu0 %2107
        %v2109 = vlaneseq
        %v2110 = vshrl.u32 %v2109, 7
        %v2111 = vadd.s32 %v2110, 32
        %2112 = vset.pattern.permute.xlu0 %v2111
        %2113 = vperm.xlu0 %2112, %v1936
        %v2114 = vpop.permute.xlu0 %2113
        %v2115 = vlaneseq
        %v2116 = vshrl.u32 %v2115, 7
        %v2117 = vadd.s32 %v2116, 40
        %2118 = vset.pattern.permute.xlu0 %v2117
        %2119 = vperm.xlu0 %2118, %v1936
        %v2120 = vpop.permute.xlu0 %2119
        %v2121 = vlaneseq
        %v2122 = vshrl.u32 %v2121, 7
        %v2123 = vadd.s32 %v2122, 48
        %2124 = vset.pattern.permute.xlu0 %v2123
        %2125 = vperm.xlu0 %2124, %v1936
        %v2126 = vpop.permute.xlu0 %2125
        %v2127 = vlaneseq
        %v2128 = vshrl.u32 %v2127, 7
        %v2129 = vadd.s32 %v2128, 56
        %2130 = vset.pattern.permute.xlu0 %v2129
        %2131 = vperm.xlu0 %2130, %v1936
        %v2132 = vpop.permute.xlu0 %2131
        %v2133 = vlaneseq
        %v2134 = vshrl.u32 %v2133, 7
        %v2135 = vadd.s32 %v2134, 64
        %2136 = vset.pattern.permute.xlu0 %v2135
        %2137 = vperm.xlu0 %2136, %v1936
        %v2138 = vpop.permute.xlu0 %2137
        %v2139 = vlaneseq
        %v2140 = vshrl.u32 %v2139, 7
        %v2141 = vadd.s32 %v2140, 72
        %2142 = vset.pattern.permute.xlu0 %v2141
        %2143 = vperm.xlu0 %2142, %v1936
        %v2144 = vpop.permute.xlu0 %2143
        %v2145 = vlaneseq
        %v2146 = vshrl.u32 %v2145, 7
        %v2147 = vadd.s32 %v2146, 80
        %2148 = vset.pattern.permute.xlu0 %v2147
        %2149 = vperm.xlu0 %2148, %v1936
        %v2150 = vpop.permute.xlu0 %2149
        %v2151 = vlaneseq
        %v2152 = vshrl.u32 %v2151, 7
        %v2153 = vadd.s32 %v2152, 88
        %2154 = vset.pattern.permute.xlu0 %v2153
        %2155 = vperm.xlu0 %2154, %v1936
        %v2156 = vpop.permute.xlu0 %2155
        %v2157 = vlaneseq
        %v2158 = vshrl.u32 %v2157, 7
        %v2159 = vadd.s32 %v2158, 96
        %2160 = vset.pattern.permute.xlu0 %v2159
        %2161 = vperm.xlu0 %2160, %v1936
        %v2162 = vpop.permute.xlu0 %2161
        %v2163 = vlaneseq
        %v2164 = vshrl.u32 %v2163, 7
        %v2165 = vadd.s32 %v2164, 104
        %2166 = vset.pattern.permute.xlu0 %v2165
        %2167 = vperm.xlu0 %2166, %v1936
        %v2168 = vpop.permute.xlu0 %2167
        %v2169 = vlaneseq
        %v2170 = vshrl.u32 %v2169, 7
        %v2171 = vadd.s32 %v2170, 112
        %2172 = vset.pattern.permute.xlu0 %v2171
        %2173 = vperm.xlu0 %2172, %v1936
        %v2174 = vpop.permute.xlu0 %2173
        %v2175 = vlaneseq
        %v2176 = vshrl.u32 %v2175, 7
        %v2177 = vadd.s32 %v2176, 120
        %2178 = vset.pattern.permute.xlu0 %v2177
        %2179 = vperm.xlu0 %2178, %v1936
        %v2180 = vpop.permute.xlu0 %2179
        %v2181 = vlaneseq
        %v2182 = vshrl.u32 %v2181, 7
        %2184 = vset.pattern.permute.xlu0 %v2182
        %2185 = vperm.xlu0 %2184, %v1957
        %v2186 = vpop.permute.xlu0 %2185
        %v2187 = vlaneseq
        %v2188 = vshrl.u32 %v2187, 7
        %v2189 = vadd.s32 %v2188, 8
        %2190 = vset.pattern.permute.xlu0 %v2189
        %2191 = vperm.xlu0 %2190, %v1957
        %v2192 = vpop.permute.xlu0 %2191
        %v2193 = vlaneseq
        %v2194 = vshrl.u32 %v2193, 7
        %v2195 = vadd.s32 %v2194, 16
        %2196 = vset.pattern.permute.xlu0 %v2195
        %2197 = vperm.xlu0 %2196, %v1957
        %v2198 = vpop.permute.xlu0 %2197
        %v2199 = vlaneseq
        %v2200 = vshrl.u32 %v2199, 7
        %v2201 = vadd.s32 %v2200, 24
        %2202 = vset.pattern.permute.xlu0 %v2201
        %2203 = vperm.xlu0 %2202, %v1957
        %v2204 = vpop.permute.xlu0 %2203
        %v2205 = vlaneseq
        %v2206 = vshrl.u32 %v2205, 7
        %v2207 = vadd.s32 %v2206, 32
        %2208 = vset.pattern.permute.xlu0 %v2207
        %2209 = vperm.xlu0 %2208, %v1957
        %v2210 = vpop.permute.xlu0 %2209
        %v2211 = vlaneseq
        %v2212 = vshrl.u32 %v2211, 7
        %v2213 = vadd.s32 %v2212, 40
        %2214 = vset.pattern.permute.xlu0 %v2213
        %2215 = vperm.xlu0 %2214, %v1957
        %v2216 = vpop.permute.xlu0 %2215
        %v2217 = vlaneseq
        %v2218 = vshrl.u32 %v2217, 7
        %v2219 = vadd.s32 %v2218, 48
        %2220 = vset.pattern.permute.xlu0 %v2219
        %2221 = vperm.xlu0 %2220, %v1957
        %v2222 = vpop.permute.xlu0 %2221
        %v2223 = vlaneseq
        %v2224 = vshrl.u32 %v2223, 7
        %v2225 = vadd.s32 %v2224, 56
        %2226 = vset.pattern.permute.xlu0 %v2225
        %2227 = vperm.xlu0 %2226, %v1957
        %v2228 = vpop.permute.xlu0 %2227
        %v2229 = vlaneseq
        %v2230 = vshrl.u32 %v2229, 7
        %v2231 = vadd.s32 %v2230, 64
        %2232 = vset.pattern.permute.xlu0 %v2231
        %2233 = vperm.xlu0 %2232, %v1957
        %v2234 = vpop.permute.xlu0 %2233
        %v2235 = vlaneseq
        %v2236 = vshrl.u32 %v2235, 7
        %v2237 = vadd.s32 %v2236, 72
        %2238 = vset.pattern.permute.xlu0 %v2237
        %2239 = vperm.xlu0 %2238, %v1957
        %v2240 = vpop.permute.xlu0 %2239
        %v2241 = vlaneseq
        %v2242 = vshrl.u32 %v2241, 7
        %v2243 = vadd.s32 %v2242, 80
        %2244 = vset.pattern.permute.xlu0 %v2243
        %2245 = vperm.xlu0 %2244, %v1957
        %v2246 = vpop.permute.xlu0 %2245
        %v2247 = vlaneseq
        %v2248 = vshrl.u32 %v2247, 7
        %v2249 = vadd.s32 %v2248, 88
        %2250 = vset.pattern.permute.xlu0 %v2249
        %2251 = vperm.xlu0 %2250, %v1957
        %v2252 = vpop.permute.xlu0 %2251
        %v2253 = vlaneseq
        %v2254 = vshrl.u32 %v2253, 7
        %v2255 = vadd.s32 %v2254, 96
        %2256 = vset.pattern.permute.xlu0 %v2255
        %2257 = vperm.xlu0 %2256, %v1957
        %v2258 = vpop.permute.xlu0 %2257
        %v2259 = vlaneseq
        %v2260 = vshrl.u32 %v2259, 7
        %v2261 = vadd.s32 %v2260, 104
        %2262 = vset.pattern.permute.xlu0 %v2261
        %2263 = vperm.xlu0 %2262, %v1957
        %v2264 = vpop.permute.xlu0 %2263
        %v2265 = vlaneseq
        %v2266 = vshrl.u32 %v2265, 7
        %v2267 = vadd.s32 %v2266, 112
        %2268 = vset.pattern.permute.xlu0 %v2267
        %2269 = vperm.xlu0 %2268, %v1957
        %v2270 = vpop.permute.xlu0 %2269
        %v2271 = vlaneseq
        %v2272 = vshrl.u32 %v2271, 7
        %v2273 = vadd.s32 %v2272, 120
        %2274 = vset.pattern.permute.xlu0 %v2273
        %2275 = vperm.xlu0 %2274, %v1957
        %v2276 = vpop.permute.xlu0 %2275
        %v2277 = vlaneseq
        %v2278 = vshrl.u32 %v2277, 7
        %2280 = vset.pattern.permute.xlu0 %v2278
        %2281 = vperm.xlu0 %2280, %v1978
        %v2282 = vpop.permute.xlu0 %2281
        %v2283 = vlaneseq
        %v2284 = vshrl.u32 %v2283, 7
        %v2285 = vadd.s32 %v2284, 8
        %2286 = vset.pattern.permute.xlu0 %v2285
        %2287 = vperm.xlu0 %2286, %v1978
        %v2288 = vpop.permute.xlu0 %2287
        %v2289 = vlaneseq
        %v2290 = vshrl.u32 %v2289, 7
        %v2291 = vadd.s32 %v2290, 16
        %2292 = vset.pattern.permute.xlu0 %v2291
        %2293 = vperm.xlu0 %2292, %v1978
        %v2294 = vpop.permute.xlu0 %2293
        %v2295 = vlaneseq
        %v2296 = vshrl.u32 %v2295, 7
        %v2297 = vadd.s32 %v2296, 24
        %2298 = vset.pattern.permute.xlu0 %v2297
        %2299 = vperm.xlu0 %2298, %v1978
        %v2300 = vpop.permute.xlu0 %2299
        %v2301 = vlaneseq
        %v2302 = vshrl.u32 %v2301, 7
        %v2303 = vadd.s32 %v2302, 32
        %2304 = vset.pattern.permute.xlu0 %v2303
        %2305 = vperm.xlu0 %2304, %v1978
        %v2306 = vpop.permute.xlu0 %2305
        %v2307 = vlaneseq
        %v2308 = vshrl.u32 %v2307, 7
        %v2309 = vadd.s32 %v2308, 40
        %2310 = vset.pattern.permute.xlu0 %v2309
        %2311 = vperm.xlu0 %2310, %v1978
        %v2312 = vpop.permute.xlu0 %2311
        %v2313 = vlaneseq
        %v2314 = vshrl.u32 %v2313, 7
        %v2315 = vadd.s32 %v2314, 48
        %2316 = vset.pattern.permute.xlu0 %v2315
        %2317 = vperm.xlu0 %2316, %v1978
        %v2318 = vpop.permute.xlu0 %2317
        %v2319 = vlaneseq
        %v2320 = vshrl.u32 %v2319, 7
        %v2321 = vadd.s32 %v2320, 56
        %2322 = vset.pattern.permute.xlu0 %v2321
        %2323 = vperm.xlu0 %2322, %v1978
        %v2324 = vpop.permute.xlu0 %2323
        %v2325 = vlaneseq
        %v2326 = vshrl.u32 %v2325, 7
        %v2327 = vadd.s32 %v2326, 64
        %2328 = vset.pattern.permute.xlu0 %v2327
        %2329 = vperm.xlu0 %2328, %v1978
        %v2330 = vpop.permute.xlu0 %2329
        %v2331 = vlaneseq
        %v2332 = vshrl.u32 %v2331, 7
        %v2333 = vadd.s32 %v2332, 72
        %2334 = vset.pattern.permute.xlu0 %v2333
        %2335 = vperm.xlu0 %2334, %v1978
        %v2336 = vpop.permute.xlu0 %2335
        %v2337 = vlaneseq
        %v2338 = vshrl.u32 %v2337, 7
        %v2339 = vadd.s32 %v2338, 80
        %2340 = vset.pattern.permute.xlu0 %v2339
        %2341 = vperm.xlu0 %2340, %v1978
        %v2342 = vpop.permute.xlu0 %2341
        %v2343 = vlaneseq
        %v2344 = vshrl.u32 %v2343, 7
        %v2345 = vadd.s32 %v2344, 88
        %2346 = vset.pattern.permute.xlu0 %v2345
        %2347 = vperm.xlu0 %2346, %v1978
        %v2348 = vpop.permute.xlu0 %2347
        %v2349 = vlaneseq
        %v2350 = vshrl.u32 %v2349, 7
        %v2351 = vadd.s32 %v2350, 96
        %2352 = vset.pattern.permute.xlu0 %v2351
        %2353 = vperm.xlu0 %2352, %v1978
        %v2354 = vpop.permute.xlu0 %2353
        %v2355 = vlaneseq
        %v2356 = vshrl.u32 %v2355, 7
        %v2357 = vadd.s32 %v2356, 104
        %2358 = vset.pattern.permute.xlu0 %v2357
        %2359 = vperm.xlu0 %2358, %v1978
        %v2360 = vpop.permute.xlu0 %2359
        %v2361 = vlaneseq
        %v2362 = vshrl.u32 %v2361, 7
        %v2363 = vadd.s32 %v2362, 112
        %2364 = vset.pattern.permute.xlu0 %v2363
        %2365 = vperm.xlu0 %2364, %v1978
        %v2366 = vpop.permute.xlu0 %2365
        %v2367 = vlaneseq
        %v2368 = vshrl.u32 %v2367, 7
        %v2369 = vadd.s32 %v2368, 120
        %2370 = vset.pattern.permute.xlu0 %v2369
        %2371 = vperm.xlu0 %2370, %v1978
        %v2372 = vpop.permute.xlu0 %2371
        %v2373 = vlaneseq
        %v2374 = vshrl.u32 %v2373, 7
        %2376 = vset.pattern.permute.xlu0 %v2374
        %2377 = vperm.xlu0 %2376, %v1999
        %v2378 = vpop.permute.xlu0 %2377
        %v2379 = vlaneseq
        %v2380 = vshrl.u32 %v2379, 7
        %v2381 = vadd.s32 %v2380, 8
        %2382 = vset.pattern.permute.xlu0 %v2381
        %2383 = vperm.xlu0 %2382, %v1999
        %v2384 = vpop.permute.xlu0 %2383
        %v2385 = vlaneseq
        %v2386 = vshrl.u32 %v2385, 7
        %v2387 = vadd.s32 %v2386, 16
        %2388 = vset.pattern.permute.xlu0 %v2387
        %2389 = vperm.xlu0 %2388, %v1999
        %v2390 = vpop.permute.xlu0 %2389
        %v2391 = vlaneseq
        %v2392 = vshrl.u32 %v2391, 7
        %v2393 = vadd.s32 %v2392, 24
        %2394 = vset.pattern.permute.xlu0 %v2393
        %2395 = vperm.xlu0 %2394, %v1999
        %v2396 = vpop.permute.xlu0 %2395
        %v2397 = vlaneseq
        %v2398 = vshrl.u32 %v2397, 7
        %v2399 = vadd.s32 %v2398, 32
        %2400 = vset.pattern.permute.xlu0 %v2399
        %2401 = vperm.xlu0 %2400, %v1999
        %v2402 = vpop.permute.xlu0 %2401
        %v2403 = vlaneseq
        %v2404 = vshrl.u32 %v2403, 7
        %v2405 = vadd.s32 %v2404, 40
        %2406 = vset.pattern.permute.xlu0 %v2405
        %2407 = vperm.xlu0 %2406, %v1999
        %v2408 = vpop.permute.xlu0 %2407
        %v2409 = vlaneseq
        %v2410 = vshrl.u32 %v2409, 7
        %v2411 = vadd.s32 %v2410, 48
        %2412 = vset.pattern.permute.xlu0 %v2411
        %2413 = vperm.xlu0 %2412, %v1999
        %v2414 = vpop.permute.xlu0 %2413
        %v2415 = vlaneseq
        %v2416 = vshrl.u32 %v2415, 7
        %v2417 = vadd.s32 %v2416, 56
        %2418 = vset.pattern.permute.xlu0 %v2417
        %2419 = vperm.xlu0 %2418, %v1999
        %v2420 = vpop.permute.xlu0 %2419
        %v2421 = vlaneseq
        %v2422 = vshrl.u32 %v2421, 7
        %v2423 = vadd.s32 %v2422, 64
        %2424 = vset.pattern.permute.xlu0 %v2423
        %2425 = vperm.xlu0 %2424, %v1999
        %v2426 = vpop.permute.xlu0 %2425
        %v2427 = vlaneseq
        %v2428 = vshrl.u32 %v2427, 7
        %v2429 = vadd.s32 %v2428, 72
        %2430 = vset.pattern.permute.xlu0 %v2429
        %2431 = vperm.xlu0 %2430, %v1999
        %v2432 = vpop.permute.xlu0 %2431
        %v2433 = vlaneseq
        %v2434 = vshrl.u32 %v2433, 7
        %v2435 = vadd.s32 %v2434, 80
        %2436 = vset.pattern.permute.xlu0 %v2435
        %2437 = vperm.xlu0 %2436, %v1999
        %v2438 = vpop.permute.xlu0 %2437
        %v2439 = vlaneseq
        %v2440 = vshrl.u32 %v2439, 7
        %v2441 = vadd.s32 %v2440, 88
        %2442 = vset.pattern.permute.xlu0 %v2441
        %2443 = vperm.xlu0 %2442, %v1999
        %v2444 = vpop.permute.xlu0 %2443
        %v2445 = vlaneseq
        %v2446 = vshrl.u32 %v2445, 7
        %v2447 = vadd.s32 %v2446, 96
        %2448 = vset.pattern.permute.xlu0 %v2447
        %2449 = vperm.xlu0 %2448, %v1999
        %v2450 = vpop.permute.xlu0 %2449
        %v2451 = vlaneseq
        %v2452 = vshrl.u32 %v2451, 7
        %v2453 = vadd.s32 %v2452, 104
        %2454 = vset.pattern.permute.xlu0 %v2453
        %2455 = vperm.xlu0 %2454, %v1999
        %v2456 = vpop.permute.xlu0 %2455
        %v2457 = vlaneseq
        %v2458 = vshrl.u32 %v2457, 7
        %v2459 = vadd.s32 %v2458, 112
        %2460 = vset.pattern.permute.xlu0 %v2459
        %2461 = vperm.xlu0 %2460, %v1999
        %v2462 = vpop.permute.xlu0 %2461
        %v2463 = vlaneseq
        %v2464 = vshrl.u32 %v2463, 7
        %v2465 = vadd.s32 %v2464, 120
        %2466 = vset.pattern.permute.xlu0 %v2465
        %2467 = vperm.xlu0 %2466, %v1999
        %v2468 = vpop.permute.xlu0 %2467
        %v2469 = vlaneseq
        %v2470 = vshrl.u32 %v2469, 7
        %2472 = vset.pattern.permute.xlu0 %v2470
        %2473 = vperm.xlu0 %2472, %v2020
        %v2474 = vpop.permute.xlu0 %2473
        %v2475 = vlaneseq
        %v2476 = vshrl.u32 %v2475, 7
        %v2477 = vadd.s32 %v2476, 8
        %2478 = vset.pattern.permute.xlu0 %v2477
        %2479 = vperm.xlu0 %2478, %v2020
        %v2480 = vpop.permute.xlu0 %2479
        %v2481 = vlaneseq
        %v2482 = vshrl.u32 %v2481, 7
        %v2483 = vadd.s32 %v2482, 16
        %2484 = vset.pattern.permute.xlu0 %v2483
        %2485 = vperm.xlu0 %2484, %v2020
        %v2486 = vpop.permute.xlu0 %2485
        %v2487 = vlaneseq
        %v2488 = vshrl.u32 %v2487, 7
        %v2489 = vadd.s32 %v2488, 24
        %2490 = vset.pattern.permute.xlu0 %v2489
        %2491 = vperm.xlu0 %2490, %v2020
        %v2492 = vpop.permute.xlu0 %2491
        %v2493 = vlaneseq
        %v2494 = vshrl.u32 %v2493, 7
        %v2495 = vadd.s32 %v2494, 32
        %2496 = vset.pattern.permute.xlu0 %v2495
        %2497 = vperm.xlu0 %2496, %v2020
        %v2498 = vpop.permute.xlu0 %2497
        %v2499 = vlaneseq
        %v2500 = vshrl.u32 %v2499, 7
        %v2501 = vadd.s32 %v2500, 40
        %2502 = vset.pattern.permute.xlu0 %v2501
        %2503 = vperm.xlu0 %2502, %v2020
        %v2504 = vpop.permute.xlu0 %2503
        %v2505 = vlaneseq
        %v2506 = vshrl.u32 %v2505, 7
        %v2507 = vadd.s32 %v2506, 48
        %2508 = vset.pattern.permute.xlu0 %v2507
        %2509 = vperm.xlu0 %2508, %v2020
        %v2510 = vpop.permute.xlu0 %2509
        %v2511 = vlaneseq
        %v2512 = vshrl.u32 %v2511, 7
        %v2513 = vadd.s32 %v2512, 56
        %2514 = vset.pattern.permute.xlu0 %v2513
        %2515 = vperm.xlu0 %2514, %v2020
        %v2516 = vpop.permute.xlu0 %2515
        %v2517 = vlaneseq
        %v2518 = vshrl.u32 %v2517, 7
        %v2519 = vadd.s32 %v2518, 64
        %2520 = vset.pattern.permute.xlu0 %v2519
        %2521 = vperm.xlu0 %2520, %v2020
        %v2522 = vpop.permute.xlu0 %2521
        %v2523 = vlaneseq
        %v2524 = vshrl.u32 %v2523, 7
        %v2525 = vadd.s32 %v2524, 72
        %2526 = vset.pattern.permute.xlu0 %v2525
        %2527 = vperm.xlu0 %2526, %v2020
        %v2528 = vpop.permute.xlu0 %2527
        %v2529 = vlaneseq
        %v2530 = vshrl.u32 %v2529, 7
        %v2531 = vadd.s32 %v2530, 80
        %2532 = vset.pattern.permute.xlu0 %v2531
        %2533 = vperm.xlu0 %2532, %v2020
        %v2534 = vpop.permute.xlu0 %2533
        %v2535 = vlaneseq
        %v2536 = vshrl.u32 %v2535, 7
        %v2537 = vadd.s32 %v2536, 88
        %2538 = vset.pattern.permute.xlu0 %v2537
        %2539 = vperm.xlu0 %2538, %v2020
        %v2540 = vpop.permute.xlu0 %2539
        %v2541 = vlaneseq
        %v2542 = vshrl.u32 %v2541, 7
        %v2543 = vadd.s32 %v2542, 96
        %2544 = vset.pattern.permute.xlu0 %v2543
        %2545 = vperm.xlu0 %2544, %v2020
        %v2546 = vpop.permute.xlu0 %2545
        %v2547 = vlaneseq
        %v2548 = vshrl.u32 %v2547, 7
        %v2549 = vadd.s32 %v2548, 104
        %2550 = vset.pattern.permute.xlu0 %v2549
        %2551 = vperm.xlu0 %2550, %v2020
        %v2552 = vpop.permute.xlu0 %2551
        %v2553 = vlaneseq
        %v2554 = vshrl.u32 %v2553, 7
        %v2555 = vadd.s32 %v2554, 112
        %2556 = vset.pattern.permute.xlu0 %v2555
        %2557 = vperm.xlu0 %2556, %v2020
        %v2558 = vpop.permute.xlu0 %2557
        %v2559 = vlaneseq
        %v2560 = vshrl.u32 %v2559, 7
        %v2561 = vadd.s32 %v2560, 120
        %2562 = vset.pattern.permute.xlu0 %v2561
        %2563 = vperm.xlu0 %2562, %v2020
        %v2564 = vpop.permute.xlu0 %2563
        %v2565 = vlaneseq
        %v2566 = vshrl.u32 %v2565, 7
        %2568 = vset.pattern.permute.xlu0 %v2566
        %2569 = vperm.xlu0 %2568, %v2041
        %v2570 = vpop.permute.xlu0 %2569
        %v2571 = vlaneseq
        %v2572 = vshrl.u32 %v2571, 7
        %v2573 = vadd.s32 %v2572, 8
        %2574 = vset.pattern.permute.xlu0 %v2573
        %2575 = vperm.xlu0 %2574, %v2041
        %v2576 = vpop.permute.xlu0 %2575
        %v2577 = vlaneseq
        %v2578 = vshrl.u32 %v2577, 7
        %v2579 = vadd.s32 %v2578, 16
        %2580 = vset.pattern.permute.xlu0 %v2579
        %2581 = vperm.xlu0 %2580, %v2041
        %v2582 = vpop.permute.xlu0 %2581
        %v2583 = vlaneseq
        %v2584 = vshrl.u32 %v2583, 7
        %v2585 = vadd.s32 %v2584, 24
        %2586 = vset.pattern.permute.xlu0 %v2585
        %2587 = vperm.xlu0 %2586, %v2041
        %v2588 = vpop.permute.xlu0 %2587
        %v2589 = vlaneseq
        %v2590 = vshrl.u32 %v2589, 7
        %v2591 = vadd.s32 %v2590, 32
        %2592 = vset.pattern.permute.xlu0 %v2591
        %2593 = vperm.xlu0 %2592, %v2041
        %v2594 = vpop.permute.xlu0 %2593
        %v2595 = vlaneseq
        %v2596 = vshrl.u32 %v2595, 7
        %v2597 = vadd.s32 %v2596, 40
        %2598 = vset.pattern.permute.xlu0 %v2597
        %2599 = vperm.xlu0 %2598, %v2041
        %v2600 = vpop.permute.xlu0 %2599
        %v2601 = vlaneseq
        %v2602 = vshrl.u32 %v2601, 7
        %v2603 = vadd.s32 %v2602, 48
        %2604 = vset.pattern.permute.xlu0 %v2603
        %2605 = vperm.xlu0 %2604, %v2041
        %v2606 = vpop.permute.xlu0 %2605
        %v2607 = vlaneseq
        %v2608 = vshrl.u32 %v2607, 7
        %v2609 = vadd.s32 %v2608, 56
        %2610 = vset.pattern.permute.xlu0 %v2609
        %2611 = vperm.xlu0 %2610, %v2041
        %v2612 = vpop.permute.xlu0 %2611
        %v2613 = vlaneseq
        %v2614 = vshrl.u32 %v2613, 7
        %v2615 = vadd.s32 %v2614, 64
        %2616 = vset.pattern.permute.xlu0 %v2615
        %2617 = vperm.xlu0 %2616, %v2041
        %v2618 = vpop.permute.xlu0 %2617
        %v2619 = vlaneseq
        %v2620 = vshrl.u32 %v2619, 7
        %v2621 = vadd.s32 %v2620, 72
        %2622 = vset.pattern.permute.xlu0 %v2621
        %2623 = vperm.xlu0 %2622, %v2041
        %v2624 = vpop.permute.xlu0 %2623
        %v2625 = vlaneseq
        %v2626 = vshrl.u32 %v2625, 7
        %v2627 = vadd.s32 %v2626, 80
        %2628 = vset.pattern.permute.xlu0 %v2627
        %2629 = vperm.xlu0 %2628, %v2041
        %v2630 = vpop.permute.xlu0 %2629
        %v2631 = vlaneseq
        %v2632 = vshrl.u32 %v2631, 7
        %v2633 = vadd.s32 %v2632, 88
        %2634 = vset.pattern.permute.xlu0 %v2633
        %2635 = vperm.xlu0 %2634, %v2041
        %v2636 = vpop.permute.xlu0 %2635
        %v2637 = vlaneseq
        %v2638 = vshrl.u32 %v2637, 7
        %v2639 = vadd.s32 %v2638, 96
        %2640 = vset.pattern.permute.xlu0 %v2639
        %2641 = vperm.xlu0 %2640, %v2041
        %v2642 = vpop.permute.xlu0 %2641
        %v2643 = vlaneseq
        %v2644 = vshrl.u32 %v2643, 7
        %v2645 = vadd.s32 %v2644, 104
        %2646 = vset.pattern.permute.xlu0 %v2645
        %2647 = vperm.xlu0 %2646, %v2041
        %v2648 = vpop.permute.xlu0 %2647
        %v2649 = vlaneseq
        %v2650 = vshrl.u32 %v2649, 7
        %v2651 = vadd.s32 %v2650, 112
        %2652 = vset.pattern.permute.xlu0 %v2651
        %2653 = vperm.xlu0 %2652, %v2041
        %v2654 = vpop.permute.xlu0 %2653
        %v2655 = vlaneseq
        %v2656 = vshrl.u32 %v2655, 7
        %v2657 = vadd.s32 %v2656, 120
        %2658 = vset.pattern.permute.xlu0 %v2657
        %2659 = vperm.xlu0 %2658, %v2041
        %v2660 = vpop.permute.xlu0 %2659
        %v2661 = vlaneseq
        %v2662 = vshrl.u32 %v2661, 7
        %2664 = vset.pattern.permute.xlu0 %v2662
        %2665 = vperm.xlu0 %2664, %v2062
        %v2666 = vpop.permute.xlu0 %2665
        %v2667 = vlaneseq
        %v2668 = vshrl.u32 %v2667, 7
        %v2669 = vadd.s32 %v2668, 8
        %2670 = vset.pattern.permute.xlu0 %v2669
        %2671 = vperm.xlu0 %2670, %v2062
        %v2672 = vpop.permute.xlu0 %2671
        %v2673 = vlaneseq
        %v2674 = vshrl.u32 %v2673, 7
        %v2675 = vadd.s32 %v2674, 16
        %2676 = vset.pattern.permute.xlu0 %v2675
        %2677 = vperm.xlu0 %2676, %v2062
        %v2678 = vpop.permute.xlu0 %2677
        %v2679 = vlaneseq
        %v2680 = vshrl.u32 %v2679, 7
        %v2681 = vadd.s32 %v2680, 24
        %2682 = vset.pattern.permute.xlu0 %v2681
        %2683 = vperm.xlu0 %2682, %v2062
        %v2684 = vpop.permute.xlu0 %2683
        %v2685 = vlaneseq
        %v2686 = vshrl.u32 %v2685, 7
        %v2687 = vadd.s32 %v2686, 32
        %2688 = vset.pattern.permute.xlu0 %v2687
        %2689 = vperm.xlu0 %2688, %v2062
        %v2690 = vpop.permute.xlu0 %2689
        %v2691 = vlaneseq
        %v2692 = vshrl.u32 %v2691, 7
        %v2693 = vadd.s32 %v2692, 40
        %2694 = vset.pattern.permute.xlu0 %v2693
        %2695 = vperm.xlu0 %2694, %v2062
        %v2696 = vpop.permute.xlu0 %2695
        %v2697 = vlaneseq
        %v2698 = vshrl.u32 %v2697, 7
        %v2699 = vadd.s32 %v2698, 48
        %2700 = vset.pattern.permute.xlu0 %v2699
        %2701 = vperm.xlu0 %2700, %v2062
        %v2702 = vpop.permute.xlu0 %2701
        %v2703 = vlaneseq
        %v2704 = vshrl.u32 %v2703, 7
        %v2705 = vadd.s32 %v2704, 56
        %2706 = vset.pattern.permute.xlu0 %v2705
        %2707 = vperm.xlu0 %2706, %v2062
        %v2708 = vpop.permute.xlu0 %2707
        %v2709 = vlaneseq
        %v2710 = vshrl.u32 %v2709, 7
        %v2711 = vadd.s32 %v2710, 64
        %2712 = vset.pattern.permute.xlu0 %v2711
        %2713 = vperm.xlu0 %2712, %v2062
        %v2714 = vpop.permute.xlu0 %2713
        %v2715 = vlaneseq
        %v2716 = vshrl.u32 %v2715, 7
        %v2717 = vadd.s32 %v2716, 72
        %2718 = vset.pattern.permute.xlu0 %v2717
        %2719 = vperm.xlu0 %2718, %v2062
        %v2720 = vpop.permute.xlu0 %2719
        %v2721 = vlaneseq
        %v2722 = vshrl.u32 %v2721, 7
        %v2723 = vadd.s32 %v2722, 80
        %2724 = vset.pattern.permute.xlu0 %v2723
        %2725 = vperm.xlu0 %2724, %v2062
        %v2726 = vpop.permute.xlu0 %2725
        %v2727 = vlaneseq
        %v2728 = vshrl.u32 %v2727, 7
        %v2729 = vadd.s32 %v2728, 88
        %2730 = vset.pattern.permute.xlu0 %v2729
        %2731 = vperm.xlu0 %2730, %v2062
        %v2732 = vpop.permute.xlu0 %2731
        %v2733 = vlaneseq
        %v2734 = vshrl.u32 %v2733, 7
        %v2735 = vadd.s32 %v2734, 96
        %2736 = vset.pattern.permute.xlu0 %v2735
        %2737 = vperm.xlu0 %2736, %v2062
        %v2738 = vpop.permute.xlu0 %2737
        %v2739 = vlaneseq
        %v2740 = vshrl.u32 %v2739, 7
        %v2741 = vadd.s32 %v2740, 104
        %2742 = vset.pattern.permute.xlu0 %v2741
        %2743 = vperm.xlu0 %2742, %v2062
        %v2744 = vpop.permute.xlu0 %2743
        %v2745 = vlaneseq
        %v2746 = vshrl.u32 %v2745, 7
        %v2747 = vadd.s32 %v2746, 112
        %2748 = vset.pattern.permute.xlu0 %v2747
        %2749 = vperm.xlu0 %2748, %v2062
        %v2750 = vpop.permute.xlu0 %2749
        %v2751 = vlaneseq
        %v2752 = vshrl.u32 %v2751, 7
        %v2753 = vadd.s32 %v2752, 120
        %2754 = vset.pattern.permute.xlu0 %v2753
        %2755 = vperm.xlu0 %2754, %v2062
        %v2756 = vpop.permute.xlu0 %2755
        %v2757 = vlaneseq
        %v2758 = vshrl.u32 %v2757, 7
        %2760 = vset.pattern.permute.xlu0 %v2758
        %2761 = vperm.xlu0 %2760, %v2083
        %v2762 = vpop.permute.xlu0 %2761
        %v2763 = vlaneseq
        %v2764 = vshrl.u32 %v2763, 7
        %v2765 = vadd.s32 %v2764, 8
        %2766 = vset.pattern.permute.xlu0 %v2765
        %2767 = vperm.xlu0 %2766, %v2083
        %v2768 = vpop.permute.xlu0 %2767
        %v2769 = vlaneseq
        %v2770 = vshrl.u32 %v2769, 7
        %v2771 = vadd.s32 %v2770, 16
        %2772 = vset.pattern.permute.xlu0 %v2771
        %2773 = vperm.xlu0 %2772, %v2083
        %v2774 = vpop.permute.xlu0 %2773
        %v2775 = vlaneseq
        %v2776 = vshrl.u32 %v2775, 7
        %v2777 = vadd.s32 %v2776, 24
        %2778 = vset.pattern.permute.xlu0 %v2777
        %2779 = vperm.xlu0 %2778, %v2083
        %v2780 = vpop.permute.xlu0 %2779
        %v2781 = vlaneseq
        %v2782 = vshrl.u32 %v2781, 7
        %v2783 = vadd.s32 %v2782, 32
        %2784 = vset.pattern.permute.xlu0 %v2783
        %2785 = vperm.xlu0 %2784, %v2083
        %v2786 = vpop.permute.xlu0 %2785
        %v2787 = vlaneseq
        %v2788 = vshrl.u32 %v2787, 7
        %v2789 = vadd.s32 %v2788, 40
        %2790 = vset.pattern.permute.xlu0 %v2789
        %2791 = vperm.xlu0 %2790, %v2083
        %v2792 = vpop.permute.xlu0 %2791
        %v2793 = vlaneseq
        %v2794 = vshrl.u32 %v2793, 7
        %v2795 = vadd.s32 %v2794, 48
        %2796 = vset.pattern.permute.xlu0 %v2795
        %2797 = vperm.xlu0 %2796, %v2083
        %v2798 = vpop.permute.xlu0 %2797
        %v2799 = vlaneseq
        %v2800 = vshrl.u32 %v2799, 7
        %v2801 = vadd.s32 %v2800, 56
        %2802 = vset.pattern.permute.xlu0 %v2801
        %2803 = vperm.xlu0 %2802, %v2083
        %v2804 = vpop.permute.xlu0 %2803
        %v2805 = vlaneseq
        %v2806 = vshrl.u32 %v2805, 7
        %v2807 = vadd.s32 %v2806, 64
        %2808 = vset.pattern.permute.xlu0 %v2807
        %2809 = vperm.xlu0 %2808, %v2083
        %v2810 = vpop.permute.xlu0 %2809
        %v2811 = vlaneseq
        %v2812 = vshrl.u32 %v2811, 7
        %v2813 = vadd.s32 %v2812, 72
        %2814 = vset.pattern.permute.xlu0 %v2813
        %2815 = vperm.xlu0 %2814, %v2083
        %v2816 = vpop.permute.xlu0 %2815
        %v2817 = vlaneseq
        %v2818 = vshrl.u32 %v2817, 7
        %v2819 = vadd.s32 %v2818, 80
        %2820 = vset.pattern.permute.xlu0 %v2819
        %2821 = vperm.xlu0 %2820, %v2083
        %v2822 = vpop.permute.xlu0 %2821
        %v2823 = vlaneseq
        %v2824 = vshrl.u32 %v2823, 7
        %v2825 = vadd.s32 %v2824, 88
        %2826 = vset.pattern.permute.xlu0 %v2825
        %2827 = vperm.xlu0 %2826, %v2083
        %v2828 = vpop.permute.xlu0 %2827
        %v2829 = vlaneseq
        %v2830 = vshrl.u32 %v2829, 7
        %v2831 = vadd.s32 %v2830, 96
        %2832 = vset.pattern.permute.xlu0 %v2831
        %2833 = vperm.xlu0 %2832, %v2083
        %v2834 = vpop.permute.xlu0 %2833
        %v2835 = vlaneseq
        %v2836 = vshrl.u32 %v2835, 7
        %v2837 = vadd.s32 %v2836, 104
        %2838 = vset.pattern.permute.xlu0 %v2837
        %2839 = vperm.xlu0 %2838, %v2083
        %v2840 = vpop.permute.xlu0 %2839
        %v2841 = vlaneseq
        %v2842 = vshrl.u32 %v2841, 7
        %v2843 = vadd.s32 %v2842, 112
        %2844 = vset.pattern.permute.xlu0 %v2843
        %2845 = vperm.xlu0 %2844, %v2083
        %v2846 = vpop.permute.xlu0 %2845
        %v2847 = vlaneseq
        %v2848 = vshrl.u32 %v2847, 7
        %v2849 = vadd.s32 %v2848, 120
        %2850 = vset.pattern.permute.xlu0 %v2849
        %2851 = vperm.xlu0 %2850, %v2083
        %v2852 = vpop.permute.xlu0 %2851
        %vm2853 = vcmp.eq.f32.partialorder %v2090, %v2084
        %vm2854 = vcmp.eq.f32.partialorder %v2096, %v2084
        %vm2855 = vcmp.eq.f32.partialorder %v2102, %v2084
        %vm2856 = vcmp.eq.f32.partialorder %v2108, %v2084
        %vm2857 = vcmp.eq.f32.partialorder %v2114, %v2084
        %vm2858 = vcmp.eq.f32.partialorder %v2120, %v2084
        %vm2859 = vcmp.eq.f32.partialorder %v2126, %v2084
        %vm2860 = vcmp.eq.f32.partialorder %v2132, %v2084
        %vm2861 = vcmp.eq.f32.partialorder %v2138, %v2084
        %vm2862 = vcmp.eq.f32.partialorder %v2144, %v2084
        %vm2863 = vcmp.eq.f32.partialorder %v2150, %v2084
        %vm2864 = vcmp.eq.f32.partialorder %v2156, %v2084
        %vm2865 = vcmp.eq.f32.partialorder %v2162, %v2084
        %vm2866 = vcmp.eq.f32.partialorder %v2168, %v2084
        %vm2867 = vcmp.eq.f32.partialorder %v2174, %v2084
        %vm2868 = vcmp.eq.f32.partialorder %v2180, %v2084
        %vm2869 = vcmp.eq.f32.partialorder %v2186, %v2084
        %vm2870 = vcmp.eq.f32.partialorder %v2192, %v2084
        %vm2871 = vcmp.eq.f32.partialorder %v2198, %v2084
        %vm2872 = vcmp.eq.f32.partialorder %v2204, %v2084
        %vm2873 = vcmp.eq.f32.partialorder %v2210, %v2084
        %vm2874 = vcmp.eq.f32.partialorder %v2216, %v2084
        %vm2875 = vcmp.eq.f32.partialorder %v2222, %v2084
        %vm2876 = vcmp.eq.f32.partialorder %v2228, %v2084
        %vm2877 = vcmp.eq.f32.partialorder %v2234, %v2084
        %vm2878 = vcmp.eq.f32.partialorder %v2240, %v2084
        %vm2879 = vcmp.eq.f32.partialorder %v2246, %v2084
        %vm2880 = vcmp.eq.f32.partialorder %v2252, %v2084
        %vm2881 = vcmp.eq.f32.partialorder %v2258, %v2084
        %vm2882 = vcmp.eq.f32.partialorder %v2264, %v2084
        %vm2883 = vcmp.eq.f32.partialorder %v2270, %v2084
        %vm2884 = vcmp.eq.f32.partialorder %v2276, %v2084
        %vm2885 = vcmp.eq.f32.partialorder %v2282, %v2084
        %vm2886 = vcmp.eq.f32.partialorder %v2288, %v2084
        %vm2887 = vcmp.eq.f32.partialorder %v2294, %v2084
        %vm2888 = vcmp.eq.f32.partialorder %v2300, %v2084
        %vm2889 = vcmp.eq.f32.partialorder %v2306, %v2084
        %vm2890 = vcmp.eq.f32.partialorder %v2312, %v2084
        %vm2891 = vcmp.eq.f32.partialorder %v2318, %v2084
        %vm2892 = vcmp.eq.f32.partialorder %v2324, %v2084
        %vm2893 = vcmp.eq.f32.partialorder %v2330, %v2084
        %vm2894 = vcmp.eq.f32.partialorder %v2336, %v2084
        %vm2895 = vcmp.eq.f32.partialorder %v2342, %v2084
        %vm2896 = vcmp.eq.f32.partialorder %v2348, %v2084
        %vm2897 = vcmp.eq.f32.partialorder %v2354, %v2084
        %vm2898 = vcmp.eq.f32.partialorder %v2360, %v2084
        %vm2899 = vcmp.eq.f32.partialorder %v2366, %v2084
        %vm2900 = vcmp.eq.f32.partialorder %v2372, %v2084
        %vm2901 = vcmp.eq.f32.partialorder %v2378, %v2084
        %vm2902 = vcmp.eq.f32.partialorder %v2384, %v2084
        %vm2903 = vcmp.eq.f32.partialorder %v2390, %v2084
        %vm2904 = vcmp.eq.f32.partialorder %v2396, %v2084
        %vm2905 = vcmp.eq.f32.partialorder %v2402, %v2084
        %vm2906 = vcmp.eq.f32.partialorder %v2408, %v2084
        %vm2907 = vcmp.eq.f32.partialorder %v2414, %v2084
        %vm2908 = vcmp.eq.f32.partialorder %v2420, %v2084
        %vm2909 = vcmp.eq.f32.partialorder %v2426, %v2084
        %vm2910 = vcmp.eq.f32.partialorder %v2432, %v2084
        %vm2911 = vcmp.eq.f32.partialorder %v2438, %v2084
        %vm2912 = vcmp.eq.f32.partialorder %v2444, %v2084
        %vm2913 = vcmp.eq.f32.partialorder %v2450, %v2084
        %vm2914 = vcmp.eq.f32.partialorder %v2456, %v2084
        %vm2915 = vcmp.eq.f32.partialorder %v2462, %v2084
        %vm2916 = vcmp.eq.f32.partialorder %v2468, %v2084
        %vm2917 = vcmp.eq.f32.partialorder %v2474, %v2084
        %vm2918 = vcmp.eq.f32.partialorder %v2480, %v2084
        %vm2919 = vcmp.eq.f32.partialorder %v2486, %v2084
        %vm2920 = vcmp.eq.f32.partialorder %v2492, %v2084
        %vm2921 = vcmp.eq.f32.partialorder %v2498, %v2084
        %vm2922 = vcmp.eq.f32.partialorder %v2504, %v2084
        %vm2923 = vcmp.eq.f32.partialorder %v2510, %v2084
        %vm2924 = vcmp.eq.f32.partialorder %v2516, %v2084
        %vm2925 = vcmp.eq.f32.partialorder %v2522, %v2084
        %vm2926 = vcmp.eq.f32.partialorder %v2528, %v2084
        %vm2927 = vcmp.eq.f32.partialorder %v2534, %v2084
        %vm2928 = vcmp.eq.f32.partialorder %v2540, %v2084
        %vm2929 = vcmp.eq.f32.partialorder %v2546, %v2084
        %vm2930 = vcmp.eq.f32.partialorder %v2552, %v2084
        %vm2931 = vcmp.eq.f32.partialorder %v2558, %v2084
        %vm2932 = vcmp.eq.f32.partialorder %v2564, %v2084
        %vm2933 = vcmp.eq.f32.partialorder %v2570, %v2084
        %vm2934 = vcmp.eq.f32.partialorder %v2576, %v2084
        %vm2935 = vcmp.eq.f32.partialorder %v2582, %v2084
        %vm2936 = vcmp.eq.f32.partialorder %v2588, %v2084
        %vm2937 = vcmp.eq.f32.partialorder %v2594, %v2084
        %vm2938 = vcmp.eq.f32.partialorder %v2600, %v2084
        %vm2939 = vcmp.eq.f32.partialorder %v2606, %v2084
        %vm2940 = vcmp.eq.f32.partialorder %v2612, %v2084
        %vm2941 = vcmp.eq.f32.partialorder %v2618, %v2084
        %vm2942 = vcmp.eq.f32.partialorder %v2624, %v2084
        %vm2943 = vcmp.eq.f32.partialorder %v2630, %v2084
        %vm2944 = vcmp.eq.f32.partialorder %v2636, %v2084
        %vm2945 = vcmp.eq.f32.partialorder %v2642, %v2084
        %vm2946 = vcmp.eq.f32.partialorder %v2648, %v2084
        %vm2947 = vcmp.eq.f32.partialorder %v2654, %v2084
        %vm2948 = vcmp.eq.f32.partialorder %v2660, %v2084
        %vm2949 = vcmp.eq.f32.partialorder %v2666, %v2084
        %vm2950 = vcmp.eq.f32.partialorder %v2672, %v2084
        %vm2951 = vcmp.eq.f32.partialorder %v2678, %v2084
        %vm2952 = vcmp.eq.f32.partialorder %v2684, %v2084
        %vm2953 = vcmp.eq.f32.partialorder %v2690, %v2084
        %vm2954 = vcmp.eq.f32.partialorder %v2696, %v2084
        %vm2955 = vcmp.eq.f32.partialorder %v2702, %v2084
        %vm2956 = vcmp.eq.f32.partialorder %v2708, %v2084
        %vm2957 = vcmp.eq.f32.partialorder %v2714, %v2084
        %vm2958 = vcmp.eq.f32.partialorder %v2720, %v2084
        %vm2959 = vcmp.eq.f32.partialorder %v2726, %v2084
        %vm2960 = vcmp.eq.f32.partialorder %v2732, %v2084
        %vm2961 = vcmp.eq.f32.partialorder %v2738, %v2084
        %vm2962 = vcmp.eq.f32.partialorder %v2744, %v2084
        %vm2963 = vcmp.eq.f32.partialorder %v2750, %v2084
        %vm2964 = vcmp.eq.f32.partialorder %v2756, %v2084
        %vm2965 = vcmp.eq.f32.partialorder %v2762, %v2084
        %vm2966 = vcmp.eq.f32.partialorder %v2768, %v2084
        %vm2967 = vcmp.eq.f32.partialorder %v2774, %v2084
        %vm2968 = vcmp.eq.f32.partialorder %v2780, %v2084
        %vm2969 = vcmp.eq.f32.partialorder %v2786, %v2084
        %vm2970 = vcmp.eq.f32.partialorder %v2792, %v2084
        %vm2971 = vcmp.eq.f32.partialorder %v2798, %v2084
        %vm2972 = vcmp.eq.f32.partialorder %v2804, %v2084
        %vm2973 = vcmp.eq.f32.partialorder %v2810, %v2084
        %vm2974 = vcmp.eq.f32.partialorder %v2816, %v2084
        %vm2975 = vcmp.eq.f32.partialorder %v2822, %v2084
        %vm2976 = vcmp.eq.f32.partialorder %v2828, %v2084
        %vm2977 = vcmp.eq.f32.partialorder %v2834, %v2084
        %vm2978 = vcmp.eq.f32.partialorder %v2840, %v2084
        %vm2979 = vcmp.eq.f32.partialorder %v2846, %v2084
        %vm2980 = vcmp.eq.f32.partialorder %v2852, %v2084
        %v2981 = vsel %vm2853, %v322, 0.0
        %v2982 = vsel %vm2854, %v328, 0.0
        %v2983 = vsel %vm2855, %v334, 0.0
        %v2984 = vsel %vm2856, %v340, 0.0
        %v2985 = vsel %vm2857, %v346, 0.0
        %v2986 = vsel %vm2858, %v352, 0.0
        %v2987 = vsel %vm2859, %v358, 0.0
        %v2988 = vsel %vm2860, %v364, 0.0
        %v2989 = vsel %vm2861, %v370, 0.0
        %v2990 = vsel %vm2862, %v376, 0.0
        %v2991 = vsel %vm2863, %v382, 0.0
        %v2992 = vsel %vm2864, %v388, 0.0
        %v2993 = vsel %vm2865, %v394, 0.0
        %v2994 = vsel %vm2866, %v400, 0.0
        %v2995 = vsel %vm2867, %v406, 0.0
        %v2996 = vsel %vm2868, %v412, 0.0
        %v2997 = vsel %vm2869, %v419, 0.0
        %v2998 = vsel %vm2870, %v425, 0.0
        %v2999 = vsel %vm2871, %v431, 0.0
        %v3000 = vsel %vm2872, %v437, 0.0
        %v3001 = vsel %vm2873, %v443, 0.0
        %v3002 = vsel %vm2874, %v449, 0.0
        %v3003 = vsel %vm2875, %v455, 0.0
        %v3004 = vsel %vm2876, %v461, 0.0
        %v3005 = vsel %vm2877, %v467, 0.0
        %v3006 = vsel %vm2878, %v473, 0.0
        %v3007 = vsel %vm2879, %v479, 0.0
        %v3008 = vsel %vm2880, %v485, 0.0
        %v3009 = vsel %vm2881, %v491, 0.0
        %v3010 = vsel %vm2882, %v497, 0.0
        %v3011 = vsel %vm2883, %v503, 0.0
        %v3012 = vsel %vm2884, %v509, 0.0
        %v3013 = vsel %vm2885, %v516, 0.0
        %v3014 = vsel %vm2886, %v522, 0.0
        %v3015 = vsel %vm2887, %v528, 0.0
        %v3016 = vsel %vm2888, %v534, 0.0
        %v3017 = vsel %vm2889, %v540, 0.0
        %v3018 = vsel %vm2890, %v546, 0.0
        %v3019 = vsel %vm2891, %v552, 0.0
        %v3020 = vsel %vm2892, %v558, 0.0
        %v3021 = vsel %vm2893, %v564, 0.0
        %v3022 = vsel %vm2894, %v570, 0.0
        %v3023 = vsel %vm2895, %v576, 0.0
        %v3024 = vsel %vm2896, %v582, 0.0
        %v3025 = vsel %vm2897, %v588, 0.0
        %v3026 = vsel %vm2898, %v594, 0.0
        %v3027 = vsel %vm2899, %v600, 0.0
        %v3028 = vsel %vm2900, %v606, 0.0
        %v3029 = vsel %vm2901, %v613, 0.0
        %v3030 = vsel %vm2902, %v619, 0.0
        %v3031 = vsel %vm2903, %v625, 0.0
        %v3032 = vsel %vm2904, %v631, 0.0
        %v3033 = vsel %vm2905, %v637, 0.0
        %v3034 = vsel %vm2906, %v643, 0.0
        %v3035 = vsel %vm2907, %v649, 0.0
        %v3036 = vsel %vm2908, %v655, 0.0
        %v3037 = vsel %vm2909, %v661, 0.0
        %v3038 = vsel %vm2910, %v667, 0.0
        %v3039 = vsel %vm2911, %v673, 0.0
        %v3040 = vsel %vm2912, %v679, 0.0
        %v3041 = vsel %vm2913, %v685, 0.0
        %v3042 = vsel %vm2914, %v691, 0.0
        %v3043 = vsel %vm2915, %v697, 0.0
        %v3044 = vsel %vm2916, %v703, 0.0
        %v3045 = vsel %vm2917, %v710, 0.0
        %v3046 = vsel %vm2918, %v716, 0.0
        %v3047 = vsel %vm2919, %v722, 0.0
        %v3048 = vsel %vm2920, %v728, 0.0
        %v3049 = vsel %vm2921, %v734, 0.0
        %v3050 = vsel %vm2922, %v740, 0.0
        %v3051 = vsel %vm2923, %v746, 0.0
        %v3052 = vsel %vm2924, %v752, 0.0
        %v3053 = vsel %vm2925, %v758, 0.0
        %v3054 = vsel %vm2926, %v764, 0.0
        %v3055 = vsel %vm2927, %v770, 0.0
        %v3056 = vsel %vm2928, %v776, 0.0
        %v3057 = vsel %vm2929, %v782, 0.0
        %v3058 = vsel %vm2930, %v788, 0.0
        %v3059 = vsel %vm2931, %v794, 0.0
        %v3060 = vsel %vm2932, %v800, 0.0
        %v3061 = vsel %vm2933, %v807, 0.0
        %v3062 = vsel %vm2934, %v813, 0.0
        %v3063 = vsel %vm2935, %v819, 0.0
        %v3064 = vsel %vm2936, %v825, 0.0
        %v3065 = vsel %vm2937, %v831, 0.0
        %v3066 = vsel %vm2938, %v837, 0.0
        %v3067 = vsel %vm2939, %v843, 0.0
        %v3068 = vsel %vm2940, %v849, 0.0
        %v3069 = vsel %vm2941, %v855, 0.0
        %v3070 = vsel %vm2942, %v861, 0.0
        %v3071 = vsel %vm2943, %v867, 0.0
        %v3072 = vsel %vm2944, %v873, 0.0
        %v3073 = vsel %vm2945, %v879, 0.0
        %v3074 = vsel %vm2946, %v885, 0.0
        %v3075 = vsel %vm2947, %v891, 0.0
        %v3076 = vsel %vm2948, %v897, 0.0
        %v3077 = vsel %vm2949, %v904, 0.0
        %v3078 = vsel %vm2950, %v910, 0.0
        %v3079 = vsel %vm2951, %v916, 0.0
        %v3080 = vsel %vm2952, %v922, 0.0
        %v3081 = vsel %vm2953, %v928, 0.0
        %v3082 = vsel %vm2954, %v934, 0.0
        %v3083 = vsel %vm2955, %v940, 0.0
        %v3084 = vsel %vm2956, %v946, 0.0
        %v3085 = vsel %vm2957, %v952, 0.0
        %v3086 = vsel %vm2958, %v958, 0.0
        %v3087 = vsel %vm2959, %v964, 0.0
        %v3088 = vsel %vm2960, %v970, 0.0
        %v3089 = vsel %vm2961, %v976, 0.0
        %v3090 = vsel %vm2962, %v982, 0.0
        %v3091 = vsel %vm2963, %v988, 0.0
        %v3092 = vsel %vm2964, %v994, 0.0
        %v3093 = vsel %vm2965, %v1001, 0.0
        %v3094 = vsel %vm2966, %v1007, 0.0
        %v3095 = vsel %vm2967, %v1013, 0.0
        %v3096 = vsel %vm2968, %v1019, 0.0
        %v3097 = vsel %vm2969, %v1025, 0.0
        %v3098 = vsel %vm2970, %v1031, 0.0
        %v3099 = vsel %vm2971, %v1037, 0.0
        %v3100 = vsel %vm2972, %v1043, 0.0
        %v3101 = vsel %vm2973, %v1049, 0.0
        %v3102 = vsel %vm2974, %v1055, 0.0
        %v3103 = vsel %vm2975, %v1061, 0.0
        %v3104 = vsel %vm2976, %v1067, 0.0
        %v3105 = vsel %vm2977, %v1073, 0.0
        %v3106 = vsel %vm2978, %v1079, 0.0
        %v3107 = vsel %vm2979, %v1085, 0.0
        %v3108 = vsel %vm2980, %v1091, 0.0
        %v3109 = vadd.f32 %v2981, %v2982
        %v3110 = vadd.f32 %v3109, %v2983
        %v3111 = vadd.f32 %v3110, %v2984
        %v3112 = vadd.f32 %v3111, %v2985
        %v3113 = vadd.f32 %v3112, %v2986
        %v3114 = vadd.f32 %v3113, %v2987
        %v3115 = vadd.f32 %v3114, %v2988
        %v3116 = vadd.f32 %v3115, %v2989
        %v3117 = vadd.f32 %v3116, %v2990
        %v3118 = vadd.f32 %v3117, %v2991
        %v3119 = vadd.f32 %v3118, %v2992
        %v3120 = vadd.f32 %v3119, %v2993
        %v3121 = vadd.f32 %v3120, %v2994
        %v3122 = vadd.f32 %v3121, %v2995
        %v3123 = vadd.f32 %v3122, %v2996
        %v3124 = vrot.slane %v3123, 4
        %v3125 = vadd.f32 %v3123, %v3124
        %v3126 = vrot.slane %v3125, 2
        %v3127 = vadd.f32 %v3125, %v3126
        %v3128 = vrot.slane %v3127, 1
        %v3129 = vadd.f32 %v3127, %v3128
        %v3130 = vadd.f32 %v2997, %v2998
        %v3131 = vadd.f32 %v3130, %v2999
        %v3132 = vadd.f32 %v3131, %v3000
        %v3133 = vadd.f32 %v3132, %v3001
        %v3134 = vadd.f32 %v3133, %v3002
        %v3135 = vadd.f32 %v3134, %v3003
        %v3136 = vadd.f32 %v3135, %v3004
        %v3137 = vadd.f32 %v3136, %v3005
        %v3138 = vadd.f32 %v3137, %v3006
        %v3139 = vadd.f32 %v3138, %v3007
        %v3140 = vadd.f32 %v3139, %v3008
        %v3141 = vadd.f32 %v3140, %v3009
        %v3142 = vadd.f32 %v3141, %v3010
        %v3143 = vadd.f32 %v3142, %v3011
        %v3144 = vadd.f32 %v3143, %v3012
        %v3145 = vrot.slane %v3144, 4
        %v3146 = vadd.f32 %v3144, %v3145
        %v3147 = vrot.slane %v3146, 2
        %v3148 = vadd.f32 %v3146, %v3147
        %v3149 = vrot.slane %v3148, 1
        %v3150 = vadd.f32 %v3148, %v3149
        %v3151 = vadd.f32 %v3013, %v3014
        %v3152 = vadd.f32 %v3151, %v3015
        %v3153 = vadd.f32 %v3152, %v3016
        %v3154 = vadd.f32 %v3153, %v3017
        %v3155 = vadd.f32 %v3154, %v3018
        %v3156 = vadd.f32 %v3155, %v3019
        %v3157 = vadd.f32 %v3156, %v3020
        %v3158 = vadd.f32 %v3157, %v3021
        %v3159 = vadd.f32 %v3158, %v3022
        %v3160 = vadd.f32 %v3159, %v3023
        %v3161 = vadd.f32 %v3160, %v3024
        %v3162 = vadd.f32 %v3161, %v3025
        %v3163 = vadd.f32 %v3162, %v3026
        %v3164 = vadd.f32 %v3163, %v3027
        %v3165 = vadd.f32 %v3164, %v3028
        %v3166 = vrot.slane %v3165, 4
        %v3167 = vadd.f32 %v3165, %v3166
        %v3168 = vrot.slane %v3167, 2
        %v3169 = vadd.f32 %v3167, %v3168
        %v3170 = vrot.slane %v3169, 1
        %v3171 = vadd.f32 %v3169, %v3170
        %v3172 = vadd.f32 %v3029, %v3030
        %v3173 = vadd.f32 %v3172, %v3031
        %v3174 = vadd.f32 %v3173, %v3032
        %v3175 = vadd.f32 %v3174, %v3033
        %v3176 = vadd.f32 %v3175, %v3034
        %v3177 = vadd.f32 %v3176, %v3035
        %v3178 = vadd.f32 %v3177, %v3036
        %v3179 = vadd.f32 %v3178, %v3037
        %v3180 = vadd.f32 %v3179, %v3038
        %v3181 = vadd.f32 %v3180, %v3039
        %v3182 = vadd.f32 %v3181, %v3040
        %v3183 = vadd.f32 %v3182, %v3041
        %v3184 = vadd.f32 %v3183, %v3042
        %v3185 = vadd.f32 %v3184, %v3043
        %v3186 = vadd.f32 %v3185, %v3044
        %v3187 = vrot.slane %v3186, 4
        %v3188 = vadd.f32 %v3186, %v3187
        %v3189 = vrot.slane %v3188, 2
        %v3190 = vadd.f32 %v3188, %v3189
        %v3191 = vrot.slane %v3190, 1
        %v3192 = vadd.f32 %v3190, %v3191
        %v3193 = vadd.f32 %v3045, %v3046
        %v3194 = vadd.f32 %v3193, %v3047
        %v3195 = vadd.f32 %v3194, %v3048
        %v3196 = vadd.f32 %v3195, %v3049
        %v3197 = vadd.f32 %v3196, %v3050
        %v3198 = vadd.f32 %v3197, %v3051
        %v3199 = vadd.f32 %v3198, %v3052
        %v3200 = vadd.f32 %v3199, %v3053
        %v3201 = vadd.f32 %v3200, %v3054
        %v3202 = vadd.f32 %v3201, %v3055
        %v3203 = vadd.f32 %v3202, %v3056
        %v3204 = vadd.f32 %v3203, %v3057
        %v3205 = vadd.f32 %v3204, %v3058
        %v3206 = vadd.f32 %v3205, %v3059
        %v3207 = vadd.f32 %v3206, %v3060
        %v3208 = vrot.slane %v3207, 4
        %v3209 = vadd.f32 %v3207, %v3208
        %v3210 = vrot.slane %v3209, 2
        %v3211 = vadd.f32 %v3209, %v3210
        %v3212 = vrot.slane %v3211, 1
        %v3213 = vadd.f32 %v3211, %v3212
        %v3214 = vadd.f32 %v3061, %v3062
        %v3215 = vadd.f32 %v3214, %v3063
        %v3216 = vadd.f32 %v3215, %v3064
        %v3217 = vadd.f32 %v3216, %v3065
        %v3218 = vadd.f32 %v3217, %v3066
        %v3219 = vadd.f32 %v3218, %v3067
        %v3220 = vadd.f32 %v3219, %v3068
        %v3221 = vadd.f32 %v3220, %v3069
        %v3222 = vadd.f32 %v3221, %v3070
        %v3223 = vadd.f32 %v3222, %v3071
        %v3224 = vadd.f32 %v3223, %v3072
        %v3225 = vadd.f32 %v3224, %v3073
        %v3226 = vadd.f32 %v3225, %v3074
        %v3227 = vadd.f32 %v3226, %v3075
        %v3228 = vadd.f32 %v3227, %v3076
        %v3229 = vrot.slane %v3228, 4
        %v3230 = vadd.f32 %v3228, %v3229
        %v3231 = vrot.slane %v3230, 2
        %v3232 = vadd.f32 %v3230, %v3231
        %v3233 = vrot.slane %v3232, 1
        %v3234 = vadd.f32 %v3232, %v3233
        %v3235 = vadd.f32 %v3077, %v3078
        %v3236 = vadd.f32 %v3235, %v3079
        %v3237 = vadd.f32 %v3236, %v3080
        %v3238 = vadd.f32 %v3237, %v3081
        %v3239 = vadd.f32 %v3238, %v3082
        %v3240 = vadd.f32 %v3239, %v3083
        %v3241 = vadd.f32 %v3240, %v3084
        %v3242 = vadd.f32 %v3241, %v3085
        %v3243 = vadd.f32 %v3242, %v3086
        %v3244 = vadd.f32 %v3243, %v3087
        %v3245 = vadd.f32 %v3244, %v3088
        %v3246 = vadd.f32 %v3245, %v3089
        %v3247 = vadd.f32 %v3246, %v3090
        %v3248 = vadd.f32 %v3247, %v3091
        %v3249 = vadd.f32 %v3248, %v3092
        %v3250 = vrot.slane %v3249, 4
        %v3251 = vadd.f32 %v3249, %v3250
        %v3252 = vrot.slane %v3251, 2
        %v3253 = vadd.f32 %v3251, %v3252
        %v3254 = vrot.slane %v3253, 1
        %v3255 = vadd.f32 %v3253, %v3254
        %v3256 = vadd.f32 %v3093, %v3094
        %v3257 = vadd.f32 %v3256, %v3095
        %v3258 = vadd.f32 %v3257, %v3096
        %v3259 = vadd.f32 %v3258, %v3097
        %v3260 = vadd.f32 %v3259, %v3098
        %v3261 = vadd.f32 %v3260, %v3099
        %v3262 = vadd.f32 %v3261, %v3100
        %v3263 = vadd.f32 %v3262, %v3101
        %v3264 = vadd.f32 %v3263, %v3102
        %v3265 = vadd.f32 %v3264, %v3103
        %v3266 = vadd.f32 %v3265, %v3104
        %v3267 = vadd.f32 %v3266, %v3105
        %v3268 = vadd.f32 %v3267, %v3106
        %v3269 = vadd.f32 %v3268, %v3107
        %v3270 = vadd.f32 %v3269, %v3108
        %v3271 = vrot.slane %v3270, 4
        %v3272 = vadd.f32 %v3270, %v3271
        %v3273 = vrot.slane %v3272, 2
        %v3274 = vadd.f32 %v3272, %v3273
        %v3275 = vrot.slane %v3274, 1
        %v3276 = vadd.f32 %v3274, %v3275
        %vm3285 = vcmask 1041409
        %v3286 = vsel %vm3285, %v3150, %v3129
        %vm3287 = vcmask 1042434
        %v3288 = vsel %vm3287, %v3171, %v3286
        %vm3289 = vcmask 1043459
        %v3290 = vsel %vm3289, %v3192, %v3288
        %vm3291 = vcmask 1044484
        %v3292 = vsel %vm3291, %v3213, %v3290
        %vm3293 = vcmask 1045509
        %v3294 = vsel %vm3293, %v3234, %v3292
        %vm3295 = vcmask 1046534
        %v3296 = vsel %vm3295, %v3255, %v3294
        %vm3297 = vcmask 1047559
        %v3298 = vsel %vm3297, %v3276, %v3296
        %3300 = vrot.lane.b32.xlu0 %v3298, 1
        %v3301 = vpop.permute.xlu0 %3300
        %vm3302 = vcmp.eq.s32.totalorder %v299, 0
        %v3303 = vsel %vm3302, 1.0, %v3301
        %v3304 = vsub.f32 %v3303, %v3298
        %v3305 = vcvt.s32.f32 %v282
        %v3306 = vcvt.s32.f32 %v283
        %vm3307 = vcmp.lt.f32.partialorder %v1936, %v3305
        %vm3308 = vcmp.lt.f32.partialorder %v1936, %v3306
        %vm3309 = vcmp.lt.f32.partialorder %v1957, %v3305
        %vm3310 = vcmp.lt.f32.partialorder %v1957, %v3306
        %vm3311 = vcmp.lt.f32.partialorder %v1978, %v3305
        %vm3312 = vcmp.lt.f32.partialorder %v1978, %v3306
        %vm3313 = vcmp.lt.f32.partialorder %v1999, %v3305
        %vm3314 = vcmp.lt.f32.partialorder %v1999, %v3306
        %vm3315 = vcmp.lt.f32.partialorder %v2020, %v3305
        %vm3316 = vcmp.lt.f32.partialorder %v2020, %v3306
        %vm3317 = vcmp.lt.f32.partialorder %v2041, %v3305
        %vm3318 = vcmp.lt.f32.partialorder %v2041, %v3306
        %vm3319 = vcmp.lt.f32.partialorder %v2062, %v3305
        %vm3320 = vcmp.lt.f32.partialorder %v2062, %v3306
        %vm3321 = vcmp.lt.f32.partialorder %v2083, %v3305
        %vm3322 = vcmp.lt.f32.partialorder %v2083, %v3306
        %v3323 = vsel %vm3307, 1, 0
        %v3324 = vsel %vm3308, 1, 0
        %v3325 = vsel %vm3309, 1, 0
        %v3326 = vsel %vm3310, 1, 0
        %v3327 = vsel %vm3311, 1, 0
        %v3328 = vsel %vm3312, 1, 0
        %v3329 = vsel %vm3313, 1, 0
        %v3330 = vsel %vm3314, 1, 0
        %v3331 = vsel %vm3315, 1, 0
        %v3332 = vsel %vm3316, 1, 0
        %v3333 = vsel %vm3317, 1, 0
        %v3334 = vsel %vm3318, 1, 0
        %v3335 = vsel %vm3319, 1, 0
        %v3336 = vsel %vm3320, 1, 0
        %v3337 = vsel %vm3321, 1, 0
        %v3338 = vsel %vm3322, 1, 0
        %v3339 = vcvt.s32.f32 %v3323
        %v3340 = vcvt.s32.f32 %v3324
        %v3341 = vcvt.s32.f32 %v3325
        %v3342 = vcvt.s32.f32 %v3326
        %v3343 = vcvt.s32.f32 %v3327
        %v3344 = vcvt.s32.f32 %v3328
        %v3345 = vcvt.s32.f32 %v3329
        %v3346 = vcvt.s32.f32 %v3330
        %v3347 = vcvt.s32.f32 %v3331
        %v3348 = vcvt.s32.f32 %v3332
        %v3349 = vcvt.s32.f32 %v3333
        %v3350 = vcvt.s32.f32 %v3334
        %v3351 = vcvt.s32.f32 %v3335
        %v3352 = vcvt.s32.f32 %v3336
        %v3353 = vcvt.s32.f32 %v3337
        %v3354 = vcvt.s32.f32 %v3338
        %3355 = vst [vmem:[%s240] sm:$0xff] %v3339
        %3356 = vst [vmem:[%s240 + $0x8] sm:$0x1] %v3340
        %3357 = vst [vmem:[%s240 + $0x10] sm:$0xff] %v3341
        %3358 = vst [vmem:[%s240 + $0x18] sm:$0x1] %v3342
        %3359 = vst [vmem:[%s240 + $0x20] sm:$0xff] %v3343
        %3360 = vst [vmem:[%s240 + $0x28] sm:$0x1] %v3344
        %3361 = vst [vmem:[%s240 + $0x30] sm:$0xff] %v3345
        %3362 = vst [vmem:[%s240 + $0x38] sm:$0x1] %v3346
        %3363 = vst [vmem:[%s240 + $0x40] sm:$0xff] %v3347
        %3364 = vst [vmem:[%s240 + $0x48] sm:$0x1] %v3348
        %3365 = vst [vmem:[%s240 + $0x50] sm:$0xff] %v3349
        %3366 = vst [vmem:[%s240 + $0x58] sm:$0x1] %v3350
        %3367 = vst [vmem:[%s240 + $0x60] sm:$0xff] %v3351
        %3368 = vst [vmem:[%s240 + $0x68] sm:$0x1] %v3352
        %3369 = vst [vmem:[%s240 + $0x70] sm:$0xff] %v3353
        %3370 = vst [vmem:[%s240 + $0x78] sm:$0x1] %v3354
        %3371 = vst [vmem:[%s224] sm:$0xff] %v3304
        %vm3372 = vcmp.gt.f32.partialorder %v3304, 0.0
        %v3373 = vsel %vm3372, %v3304, 1.0
        %v3374 = vlog2.pop %v3373
        %v3375 = vmul.f32 %v3374, 0.6931472
        %v3376 = vmul.f32 %v3304, %v3375
        %v3377 = vsel %vm3372, %v3376, 0.0
        %3378 = vadd.xlane.f32.xlu0 %v3377
        %v3379 = vpop.xlane.xlu0 %3378
        %v3380 = vsub.f32 0.0, %v3379
        %vm3381 = vcmask 7168
        %3382 = vst.msk [vmem:[%s245] sm:$0xff] %vm3381, %v3380
        %s3383 = smul.u32 8, %s20
        %p3384 = scmp.lt.s32.totalorder %s3383, 15
        %s3385 = scalar_select %p3384, %s3383, 15
        %s3386 = smul.addr %s3385, 2
        %s3387 = smul.addr %s3386, 8
        %s3388 = scalar_lea.vmem %s3, %s3387
        %s3389 = sand.u32 %s122, 1
        %s3390 = scalar_lea.sflag [#allocation3], %s3389
        %s3391 = sand.u32 %s122, 1
        %s3392 = smul.addr %s3391, 8
        %s3393 = scalar_lea.vmem [#allocation2], %s3392
        %p3394 = scmp.lt.s32.totalorder %s20, 1
        %s3395 = scalar_select %p3394, %s20, 1
        %s3396 = smul.addr %s3395, 8
        %s3397 = scalar_lea.vmem %s5, %s3396
        // Predicated region
        $region33: #{sparsemap_forward.1} parent=31 // pred_check
          %p3398 = pneg %p106
        $region34: #{sparsemap_forward.1} parent=31 // pred_check_branch
          %3400 = sbr.rel (%p3398) target = $region36
        $region35: #{sparsemap_forward.1} parent=31 // pred_region
          %s3401 = smul.u32 8, %s20
        $region36: #{sparsemap_forward.1} parent=31 // pred_fallthru
          _
        // Predicated region
        $region37: #{sparsemap_forward.1} parent=31 // pred_check
          %p3402 = pneg %p132
        $region38: #{sparsemap_forward.1} parent=31 // pred_check_branch
          %3404 = sbr.rel (%p3402) target = $region40
        $region39: #{sparsemap_forward.1} parent=31 // pred_region
          %3406 = vsyncadd %s3390, 0
          %s3407 = smul.addr %s20, 8
          %s3408 = scalar_lea.hbm %s4, %s3407
          %s3410 = sshll.u32 %s3393, 4
          %s3411 = int_to_ptr.vmem [resolvable:$true] %s3410
          %s3412 = sshll.u32 %s3408, 4
          %s3413 = int_to_ptr.hbm [resolvable:$true] %s3412
          %3415 = dma.vmem_to_hbm [thread:$0]  %s3411, 128, %s3413, %s3390
        $region40: #{sparsemap_forward.1} parent=31 // pred_fallthru
          _
        // Predicated region
        $region41: #{sparsemap_forward.1} parent=31 // pred_check
          %p3416 = pneg %p158
        $region42: #{sparsemap_forward.1} parent=31 // pred_check_branch
          %3418 = sbr.rel (%p3416) target = $region44
        $region43: #{sparsemap_forward.1} parent=31 // pred_region
          _
        $region44: #{sparsemap_forward.1} parent=31 // pred_fallthru
          _
      $region32: #{sparsemap_forward.1} parent=5 // pred_fallthru
        _
      %p3419 = scmp.le.s32.totalorder 2, %s15
      // Predicated region
      $region45: #{sparsemap_forward.1} parent=5 // pred_check
        %p3420 = pneg %p3419
      $region46: #{sparsemap_forward.1} parent=5 // pred_check_branch
        %3422 = sbr.rel (%p3420) target = $region48
      $region47: #{sparsemap_forward.1} parent=5 // pred_region
        %s3423 = ssub.s32 %s15, 2
        // Predicated region
        $region49: #{sparsemap_forward.1} parent=47 // pred_check
          %p3424 = pneg %p112
        $region50: #{sparsemap_forward.1} parent=47 // pred_check_branch
          %3426 = sbr.rel (%p3424) target = $region52
        $region51: #{sparsemap_forward.1} parent=47 // pred_region
          %s3427 = smul.u32 8, %s21
          %p3428 = scmp.lt.s32.totalorder %s3427, 15
          %s3429 = scalar_select %p3428, %s3427, 15
          %s3430 = smul.addr %s3429, 2
          %s3431 = smul.addr %s3430, 8
          %s3432 = scalar_lea.vmem %s3, %s3431
        $region52: #{sparsemap_forward.1} parent=47 // pred_fallthru
          _
        // Predicated region
        $region53: #{sparsemap_forward.1} parent=47 // pred_check
          %p3433 = pneg %p138
        $region54: #{sparsemap_forward.1} parent=47 // pred_check_branch
          %3435 = sbr.rel (%p3433) target = $region56
        $region55: #{sparsemap_forward.1} parent=47 // pred_region
          %s3436 = sand.u32 %s123, 1
          %s3437 = scalar_lea.sflag [#allocation3], %s3436
          %s3438 = sand.u32 %s123, 1
          %s3439 = smul.addr %s3438, 8
          %s3440 = scalar_lea.vmem [#allocation2], %s3439
          %3442 = dma.done %s3437, 128
        $region56: #{sparsemap_forward.1} parent=47 // pred_fallthru
          _
        // Predicated region
        $region57: #{sparsemap_forward.1} parent=47 // pred_check
          %p3443 = pneg %p164
        $region58: #{sparsemap_forward.1} parent=47 // pred_check_branch
          %3445 = sbr.rel (%p3443) target = $region60
        $region59: #{sparsemap_forward.1} parent=47 // pred_region
          %p3446 = scmp.lt.s32.totalorder %s21, 1
          %s3447 = scalar_select %p3446, %s21, 1
          %s3448 = smul.addr %s3447, 8
          %s3449 = scalar_lea.vmem %s5, %s3448
        $region60: #{sparsemap_forward.1} parent=47 // pred_fallthru
          _
      $region48: #{sparsemap_forward.1} parent=5 // pred_fallthru
        _
    $region6: #{sparsemap_forward.1} parent=1 // loop_footer
      %s19 = sadd.s32 1, %s15
    $region7: #{sparsemap_forward.1} parent=1 // loop_footer_branch
      %14 = sbr.rel target = $region3
    $region8: #{sparsemap_forward.1} parent=1 // loop_exit
      _
    %3450 = vsyncpa [#allocation3], 1
    %s3451 = scalar_lea.sflag [#allocation3], 1
    %3452 = vsyncpa %s3451, 1

</llo_original>
